<compile_context>
chip_gen: v5e
topology: v5e:2x2
jax: 0.10.0
libtpu: 0.0.40
codegen_flags: <defaults>
</compile_context>

<pallas_src>
import functools

import jax
import jax.numpy as jnp
from jax import lax
from jax.experimental import pallas as pl
from jax.experimental.pallas import tpu as pltpu


def _round_up(x, m):
    return (x + m - 1) // m * m


def _make_kernel(T, BT, HP):
    """Build the fused forward kernel for static (T, batch tile, padded hidden)."""
    G = 4 * HP

    def kernel(
        x_ref,      # (T, BT, Din)    f32, time-major batch tile
        wih1_ref,   # (Din, 4*HP)     matmul dtype, gate-padded, pre-transposed
        whh1_ref,   # (HP,  4*HP)     matmul dtype
        b1_ref,     # (1,   4*HP)     f32  (bias_ih + bias_hh, gate-padded)
        w2_ref,     # (2*HP, 4*HP)    matmul dtype, fused [wih2 ; whh2]
        b2_ref,     # (1,   4*HP)     f32
        fc1w_ref,   # (HP, 32)        matmul dtype
        fc1b_ref,   # (1,  32)        f32
        ln_g_ref,   # (1,  32)        f32
        ln_b_ref,   # (1,  32)        f32
        fc2w_ref,   # (32, 16)        matmul dtype
        fc2b_ref,   # (1,  16)        f32
        fc3w_ref,   # (16, O)         matmul dtype
        fc3b_ref,   # (1,  O)         f32
        out_ref,    # (BT, O)         f32
    ):
        Din = x_ref.shape[-1]
        wdt = whh1_ref.dtype

        def mdot(a, w):
            # MXU matmul: operands in the weight dtype (bf16 or f32), f32 acc.
            return jnp.dot(a.astype(w.dtype), w, preferred_element_type=jnp.float32)

        # --- Hoisted layer-1 input projection: one matmul, off the serial path.
        # BT is a multiple of 8, so this reshape is a pure sublane-tile relabel.
        x2 = x_ref[...].reshape(T * BT, Din)
        gx1 = mdot(x2, wih1_ref[...]) + b1_ref[...]            # (T*BT, 4*HP) f32

        whh1 = whh1_ref[...]
        w2 = w2_ref[...]
        # Hoisted bias broadcast for layer 2 (JAX does not CSE broadcast_in_dim).
        b2b = jnp.broadcast_to(b2_ref[...], (BT, G))

        def gate_split(gates):
            # Each gate block is a full 128-lane-aligned slab (HP multiple of 128).
            i = jax.nn.sigmoid(gates[:, 0 * HP:1 * HP])
            f = jax.nn.sigmoid(gates[:, 1 * HP:2 * HP])
            g = jnp.tanh(gates[:, 2 * HP:3 * HP])
            o = jax.nn.sigmoid(gates[:, 3 * HP:4 * HP])
            return i, f, g, o

        zeros_f = jnp.zeros((BT, HP), jnp.float32)
        zeros_w = jnp.zeros((BT, HP), wdt)
        c1, c2 = zeros_f, zeros_f
        # MXU-operand copies of h, cast once per step and carried (no per-matmul cast).
        h1w, h2w = zeros_w, zeros_w
        h2 = zeros_f

        # --- Fully unrolled recurrence (T static & small): per step only the
        # h @ W_recurrent matmuls remain on the serial path; the LLO scheduler
        # overlaps layer-2 EUP work of step t with layer-1 MXU work of step t+1.
        for t in range(T):
            g1 = gx1[t * BT:(t + 1) * BT, :] + mdot(h1w, whh1)
            i1, f1, gg1, o1 = gate_split(g1)
            c1 = f1 * c1 + i1 * gg1
            h1 = o1 * jnp.tanh(c1)
            h1w = h1.astype(wdt)

            # Fused layer-2 recurrence: one (BT, 2*HP) @ (2*HP, 4*HP) matmul
            # (free lane concat of two 128-lane slabs; K=256 fills the MXU).
            hcat = jnp.concatenate([h1w, h2w], axis=-1)
            g2 = mdot(hcat, w2) + b2b
            i2, f2, gg2, o2 = gate_split(g2)
            c2 = f2 * c2 + i2 * gg2
            h2 = o2 * jnp.tanh(c2)
            h2w = h2.astype(wdt)

        # --- Tail MLP on the last timestep's hidden state (padded lanes are 0).
        y = mdot(h2, fc1w_ref[...]) + fc1b_ref[...]
        # LayerNorm(32), eps = 1e-5, biased variance (PyTorch default).
        mean = jnp.mean(y, axis=-1, keepdims=True)
        var = jnp.mean((y - mean) ** 2, axis=-1, keepdims=True)
        y = (y - mean) * lax.rsqrt(var + 1e-5)
        y = y * ln_g_ref[...] + ln_b_ref[...]
        y = jnp.where(y > 0, y, 0.01 * y)      # leaky_relu(0.01)
        # dropout(p=0.3): identity in eval / inference mode (no RNG needed)
        y = mdot(y, fc2w_ref[...]) + fc2b_ref[...]
        y = jnp.where(y > 0, y, 0.01 * y)
        y = mdot(y, fc3w_ref[...]) + fc3b_ref[...]
        out_ref[...] = y.astype(out_ref.dtype)

    return kernel


@functools.partial(jax.jit, static_argnames=("matmul_dtype",))
def weather_lstm_forward(x, params, matmul_dtype=jnp.bfloat16):
    """x: (B, T, D_in) float32, batch_first like the PyTorch module.

    matmul_dtype: jnp.bfloat16 (default; MXU-native on v5e/v6e/v7x, f32
    accumulation and f32 elementwise state) or jnp.float32 for exact parity.
    """
    B, T, Din = x.shape
    H = params["whh1"].shape[1]              # weight_hh_l0: (4H, H)
    O = params["fc3_w"].shape[0]
    HP = _round_up(H, 128)                   # lane-aligned per-gate slab
    wdt = matmul_dtype

    # Batch tile: sublane-aligned, capped at 64 (f32-state vreg-pressure sweet
    # spot); for B > 8, ensure >= 2 tiles so the "parallel" grid axis can be
    # sharded across v7x's two TensorCores (just a loop split on v5e/v6e).
    BT = min(64, _round_up(B, 8))
    if B > 8:
        BT = min(BT, _round_up(_round_up(B, 8) // 2, 8))
    B_pad = _round_up(B, BT)

    # Time-major, zero-padded batch.
    x_tm = jnp.transpose(x, (1, 0, 2)).astype(jnp.float32)
    x_tm = jnp.pad(x_tm, ((0, 0), (0, B_pad - B), (0, 0)))

    def gates_T(w, in_pad):
        # PyTorch gate-stacked (4H, K) weight -> (in_pad, 4*HP): transposed,
        # each gate block zero-padded H -> HP, input rows zero-padded K -> in_pad.
        K = w.shape[1]
        wg = w.reshape(4, H, K)
        wg = jnp.pad(wg, ((0, 0), (0, HP - H), (0, 0)))
        wt = jnp.transpose(wg, (2, 0, 1)).reshape(K, 4 * HP)
        wt = jnp.pad(wt, ((0, in_pad - K), (0, 0)))
        return wt.astype(wdt)

    def gates_bias(b):
        bg = b.reshape(4, H)
        bg = jnp.pad(bg, ((0, 0), (0, HP - H)))
        return bg.reshape(1, 4 * HP).astype(jnp.float32)

    def t2(w, in_pad=None):
        wt = jnp.transpose(w, (1, 0))
        if in_pad is not None:
            wt = jnp.pad(wt, ((0, in_pad - wt.shape[0]), (0, 0)))
        return wt.astype(wdt)

    def row(b):
        return b.reshape(1, -1).astype(jnp.float32)

    # Fused layer-2 recurrent weight: rows 0..HP act on h1, rows HP..2HP on h2.
    w2cat = jnp.concatenate(
        [gates_T(params["wih2"], HP), gates_T(params["whh2"], HP)], axis=0)

    args = (
        x_tm,
        gates_T(params["wih1"], Din),
        gates_T(params["whh1"], HP),
        gates_bias(params["bih1"] + params["bhh1"]),
        w2cat,
        gates_bias(params["bih2"] + params["bhh2"]),
        t2(params["fc1_w"], HP), row(params["fc1_b"]),
        row(params["ln_g"]), row(params["ln_b"]),
        t2(params["fc2_w"]), row(params["fc2_b"]),
        t2(params["fc3_w"]), row(params["fc3_b"]),
    )

    def whole(a):
        # Loop-invariant weight/bias: one full-array block at (0, ..., 0).
        # (At H=64 everything fits trivially; pl.Buffered(1) would halve their
        # double-buffered VMEM footprint on v7x if the model ever scales.)
        n = a.ndim
        return pl.BlockSpec(a.shape, lambda i, n=n: (0,) * n)

    in_specs = [pl.BlockSpec((T, BT, Din), lambda i: (0, i, 0))]
    in_specs += [whole(a) for a in args[1:]]
    out_spec = pl.BlockSpec((BT, O), lambda i: (i, 0))

    kernel = _make_kernel(T, BT, HP)
    out = pl.pallas_call(
        kernel,
        out_shape=jax.ShapeDtypeStruct((B_pad, O), jnp.float32),
        grid=(B_pad // BT,),
        in_specs=in_specs,
        out_specs=out_spec,
        compiler_params=pltpu.CompilerParams(
            dimension_semantics=("parallel",)),
    )(*args)
    return out[:B]


def init_params(key, input_size=5, hidden_size=64, output_size=1):
    """Deterministic synthetic parameters matching nn.Module shapes."""
    H, D = hidden_size, input_size
    keys = jax.random.split(key, 12)

    def u(k, shape, scale):
        return jax.random.uniform(k, shape, jnp.float32, -scale, scale)

    s_l1 = 1.0 / jnp.sqrt(H)
    params = {
        # lstm1
        "wih1": u(keys[0], (4 * H, D), s_l1),
        "whh1": u(keys[1], (4 * H, H), s_l1),
        "bih1": u(keys[2], (4 * H,), s_l1),
        "bhh1": u(keys[3], (4 * H,), s_l1),
        # lstm2
        "wih2": u(keys[4], (4 * H, H), s_l1),
        "whh2": u(keys[5], (4 * H, H), s_l1),
        "bih2": u(keys[6], (4 * H,), s_l1),
        "bhh2": u(keys[7], (4 * H,), s_l1),
        # fc layers
        "fc1_w": u(keys[8], (32, H), 1.0 / jnp.sqrt(H)),
        "fc1_b": jnp.zeros((32,), jnp.float32),
        "fc2_w": u(keys[9], (16, 32), 1.0 / jnp.sqrt(32.0)),
        "fc2_b": jnp.zeros((16,), jnp.float32),
        "fc3_w": u(keys[10], (output_size, 16), 1.0 / jnp.sqrt(16.0)),
        "fc3_b": jnp.zeros((output_size,), jnp.float32),
        # LayerNorm(32) default init
        "ln_g": jnp.ones((32,), jnp.float32),
        "ln_b": jnp.zeros((32,), jnp.float32),
    }
    return params


if __name__ == "__main__":
    key = jax.random.PRNGKey(0)
    k_x, k_p = jax.random.split(key)

    B, T, D_IN, H, O = 2, 8, 5, 64, 1
    x = jax.random.normal(k_x, (B, T, D_IN), dtype=jnp.float32)
    params = init_params(k_p, input_size=D_IN, hidden_size=H, output_size=O)

    # Default: bf16 MXU operands, f32 accumulation & f32 elementwise state.
    out = weather_lstm_forward(x, params)
    out = jax.block_until_ready(out)
    assert out.shape == (B, O), out.shape

    # Exact-parity path (f32 matmul operands) also exercised once.
    out_f32 = weather_lstm_forward(x, params, matmul_dtype=jnp.float32)
    out_f32 = jax.block_until_ready(out_f32)
    assert out_f32.shape == (B, O), out_f32.shape

    print("KERNEL_OK")
</pallas_src>

<mosaic_0001>
module attributes {stable_mosaic.version = 11 : i64} {
  func.func @kernel(%arg0: i32, %arg1: memref<8x8x5xf32, #tpu.memory_space<vmem>>, %arg2: memref<5x512xbf16, #tpu.memory_space<vmem>>, %arg3: memref<128x512xbf16, #tpu.memory_space<vmem>>, %arg4: memref<1x512xf32, #tpu.memory_space<vmem>>, %arg5: memref<256x512xbf16, #tpu.memory_space<vmem>>, %arg6: memref<1x512xf32, #tpu.memory_space<vmem>>, %arg7: memref<128x32xbf16, #tpu.memory_space<vmem>>, %arg8: memref<1x32xf32, #tpu.memory_space<vmem>>, %arg9: memref<1x32xf32, #tpu.memory_space<vmem>>, %arg10: memref<1x32xf32, #tpu.memory_space<vmem>>, %arg11: memref<32x16xbf16, #tpu.memory_space<vmem>>, %arg12: memref<1x16xf32, #tpu.memory_space<vmem>>, %arg13: memref<16x1xbf16, #tpu.memory_space<vmem>>, %arg14: memref<1x1xf32, #tpu.memory_space<vmem>>, %arg15: memref<8x1xf32, #tpu.memory_space<vmem>>) attributes {dimension_semantics = [#tpu.dimension_semantics<parallel>], iteration_bounds = array<i64: 1>, scalar_prefetch = 0 : i64, scratch_operands = 0 : i64, tpu.core_type = #tpu.core_type<tc>, window_params = [{transform_indices = @transform_0, window_bounds = array<i64: 8, 8, 5>}, {pipeline_mode = #tpu.pipeline_mode<synchronous>, transform_indices = @transform_1, window_bounds = array<i64: 5, 512>}, {pipeline_mode = #tpu.pipeline_mode<synchronous>, transform_indices = @transform_2, window_bounds = array<i64: 128, 512>}, {pipeline_mode = #tpu.pipeline_mode<synchronous>, transform_indices = @transform_3, window_bounds = array<i64: 1, 512>}, {pipeline_mode = #tpu.pipeline_mode<synchronous>, transform_indices = @transform_4, window_bounds = array<i64: 256, 512>}, {pipeline_mode = #tpu.pipeline_mode<synchronous>, transform_indices = @transform_5, window_bounds = array<i64: 1, 512>}, {pipeline_mode = #tpu.pipeline_mode<synchronous>, transform_indices = @transform_6, window_bounds = array<i64: 128, 32>}, {pipeline_mode = #tpu.pipeline_mode<synchronous>, transform_indices = @transform_7, window_bounds = array<i64: 1, 32>}, {pipeline_mode = #tpu.pipeline_mode<synchronous>, transform_indices = @transform_8, window_bounds = array<i64: 1, 32>}, {pipeline_mode = #tpu.pipeline_mode<synchronous>, transform_indices = @transform_9, window_bounds = array<i64: 1, 32>}, {pipeline_mode = #tpu.pipeline_mode<synchronous>, transform_indices = @transform_10, window_bounds = array<i64: 32, 16>}, {pipeline_mode = #tpu.pipeline_mode<synchronous>, transform_indices = @transform_11, window_bounds = array<i64: 1, 16>}, {pipeline_mode = #tpu.pipeline_mode<synchronous>, transform_indices = @transform_12, window_bounds = array<i64: 16, 1>}, {pipeline_mode = #tpu.pipeline_mode<synchronous>, transform_indices = @transform_13, window_bounds = array<i64: 1, 1>}, {transform_indices = @transform_14, window_bounds = array<i64: 8, 1>}]} {
    %c0 = arith.constant 0 : index
    %c0_0 = arith.constant 0 : index
    %c0_1 = arith.constant 0 : index
    %0 = vector.load %arg1[%c0, %c0_0, %c0_1] : memref<8x8x5xf32, #tpu.memory_space<vmem>>, vector<8x8x5xf32>
    %1 = vector.shape_cast %0 : vector<8x8x5xf32> to vector<64x5xf32>
    %c0_2 = arith.constant 0 : index
    %c0_3 = arith.constant 0 : index
    %2 = vector.load %arg2[%c0_2, %c0_3] : memref<5x512xbf16, #tpu.memory_space<vmem>>, vector<5x512xbf16>
    %3 = arith.truncf %1 : vector<64x5xf32> to vector<64x5xbf16>
    %cst = arith.constant dense<0.000000e+00> : vector<64x512xf32>
    %4 = tpu.matmul %3, %2, %cst {dimension_numbers = #tpu.dot_dimension_numbers<[1], [0], [0], [1], [0, 0, 1, 1], [], []>} : vector<64x5xbf16>, vector<5x512xbf16>, vector<64x512xf32> -> vector<64x512xf32>
    %c0_4 = arith.constant 0 : index
    %c0_5 = arith.constant 0 : index
    %5 = vector.load %arg4[%c0_4, %c0_5] : memref<1x512xf32, #tpu.memory_space<vmem>>, vector<1x512xf32>
    %6 = vector.broadcast %5 : vector<1x512xf32> to vector<64x512xf32>
    %7 = arith.addf %4, %6 : vector<64x512xf32>
    %c0_6 = arith.constant 0 : index
    %c0_7 = arith.constant 0 : index
    %8 = vector.load %arg3[%c0_6, %c0_7] : memref<128x512xbf16, #tpu.memory_space<vmem>>, vector<128x512xbf16>
    %c0_8 = arith.constant 0 : index
    %c0_9 = arith.constant 0 : index
    %9 = vector.load %arg5[%c0_8, %c0_9] : memref<256x512xbf16, #tpu.memory_space<vmem>>, vector<256x512xbf16>
    %c0_10 = arith.constant 0 : index
    %c0_11 = arith.constant 0 : index
    %10 = vector.load %arg6[%c0_10, %c0_11] : memref<1x512xf32, #tpu.memory_space<vmem>>, vector<1x512xf32>
    %11 = vector.shape_cast %10 : vector<1x512xf32> to vector<1x512xf32>
    %12 = vector.broadcast %11 : vector<1x512xf32> to vector<8x512xf32>
    %cst_12 = arith.constant 0.000000e+00 : f32
    %13 = vector.broadcast %cst_12 : f32 to vector<8x128xf32>
    %cst_13 = arith.constant 0.000000e+00 : bf16
    %14 = vector.broadcast %cst_13 : bf16 to vector<8x128xbf16>
    %15 = vector.extract_strided_slice %7 {offsets = [0, 0], sizes = [8, 512], strides = [1, 1]} : vector<64x512xf32> to vector<8x512xf32>
    %cst_14 = arith.constant dense<0.000000e+00> : vector<8x512xf32>
    %16 = tpu.matmul %14, %8, %cst_14 {dimension_numbers = #tpu.dot_dimension_numbers<[1], [0], [0], [1], [0, 0, 1, 1], [], []>} : vector<8x128xbf16>, vector<128x512xbf16>, vector<8x512xf32> -> vector<8x512xf32>
    %17 = arith.addf %15, %16 : vector<8x512xf32>
    %18 = vector.extract_strided_slice %17 {offsets = [0, 0], sizes = [8, 128], strides = [1, 1]} : vector<8x512xf32> to vector<8x128xf32>
    %19 = arith.negf %18 : vector<8x128xf32>
    %20 = math.exp %19 : vector<8x128xf32>
    %cst_15 = arith.constant 1.000000e+00 : f32
    %21 = vector.broadcast %cst_15 : f32 to vector<8x128xf32>
    %22 = arith.addf %21, %20 : vector<8x128xf32>
    %23 = arith.divf %21, %22 : vector<8x128xf32>
    %24 = vector.extract_strided_slice %17 {offsets = [0, 128], sizes = [8, 128], strides = [1, 1]} : vector<8x512xf32> to vector<8x128xf32>
    %25 = arith.negf %24 : vector<8x128xf32>
    %26 = math.exp %25 : vector<8x128xf32>
    %cst_16 = arith.constant 1.000000e+00 : f32
    %27 = vector.broadcast %cst_16 : f32 to vector<8x128xf32>
    %28 = arith.addf %27, %26 : vector<8x128xf32>
    %29 = arith.divf %27, %28 : vector<8x128xf32>
    %30 = vector.extract_strided_slice %17 {offsets = [0, 256], sizes = [8, 128], strides = [1, 1]} : vector<8x512xf32> to vector<8x128xf32>
    %31 = math.tanh %30 : vector<8x128xf32>
    %32 = vector.extract_strided_slice %17 {offsets = [0, 384], sizes = [8, 128], strides = [1, 1]} : vector<8x512xf32> to vector<8x128xf32>
    %33 = arith.negf %32 : vector<8x128xf32>
    %34 = math.exp %33 : vector<8x128xf32>
    %cst_17 = arith.constant 1.000000e+00 : f32
    %35 = vector.broadcast %cst_17 : f32 to vector<8x128xf32>
    %36 = arith.addf %35, %34 : vector<8x128xf32>
    %37 = arith.divf %35, %36 : vector<8x128xf32>
    %38 = arith.mulf %29, %13 : vector<8x128xf32>
    %39 = arith.mulf %23, %31 : vector<8x128xf32>
    %40 = arith.addf %38, %39 : vector<8x128xf32>
    %41 = math.tanh %40 : vector<8x128xf32>
    %42 = arith.mulf %37, %41 : vector<8x128xf32>
    %43 = arith.truncf %42 : vector<8x128xf32> to vector<8x128xbf16>
    %44 = tpu.concatenate %43, %14 in 1 : vector<8x128xbf16>, vector<8x128xbf16> -> vector<8x256xbf16>
    %cst_18 = arith.constant dense<0.000000e+00> : vector<8x512xf32>
    %45 = tpu.matmul %44, %9, %cst_18 {dimension_numbers = #tpu.dot_dimension_numbers<[1], [0], [0], [1], [0, 0, 1, 1], [], []>} : vector<8x256xbf16>, vector<256x512xbf16>, vector<8x512xf32> -> vector<8x512xf32>
    %46 = arith.addf %45, %12 : vector<8x512xf32>
    %47 = vector.extract_strided_slice %46 {offsets = [0, 0], sizes = [8, 128], strides = [1, 1]} : vector<8x512xf32> to vector<8x128xf32>
    %48 = arith.negf %47 : vector<8x128xf32>
    %49 = math.exp %48 : vector<8x128xf32>
    %cst_19 = arith.constant 1.000000e+00 : f32
    %50 = vector.broadcast %cst_19 : f32 to vector<8x128xf32>
    %51 = arith.addf %50, %49 : vector<8x128xf32>
    %52 = arith.divf %50, %51 : vector<8x128xf32>
    %53 = vector.extract_strided_slice %46 {offsets = [0, 128], sizes = [8, 128], strides = [1, 1]} : vector<8x512xf32> to vector<8x128xf32>
    %54 = arith.negf %53 : vector<8x128xf32>
    %55 = math.exp %54 : vector<8x128xf32>
    %cst_20 = arith.constant 1.000000e+00 : f32
    %56 = vector.broadcast %cst_20 : f32 to vector<8x128xf32>
    %57 = arith.addf %56, %55 : vector<8x128xf32>
    %58 = arith.divf %56, %57 : vector<8x128xf32>
    %59 = vector.extract_strided_slice %46 {offsets = [0, 256], sizes = [8, 128], strides = [1, 1]} : vector<8x512xf32> to vector<8x128xf32>
    %60 = math.tanh %59 : vector<8x128xf32>
    %61 = vector.extract_strided_slice %46 {offsets = [0, 384], sizes = [8, 128], strides = [1, 1]} : vector<8x512xf32> to vector<8x128xf32>
    %62 = arith.negf %61 : vector<8x128xf32>
    %63 = math.exp %62 : vector<8x128xf32>
    %cst_21 = arith.constant 1.000000e+00 : f32
    %64 = vector.broadcast %cst_21 : f32 to vector<8x128xf32>
    %65 = arith.addf %64, %63 : vector<8x128xf32>
    %66 = arith.divf %64, %65 : vector<8x128xf32>
    %67 = arith.mulf %58, %13 : vector<8x128xf32>
    %68 = arith.mulf %52, %60 : vector<8x128xf32>
    %69 = arith.addf %67, %68 : vector<8x128xf32>
    %70 = math.tanh %69 : vector<8x128xf32>
    %71 = arith.mulf %66, %70 : vector<8x128xf32>
    %72 = arith.truncf %71 : vector<8x128xf32> to vector<8x128xbf16>
    %73 = vector.extract_strided_slice %7 {offsets = [8, 0], sizes = [8, 512], strides = [1, 1]} : vector<64x512xf32> to vector<8x512xf32>
    %cst_22 = arith.constant dense<0.000000e+00> : vector<8x512xf32>
    %74 = tpu.matmul %43, %8, %cst_22 {dimension_numbers = #tpu.dot_dimension_numbers<[1], [0], [0], [1], [0, 0, 1, 1], [], []>} : vector<8x128xbf16>, vector<128x512xbf16>, vector<8x512xf32> -> vector<8x512xf32>
    %75 = arith.addf %73, %74 : vector<8x512xf32>
    %76 = vector.extract_strided_slice %75 {offsets = [0, 0], sizes = [8, 128], strides = [1, 1]} : vector<8x512xf32> to vector<8x128xf32>
    %77 = arith.negf %76 : vector<8x128xf32>
    %78 = math.exp %77 : vector<8x128xf32>
    %cst_23 = arith.constant 1.000000e+00 : f32
    %79 = vector.broadcast %cst_23 : f32 to vector<8x128xf32>
    %80 = arith.addf %79, %78 : vector<8x128xf32>
    %81 = arith.divf %79, %80 : vector<8x128xf32>
    %82 = vector.extract_strided_slice %75 {offsets = [0, 128], sizes = [8, 128], strides = [1, 1]} : vector<8x512xf32> to vector<8x128xf32>
    %83 = arith.negf %82 : vector<8x128xf32>
    %84 = math.exp %83 : vector<8x128xf32>
    %cst_24 = arith.constant 1.000000e+00 : f32
    %85 = vector.broadcast %cst_24 : f32 to vector<8x128xf32>
    %86 = arith.addf %85, %84 : vector<8x128xf32>
    %87 = arith.divf %85, %86 : vector<8x128xf32>
    %88 = vector.extract_strided_slice %75 {offsets = [0, 256], sizes = [8, 128], strides = [1, 1]} : vector<8x512xf32> to vector<8x128xf32>
    %89 = math.tanh %88 : vector<8x128xf32>
    %90 = vector.extract_strided_slice %75 {offsets = [0, 384], sizes = [8, 128], strides = [1, 1]} : vector<8x512xf32> to vector<8x128xf32>
    %91 = arith.negf %90 : vector<8x128xf32>
    %92 = math.exp %91 : vector<8x128xf32>
    %cst_25 = arith.constant 1.000000e+00 : f32
    %93 = vector.broadcast %cst_25 : f32 to vector<8x128xf32>
    %94 = arith.addf %93, %92 : vector<8x128xf32>
    %95 = arith.divf %93, %94 : vector<8x128xf32>
    %96 = arith.mulf %87, %40 : vector<8x128xf32>
    %97 = arith.mulf %81, %89 : vector<8x128xf32>
    %98 = arith.addf %96, %97 : vector<8x128xf32>
    %99 = math.tanh %98 : vector<8x128xf32>
    %100 = arith.mulf %95, %99 : vector<8x128xf32>
    %101 = arith.truncf %100 : vector<8x128xf32> to vector<8x128xbf16>
    %102 = tpu.concatenate %101, %72 in 1 : vector<8x128xbf16>, vector<8x128xbf16> -> vector<8x256xbf16>
    %cst_26 = arith.constant dense<0.000000e+00> : vector<8x512xf32>
    %103 = tpu.matmul %102, %9, %cst_26 {dimension_numbers = #tpu.dot_dimension_numbers<[1], [0], [0], [1], [0, 0, 1, 1], [], []>} : vector<8x256xbf16>, vector<256x512xbf16>, vector<8x512xf32> -> vector<8x512xf32>
    %104 = arith.addf %103, %12 : vector<8x512xf32>
    %105 = vector.extract_strided_slice %104 {offsets = [0, 0], sizes = [8, 128], strides = [1, 1]} : vector<8x512xf32> to vector<8x128xf32>
    %106 = arith.negf %105 : vector<8x128xf32>
    %107 = math.exp %106 : vector<8x128xf32>
    %cst_27 = arith.constant 1.000000e+00 : f32
    %108 = vector.broadcast %cst_27 : f32 to vector<8x128xf32>
    %109 = arith.addf %108, %107 : vector<8x128xf32>
    %110 = arith.divf %108, %109 : vector<8x128xf32>
    %111 = vector.extract_strided_slice %104 {offsets = [0, 128], sizes = [8, 128], strides = [1, 1]} : vector<8x512xf32> to vector<8x128xf32>
    %112 = arith.negf %111 : vector<8x128xf32>
    %113 = math.exp %112 : vector<8x128xf32>
    %cst_28 = arith.constant 1.000000e+00 : f32
    %114 = vector.broadcast %cst_28 : f32 to vector<8x128xf32>
    %115 = arith.addf %114, %113 : vector<8x128xf32>
    %116 = arith.divf %114, %115 : vector<8x128xf32>
    %117 = vector.extract_strided_slice %104 {offsets = [0, 256], sizes = [8, 128], strides = [1, 1]} : vector<8x512xf32> to vector<8x128xf32>
    %118 = math.tanh %117 : vector<8x128xf32>
    %119 = vector.extract_strided_slice %104 {offsets = [0, 384], sizes = [8, 128], strides = [1, 1]} : vector<8x512xf32> to vector<8x128xf32>
    %120 = arith.negf %119 : vector<8x128xf32>
    %121 = math.exp %120 : vector<8x128xf32>
    %cst_29 = arith.constant 1.000000e+00 : f32
    %122 = vector.broadcast %cst_29 : f32 to vector<8x128xf32>
    %123 = arith.addf %122, %121 : vector<8x128xf32>
    %124 = arith.divf %122, %123 : vector<8x128xf32>
    %125 = arith.mulf %116, %69 : vector<8x128xf32>
    %126 = arith.mulf %110, %118 : vector<8x128xf32>
    %127 = arith.addf %125, %126 : vector<8x128xf32>
    %128 = math.tanh %127 : vector<8x128xf32>
    %129 = arith.mulf %124, %128 : vector<8x128xf32>
    %130 = arith.truncf %129 : vector<8x128xf32> to vector<8x128xbf16>
    %131 = vector.extract_strided_slice %7 {offsets = [16, 0], sizes = [8, 512], strides = [1, 1]} : vector<64x512xf32> to vector<8x512xf32>
    %cst_30 = arith.constant dense<0.000000e+00> : vector<8x512xf32>
    %132 = tpu.matmul %101, %8, %cst_30 {dimension_numbers = #tpu.dot_dimension_numbers<[1], [0], [0], [1], [0, 0, 1, 1], [], []>} : vector<8x128xbf16>, vector<128x512xbf16>, vector<8x512xf32> -> vector<8x512xf32>
    %133 = arith.addf %131, %132 : vector<8x512xf32>
    %134 = vector.extract_strided_slice %133 {offsets = [0, 0], sizes = [8, 128], strides = [1, 1]} : vector<8x512xf32> to vector<8x128xf32>
    %135 = arith.negf %134 : vector<8x128xf32>
    %136 = math.exp %135 : vector<8x128xf32>
    %cst_31 = arith.constant 1.000000e+00 : f32
    %137 = vector.broadcast %cst_31 : f32 to vector<8x128xf32>
    %138 = arith.addf %137, %136 : vector<8x128xf32>
    %139 = arith.divf %137, %138 : vector<8x128xf32>
    %140 = vector.extract_strided_slice %133 {offsets = [0, 128], sizes = [8, 128], strides = [1, 1]} : vector<8x512xf32> to vector<8x128xf32>
    %141 = arith.negf %140 : vector<8x128xf32>
    %142 = math.exp %141 : vector<8x128xf32>
    %cst_32 = arith.constant 1.000000e+00 : f32
    %143 = vector.broadcast %cst_32 : f32 to vector<8x128xf32>
    %144 = arith.addf %143, %142 : vector<8x128xf32>
    %145 = arith.divf %143, %144 : vector<8x128xf32>
    %146 = vector.extract_strided_slice %133 {offsets = [0, 256], sizes = [8, 128], strides = [1, 1]} : vector<8x512xf32> to vector<8x128xf32>
    %147 = math.tanh %146 : vector<8x128xf32>
    %148 = vector.extract_strided_slice %133 {offsets = [0, 384], sizes = [8, 128], strides = [1, 1]} : vector<8x512xf32> to vector<8x128xf32>
    %149 = arith.negf %148 : vector<8x128xf32>
    %150 = math.exp %149 : vector<8x128xf32>
    %cst_33 = arith.constant 1.000000e+00 : f32
    %151 = vector.broadcast %cst_33 : f32 to vector<8x128xf32>
    %152 = arith.addf %151, %150 : vector<8x128xf32>
    %153 = arith.divf %151, %152 : vector<8x128xf32>
    %154 = arith.mulf %145, %98 : vector<8x128xf32>
    %155 = arith.mulf %139, %147 : vector<8x128xf32>
    %156 = arith.addf %154, %155 : vector<8x128xf32>
    %157 = math.tanh %156 : vector<8x128xf32>
    %158 = arith.mulf %153, %157 : vector<8x128xf32>
    %159 = arith.truncf %158 : vector<8x128xf32> to vector<8x128xbf16>
    %160 = tpu.concatenate %159, %130 in 1 : vector<8x128xbf16>, vector<8x128xbf16> -> vector<8x256xbf16>
    %cst_34 = arith.constant dense<0.000000e+00> : vector<8x512xf32>
    %161 = tpu.matmul %160, %9, %cst_34 {dimension_numbers = #tpu.dot_dimension_numbers<[1], [0], [0], [1], [0, 0, 1, 1], [], []>} : vector<8x256xbf16>, vector<256x512xbf16>, vector<8x512xf32> -> vector<8x512xf32>
    %162 = arith.addf %161, %12 : vector<8x512xf32>
    %163 = vector.extract_strided_slice %162 {offsets = [0, 0], sizes = [8, 128], strides = [1, 1]} : vector<8x512xf32> to vector<8x128xf32>
    %164 = arith.negf %163 : vector<8x128xf32>
    %165 = math.exp %164 : vector<8x128xf32>
    %cst_35 = arith.constant 1.000000e+00 : f32
    %166 = vector.broadcast %cst_35 : f32 to vector<8x128xf32>
    %167 = arith.addf %166, %165 : vector<8x128xf32>
    %168 = arith.divf %166, %167 : vector<8x128xf32>
    %169 = vector.extract_strided_slice %162 {offsets = [0, 128], sizes = [8, 128], strides = [1, 1]} : vector<8x512xf32> to vector<8x128xf32>
    %170 = arith.negf %169 : vector<8x128xf32>
    %171 = math.exp %170 : vector<8x128xf32>
    %cst_36 = arith.constant 1.000000e+00 : f32
    %172 = vector.broadcast %cst_36 : f32 to vector<8x128xf32>
    %173 = arith.addf %172, %171 : vector<8x128xf32>
    %174 = arith.divf %172, %173 : vector<8x128xf32>
    %175 = vector.extract_strided_slice %162 {offsets = [0, 256], sizes = [8, 128], strides = [1, 1]} : vector<8x512xf32> to vector<8x128xf32>
    %176 = math.tanh %175 : vector<8x128xf32>
    %177 = vector.extract_strided_slice %162 {offsets = [0, 384], sizes = [8, 128], strides = [1, 1]} : vector<8x512xf32> to vector<8x128xf32>
    %178 = arith.negf %177 : vector<8x128xf32>
    %179 = math.exp %178 : vector<8x128xf32>
    %cst_37 = arith.constant 1.000000e+00 : f32
    %180 = vector.broadcast %cst_37 : f32 to vector<8x128xf32>
    %181 = arith.addf %180, %179 : vector<8x128xf32>
    %182 = arith.divf %180, %181 : vector<8x128xf32>
    %183 = arith.mulf %174, %127 : vector<8x128xf32>
    %184 = arith.mulf %168, %176 : vector<8x128xf32>
    %185 = arith.addf %183, %184 : vector<8x128xf32>
    %186 = math.tanh %185 : vector<8x128xf32>
    %187 = arith.mulf %182, %186 : vector<8x128xf32>
    %188 = arith.truncf %187 : vector<8x128xf32> to vector<8x128xbf16>
    %189 = vector.extract_strided_slice %7 {offsets = [24, 0], sizes = [8, 512], strides = [1, 1]} : vector<64x512xf32> to vector<8x512xf32>
    %cst_38 = arith.constant dense<0.000000e+00> : vector<8x512xf32>
    %190 = tpu.matmul %159, %8, %cst_38 {dimension_numbers = #tpu.dot_dimension_numbers<[1], [0], [0], [1], [0, 0, 1, 1], [], []>} : vector<8x128xbf16>, vector<128x512xbf16>, vector<8x512xf32> -> vector<8x512xf32>
    %191 = arith.addf %189, %190 : vector<8x512xf32>
    %192 = vector.extract_strided_slice %191 {offsets = [0, 0], sizes = [8, 128], strides = [1, 1]} : vector<8x512xf32> to vector<8x128xf32>
    %193 = arith.negf %192 : vector<8x128xf32>
    %194 = math.exp %193 : vector<8x128xf32>
    %cst_39 = arith.constant 1.000000e+00 : f32
    %195 = vector.broadcast %cst_39 : f32 to vector<8x128xf32>
    %196 = arith.addf %195, %194 : vector<8x128xf32>
    %197 = arith.divf %195, %196 : vector<8x128xf32>
    %198 = vector.extract_strided_slice %191 {offsets = [0, 128], sizes = [8, 128], strides = [1, 1]} : vector<8x512xf32> to vector<8x128xf32>
    %199 = arith.negf %198 : vector<8x128xf32>
    %200 = math.exp %199 : vector<8x128xf32>
    %cst_40 = arith.constant 1.000000e+00 : f32
    %201 = vector.broadcast %cst_40 : f32 to vector<8x128xf32>
    %202 = arith.addf %201, %200 : vector<8x128xf32>
    %203 = arith.divf %201, %202 : vector<8x128xf32>
    %204 = vector.extract_strided_slice %191 {offsets = [0, 256], sizes = [8, 128], strides = [1, 1]} : vector<8x512xf32> to vector<8x128xf32>
    %205 = math.tanh %204 : vector<8x128xf32>
    %206 = vector.extract_strided_slice %191 {offsets = [0, 384], sizes = [8, 128], strides = [1, 1]} : vector<8x512xf32> to vector<8x128xf32>
    %207 = arith.negf %206 : vector<8x128xf32>
    %208 = math.exp %207 : vector<8x128xf32>
    %cst_41 = arith.constant 1.000000e+00 : f32
    %209 = vector.broadcast %cst_41 : f32 to vector<8x128xf32>
    %210 = arith.addf %209, %208 : vector<8x128xf32>
    %211 = arith.divf %209, %210 : vector<8x128xf32>
    %212 = arith.mulf %203, %156 : vector<8x128xf32>
    %213 = arith.mulf %197, %205 : vector<8x128xf32>
    %214 = arith.addf %212, %213 : vector<8x128xf32>
    %215 = math.tanh %214 : vector<8x128xf32>
    %216 = arith.mulf %211, %215 : vector<8x128xf32>
    %217 = arith.truncf %216 : vector<8x128xf32> to vector<8x128xbf16>
    %218 = tpu.concatenate %217, %188 in 1 : vector<8x128xbf16>, vector<8x128xbf16> -> vector<8x256xbf16>
    %cst_42 = arith.constant dense<0.000000e+00> : vector<8x512xf32>
    %219 = tpu.matmul %218, %9, %cst_42 {dimension_numbers = #tpu.dot_dimension_numbers<[1], [0], [0], [1], [0, 0, 1, 1], [], []>} : vector<8x256xbf16>, vector<256x512xbf16>, vector<8x512xf32> -> vector<8x512xf32>
    %220 = arith.addf %219, %12 : vector<8x512xf32>
    %221 = vector.extract_strided_slice %220 {offsets = [0, 0], sizes = [8, 128], strides = [1, 1]} : vector<8x512xf32> to vector<8x128xf32>
    %222 = arith.negf %221 : vector<8x128xf32>
    %223 = math.exp %222 : vector<8x128xf32>
    %cst_43 = arith.constant 1.000000e+00 : f32
    %224 = vector.broadcast %cst_43 : f32 to vector<8x128xf32>
    %225 = arith.addf %224, %223 : vector<8x128xf32>
    %226 = arith.divf %224, %225 : vector<8x128xf32>
    %227 = vector.extract_strided_slice %220 {offsets = [0, 128], sizes = [8, 128], strides = [1, 1]} : vector<8x512xf32> to vector<8x128xf32>
    %228 = arith.negf %227 : vector<8x128xf32>
    %229 = math.exp %228 : vector<8x128xf32>
    %cst_44 = arith.constant 1.000000e+00 : f32
    %230 = vector.broadcast %cst_44 : f32 to vector<8x128xf32>
    %231 = arith.addf %230, %229 : vector<8x128xf32>
    %232 = arith.divf %230, %231 : vector<8x128xf32>
    %233 = vector.extract_strided_slice %220 {offsets = [0, 256], sizes = [8, 128], strides = [1, 1]} : vector<8x512xf32> to vector<8x128xf32>
    %234 = math.tanh %233 : vector<8x128xf32>
    %235 = vector.extract_strided_slice %220 {offsets = [0, 384], sizes = [8, 128], strides = [1, 1]} : vector<8x512xf32> to vector<8x128xf32>
    %236 = arith.negf %235 : vector<8x128xf32>
    %237 = math.exp %236 : vector<8x128xf32>
    %cst_45 = arith.constant 1.000000e+00 : f32
    %238 = vector.broadcast %cst_45 : f32 to vector<8x128xf32>
    %239 = arith.addf %238, %237 : vector<8x128xf32>
    %240 = arith.divf %238, %239 : vector<8x128xf32>
    %241 = arith.mulf %232, %185 : vector<8x128xf32>
    %242 = arith.mulf %226, %234 : vector<8x128xf32>
    %243 = arith.addf %241, %242 : vector<8x128xf32>
    %244 = math.tanh %243 : vector<8x128xf32>
    %245 = arith.mulf %240, %244 : vector<8x128xf32>
    %246 = arith.truncf %245 : vector<8x128xf32> to vector<8x128xbf16>
    %247 = vector.extract_strided_slice %7 {offsets = [32, 0], sizes = [8, 512], strides = [1, 1]} : vector<64x512xf32> to vector<8x512xf32>
    %cst_46 = arith.constant dense<0.000000e+00> : vector<8x512xf32>
    %248 = tpu.matmul %217, %8, %cst_46 {dimension_numbers = #tpu.dot_dimension_numbers<[1], [0], [0], [1], [0, 0, 1, 1], [], []>} : vector<8x128xbf16>, vector<128x512xbf16>, vector<8x512xf32> -> vector<8x512xf32>
    %249 = arith.addf %247, %248 : vector<8x512xf32>
    %250 = vector.extract_strided_slice %249 {offsets = [0, 0], sizes = [8, 128], strides = [1, 1]} : vector<8x512xf32> to vector<8x128xf32>
    %251 = arith.negf %250 : vector<8x128xf32>
    %252 = math.exp %251 : vector<8x128xf32>
    %cst_47 = arith.constant 1.000000e+00 : f32
    %253 = vector.broadcast %cst_47 : f32 to vector<8x128xf32>
    %254 = arith.addf %253, %252 : vector<8x128xf32>
    %255 = arith.divf %253, %254 : vector<8x128xf32>
    %256 = vector.extract_strided_slice %249 {offsets = [0, 128], sizes = [8, 128], strides = [1, 1]} : vector<8x512xf32> to vector<8x128xf32>
    %257 = arith.negf %256 : vector<8x128xf32>
    %258 = math.exp %257 : vector<8x128xf32>
    %cst_48 = arith.constant 1.000000e+00 : f32
    %259 = vector.broadcast %cst_48 : f32 to vector<8x128xf32>
    %260 = arith.addf %259, %258 : vector<8x128xf32>
    %261 = arith.divf %259, %260 : vector<8x128xf32>
    %262 = vector.extract_strided_slice %249 {offsets = [0, 256], sizes = [8, 128], strides = [1, 1]} : vector<8x512xf32> to vector<8x128xf32>
    %263 = math.tanh %262 : vector<8x128xf32>
    %264 = vector.extract_strided_slice %249 {offsets = [0, 384], sizes = [8, 128], strides = [1, 1]} : vector<8x512xf32> to vector<8x128xf32>
    %265 = arith.negf %264 : vector<8x128xf32>
    %266 = math.exp %265 : vector<8x128xf32>
    %cst_49 = arith.constant 1.000000e+00 : f32
    %267 = vector.broadcast %cst_49 : f32 to vector<8x128xf32>
    %268 = arith.addf %267, %266 : vector<8x128xf32>
    %269 = arith.divf %267, %268 : vector<8x128xf32>
    %270 = arith.mulf %261, %214 : vector<8x128xf32>
    %271 = arith.mulf %255, %263 : vector<8x128xf32>
    %272 = arith.addf %270, %271 : vector<8x128xf32>
    %273 = math.tanh %272 : vector<8x128xf32>
    %274 = arith.mulf %269, %273 : vector<8x128xf32>
    %275 = arith.truncf %274 : vector<8x128xf32> to vector<8x128xbf16>
    %276 = tpu.concatenate %275, %246 in 1 : vector<8x128xbf16>, vector<8x128xbf16> -> vector<8x256xbf16>
    %cst_50 = arith.constant dense<0.000000e+00> : vector<8x512xf32>
    %277 = tpu.matmul %276, %9, %cst_50 {dimension_numbers = #tpu.dot_dimension_numbers<[1], [0], [0], [1], [0, 0, 1, 1], [], []>} : vector<8x256xbf16>, vector<256x512xbf16>, vector<8x512xf32> -> vector<8x512xf32>
    %278 = arith.addf %277, %12 : vector<8x512xf32>
    %279 = vector.extract_strided_slice %278 {offsets = [0, 0], sizes = [8, 128], strides = [1, 1]} : vector<8x512xf32> to vector<8x128xf32>
    %280 = arith.negf %279 : vector<8x128xf32>
    %281 = math.exp %280 : vector<8x128xf32>
    %cst_51 = arith.constant 1.000000e+00 : f32
    %282 = vector.broadcast %cst_51 : f32 to vector<8x128xf32>
    %283 = arith.addf %282, %281 : vector<8x128xf32>
    %284 = arith.divf %282, %283 : vector<8x128xf32>
    %285 = vector.extract_strided_slice %278 {offsets = [0, 128], sizes = [8, 128], strides = [1, 1]} : vector<8x512xf32> to vector<8x128xf32>
    %286 = arith.negf %285 : vector<8x128xf32>
    %287 = math.exp %286 : vector<8x128xf32>
    %cst_52 = arith.constant 1.000000e+00 : f32
    %288 = vector.broadcast %cst_52 : f32 to vector<8x128xf32>
    %289 = arith.addf %288, %287 : vector<8x128xf32>
    %290 = arith.divf %288, %289 : vector<8x128xf32>
    %291 = vector.extract_strided_slice %278 {offsets = [0, 256], sizes = [8, 128], strides = [1, 1]} : vector<8x512xf32> to vector<8x128xf32>
    %292 = math.tanh %291 : vector<8x128xf32>
    %293 = vector.extract_strided_slice %278 {offsets = [0, 384], sizes = [8, 128], strides = [1, 1]} : vector<8x512xf32> to vector<8x128xf32>
    %294 = arith.negf %293 : vector<8x128xf32>
    %295 = math.exp %294 : vector<8x128xf32>
    %cst_53 = arith.constant 1.000000e+00 : f32
    %296 = vector.broadcast %cst_53 : f32 to vector<8x128xf32>
    %297 = arith.addf %296, %295 : vector<8x128xf32>
    %298 = arith.divf %296, %297 : vector<8x128xf32>
    %299 = arith.mulf %290, %243 : vector<8x128xf32>
    %300 = arith.mulf %284, %292 : vector<8x128xf32>
    %301 = arith.addf %299, %300 : vector<8x128xf32>
    %302 = math.tanh %301 : vector<8x128xf32>
    %303 = arith.mulf %298, %302 : vector<8x128xf32>
    %304 = arith.truncf %303 : vector<8x128xf32> to vector<8x128xbf16>
    %305 = vector.extract_strided_slice %7 {offsets = [40, 0], sizes = [8, 512], strides = [1, 1]} : vector<64x512xf32> to vector<8x512xf32>
    %cst_54 = arith.constant dense<0.000000e+00> : vector<8x512xf32>
    %306 = tpu.matmul %275, %8, %cst_54 {dimension_numbers = #tpu.dot_dimension_numbers<[1], [0], [0], [1], [0, 0, 1, 1], [], []>} : vector<8x128xbf16>, vector<128x512xbf16>, vector<8x512xf32> -> vector<8x512xf32>
    %307 = arith.addf %305, %306 : vector<8x512xf32>
    %308 = vector.extract_strided_slice %307 {offsets = [0, 0], sizes = [8, 128], strides = [1, 1]} : vector<8x512xf32> to vector<8x128xf32>
    %309 = arith.negf %308 : vector<8x128xf32>
    %310 = math.exp %309 : vector<8x128xf32>
    %cst_55 = arith.constant 1.000000e+00 : f32
    %311 = vector.broadcast %cst_55 : f32 to vector<8x128xf32>
    %312 = arith.addf %311, %310 : vector<8x128xf32>
    %313 = arith.divf %311, %312 : vector<8x128xf32>
    %314 = vector.extract_strided_slice %307 {offsets = [0, 128], sizes = [8, 128], strides = [1, 1]} : vector<8x512xf32> to vector<8x128xf32>
    %315 = arith.negf %314 : vector<8x128xf32>
    %316 = math.exp %315 : vector<8x128xf32>
    %cst_56 = arith.constant 1.000000e+00 : f32
    %317 = vector.broadcast %cst_56 : f32 to vector<8x128xf32>
    %318 = arith.addf %317, %316 : vector<8x128xf32>
    %319 = arith.divf %317, %318 : vector<8x128xf32>
    %320 = vector.extract_strided_slice %307 {offsets = [0, 256], sizes = [8, 128], strides = [1, 1]} : vector<8x512xf32> to vector<8x128xf32>
    %321 = math.tanh %320 : vector<8x128xf32>
    %322 = vector.extract_strided_slice %307 {offsets = [0, 384], sizes = [8, 128], strides = [1, 1]} : vector<8x512xf32> to vector<8x128xf32>
    %323 = arith.negf %322 : vector<8x128xf32>
    %324 = math.exp %323 : vector<8x128xf32>
    %cst_57 = arith.constant 1.000000e+00 : f32
    %325 = vector.broadcast %cst_57 : f32 to vector<8x128xf32>
    %326 = arith.addf %325, %324 : vector<8x128xf32>
    %327 = arith.divf %325, %326 : vector<8x128xf32>
    %328 = arith.mulf %319, %272 : vector<8x128xf32>
    %329 = arith.mulf %313, %321 : vector<8x128xf32>
    %330 = arith.addf %328, %329 : vector<8x128xf32>
    %331 = math.tanh %330 : vector<8x128xf32>
    %332 = arith.mulf %327, %331 : vector<8x128xf32>
    %333 = arith.truncf %332 : vector<8x128xf32> to vector<8x128xbf16>
    %334 = tpu.concatenate %333, %304 in 1 : vector<8x128xbf16>, vector<8x128xbf16> -> vector<8x256xbf16>
    %cst_58 = arith.constant dense<0.000000e+00> : vector<8x512xf32>
    %335 = tpu.matmul %334, %9, %cst_58 {dimension_numbers = #tpu.dot_dimension_numbers<[1], [0], [0], [1], [0, 0, 1, 1], [], []>} : vector<8x256xbf16>, vector<256x512xbf16>, vector<8x512xf32> -> vector<8x512xf32>
    %336 = arith.addf %335, %12 : vector<8x512xf32>
    %337 = vector.extract_strided_slice %336 {offsets = [0, 0], sizes = [8, 128], strides = [1, 1]} : vector<8x512xf32> to vector<8x128xf32>
    %338 = arith.negf %337 : vector<8x128xf32>
    %339 = math.exp %338 : vector<8x128xf32>
    %cst_59 = arith.constant 1.000000e+00 : f32
    %340 = vector.broadcast %cst_59 : f32 to vector<8x128xf32>
    %341 = arith.addf %340, %339 : vector<8x128xf32>
    %342 = arith.divf %340, %341 : vector<8x128xf32>
    %343 = vector.extract_strided_slice %336 {offsets = [0, 128], sizes = [8, 128], strides = [1, 1]} : vector<8x512xf32> to vector<8x128xf32>
    %344 = arith.negf %343 : vector<8x128xf32>
    %345 = math.exp %344 : vector<8x128xf32>
    %cst_60 = arith.constant 1.000000e+00 : f32
    %346 = vector.broadcast %cst_60 : f32 to vector<8x128xf32>
    %347 = arith.addf %346, %345 : vector<8x128xf32>
    %348 = arith.divf %346, %347 : vector<8x128xf32>
    %349 = vector.extract_strided_slice %336 {offsets = [0, 256], sizes = [8, 128], strides = [1, 1]} : vector<8x512xf32> to vector<8x128xf32>
    %350 = math.tanh %349 : vector<8x128xf32>
    %351 = vector.extract_strided_slice %336 {offsets = [0, 384], sizes = [8, 128], strides = [1, 1]} : vector<8x512xf32> to vector<8x128xf32>
    %352 = arith.negf %351 : vector<8x128xf32>
    %353 = math.exp %352 : vector<8x128xf32>
    %cst_61 = arith.constant 1.000000e+00 : f32
    %354 = vector.broadcast %cst_61 : f32 to vector<8x128xf32>
    %355 = arith.addf %354, %353 : vector<8x128xf32>
    %356 = arith.divf %354, %355 : vector<8x128xf32>
    %357 = arith.mulf %348, %301 : vector<8x128xf32>
    %358 = arith.mulf %342, %350 : vector<8x128xf32>
    %359 = arith.addf %357, %358 : vector<8x128xf32>
    %360 = math.tanh %359 : vector<8x128xf32>
    %361 = arith.mulf %356, %360 : vector<8x128xf32>
    %362 = arith.truncf %361 : vector<8x128xf32> to vector<8x128xbf16>
    %363 = vector.extract_strided_slice %7 {offsets = [48, 0], sizes = [8, 512], strides = [1, 1]} : vector<64x512xf32> to vector<8x512xf32>
    %cst_62 = arith.constant dense<0.000000e+00> : vector<8x512xf32>
    %364 = tpu.matmul %333, %8, %cst_62 {dimension_numbers = #tpu.dot_dimension_numbers<[1], [0], [0], [1], [0, 0, 1, 1], [], []>} : vector<8x128xbf16>, vector<128x512xbf16>, vector<8x512xf32> -> vector<8x512xf32>
    %365 = arith.addf %363, %364 : vector<8x512xf32>
    %366 = vector.extract_strided_slice %365 {offsets = [0, 0], sizes = [8, 128], strides = [1, 1]} : vector<8x512xf32> to vector<8x128xf32>
    %367 = arith.negf %366 : vector<8x128xf32>
    %368 = math.exp %367 : vector<8x128xf32>
    %cst_63 = arith.constant 1.000000e+00 : f32
    %369 = vector.broadcast %cst_63 : f32 to vector<8x128xf32>
    %370 = arith.addf %369, %368 : vector<8x128xf32>
    %371 = arith.divf %369, %370 : vector<8x128xf32>
    %372 = vector.extract_strided_slice %365 {offsets = [0, 128], sizes = [8, 128], strides = [1, 1]} : vector<8x512xf32> to vector<8x128xf32>
    %373 = arith.negf %372 : vector<8x128xf32>
    %374 = math.exp %373 : vector<8x128xf32>
    %cst_64 = arith.constant 1.000000e+00 : f32
    %375 = vector.broadcast %cst_64 : f32 to vector<8x128xf32>
    %376 = arith.addf %375, %374 : vector<8x128xf32>
    %377 = arith.divf %375, %376 : vector<8x128xf32>
    %378 = vector.extract_strided_slice %365 {offsets = [0, 256], sizes = [8, 128], strides = [1, 1]} : vector<8x512xf32> to vector<8x128xf32>
    %379 = math.tanh %378 : vector<8x128xf32>
    %380 = vector.extract_strided_slice %365 {offsets = [0, 384], sizes = [8, 128], strides = [1, 1]} : vector<8x512xf32> to vector<8x128xf32>
    %381 = arith.negf %380 : vector<8x128xf32>
    %382 = math.exp %381 : vector<8x128xf32>
    %cst_65 = arith.constant 1.000000e+00 : f32
    %383 = vector.broadcast %cst_65 : f32 to vector<8x128xf32>
    %384 = arith.addf %383, %382 : vector<8x128xf32>
    %385 = arith.divf %383, %384 : vector<8x128xf32>
    %386 = arith.mulf %377, %330 : vector<8x128xf32>
    %387 = arith.mulf %371, %379 : vector<8x128xf32>
    %388 = arith.addf %386, %387 : vector<8x128xf32>
    %389 = math.tanh %388 : vector<8x128xf32>
    %390 = arith.mulf %385, %389 : vector<8x128xf32>
    %391 = arith.truncf %390 : vector<8x128xf32> to vector<8x128xbf16>
    %392 = tpu.concatenate %391, %362 in 1 : vector<8x128xbf16>, vector<8x128xbf16> -> vector<8x256xbf16>
    %cst_66 = arith.constant dense<0.000000e+00> : vector<8x512xf32>
    %393 = tpu.matmul %392, %9, %cst_66 {dimension_numbers = #tpu.dot_dimension_numbers<[1], [0], [0], [1], [0, 0, 1, 1], [], []>} : vector<8x256xbf16>, vector<256x512xbf16>, vector<8x512xf32> -> vector<8x512xf32>
    %394 = arith.addf %393, %12 : vector<8x512xf32>
    %395 = vector.extract_strided_slice %394 {offsets = [0, 0], sizes = [8, 128], strides = [1, 1]} : vector<8x512xf32> to vector<8x128xf32>
    %396 = arith.negf %395 : vector<8x128xf32>
    %397 = math.exp %396 : vector<8x128xf32>
    %cst_67 = arith.constant 1.000000e+00 : f32
    %398 = vector.broadcast %cst_67 : f32 to vector<8x128xf32>
    %399 = arith.addf %398, %397 : vector<8x128xf32>
    %400 = arith.divf %398, %399 : vector<8x128xf32>
    %401 = vector.extract_strided_slice %394 {offsets = [0, 128], sizes = [8, 128], strides = [1, 1]} : vector<8x512xf32> to vector<8x128xf32>
    %402 = arith.negf %401 : vector<8x128xf32>
    %403 = math.exp %402 : vector<8x128xf32>
    %cst_68 = arith.constant 1.000000e+00 : f32
    %404 = vector.broadcast %cst_68 : f32 to vector<8x128xf32>
    %405 = arith.addf %404, %403 : vector<8x128xf32>
    %406 = arith.divf %404, %405 : vector<8x128xf32>
    %407 = vector.extract_strided_slice %394 {offsets = [0, 256], sizes = [8, 128], strides = [1, 1]} : vector<8x512xf32> to vector<8x128xf32>
    %408 = math.tanh %407 : vector<8x128xf32>
    %409 = vector.extract_strided_slice %394 {offsets = [0, 384], sizes = [8, 128], strides = [1, 1]} : vector<8x512xf32> to vector<8x128xf32>
    %410 = arith.negf %409 : vector<8x128xf32>
    %411 = math.exp %410 : vector<8x128xf32>
    %cst_69 = arith.constant 1.000000e+00 : f32
    %412 = vector.broadcast %cst_69 : f32 to vector<8x128xf32>
    %413 = arith.addf %412, %411 : vector<8x128xf32>
    %414 = arith.divf %412, %413 : vector<8x128xf32>
    %415 = arith.mulf %406, %359 : vector<8x128xf32>
    %416 = arith.mulf %400, %408 : vector<8x128xf32>
    %417 = arith.addf %415, %416 : vector<8x128xf32>
    %418 = math.tanh %417 : vector<8x128xf32>
    %419 = arith.mulf %414, %418 : vector<8x128xf32>
    %420 = arith.truncf %419 : vector<8x128xf32> to vector<8x128xbf16>
    %421 = vector.extract_strided_slice %7 {offsets = [56, 0], sizes = [8, 512], strides = [1, 1]} : vector<64x512xf32> to vector<8x512xf32>
    %cst_70 = arith.constant dense<0.000000e+00> : vector<8x512xf32>
    %422 = tpu.matmul %391, %8, %cst_70 {dimension_numbers = #tpu.dot_dimension_numbers<[1], [0], [0], [1], [0, 0, 1, 1], [], []>} : vector<8x128xbf16>, vector<128x512xbf16>, vector<8x512xf32> -> vector<8x512xf32>
    %423 = arith.addf %421, %422 : vector<8x512xf32>
    %424 = vector.extract_strided_slice %423 {offsets = [0, 0], sizes = [8, 128], strides = [1, 1]} : vector<8x512xf32> to vector<8x128xf32>
    %425 = arith.negf %424 : vector<8x128xf32>
    %426 = math.exp %425 : vector<8x128xf32>
    %cst_71 = arith.constant 1.000000e+00 : f32
    %427 = vector.broadcast %cst_71 : f32 to vector<8x128xf32>
    %428 = arith.addf %427, %426 : vector<8x128xf32>
    %429 = arith.divf %427, %428 : vector<8x128xf32>
    %430 = vector.extract_strided_slice %423 {offsets = [0, 128], sizes = [8, 128], strides = [1, 1]} : vector<8x512xf32> to vector<8x128xf32>
    %431 = arith.negf %430 : vector<8x128xf32>
    %432 = math.exp %431 : vector<8x128xf32>
    %cst_72 = arith.constant 1.000000e+00 : f32
    %433 = vector.broadcast %cst_72 : f32 to vector<8x128xf32>
    %434 = arith.addf %433, %432 : vector<8x128xf32>
    %435 = arith.divf %433, %434 : vector<8x128xf32>
    %436 = vector.extract_strided_slice %423 {offsets = [0, 256], sizes = [8, 128], strides = [1, 1]} : vector<8x512xf32> to vector<8x128xf32>
    %437 = math.tanh %436 : vector<8x128xf32>
    %438 = vector.extract_strided_slice %423 {offsets = [0, 384], sizes = [8, 128], strides = [1, 1]} : vector<8x512xf32> to vector<8x128xf32>
    %439 = arith.negf %438 : vector<8x128xf32>
    %440 = math.exp %439 : vector<8x128xf32>
    %cst_73 = arith.constant 1.000000e+00 : f32
    %441 = vector.broadcast %cst_73 : f32 to vector<8x128xf32>
    %442 = arith.addf %441, %440 : vector<8x128xf32>
    %443 = arith.divf %441, %442 : vector<8x128xf32>
    %444 = arith.mulf %435, %388 : vector<8x128xf32>
    %445 = arith.mulf %429, %437 : vector<8x128xf32>
    %446 = arith.addf %444, %445 : vector<8x128xf32>
    %447 = math.tanh %446 : vector<8x128xf32>
    %448 = arith.mulf %443, %447 : vector<8x128xf32>
    %449 = arith.truncf %448 : vector<8x128xf32> to vector<8x128xbf16>
    %450 = tpu.concatenate %449, %420 in 1 : vector<8x128xbf16>, vector<8x128xbf16> -> vector<8x256xbf16>
    %cst_74 = arith.constant dense<0.000000e+00> : vector<8x512xf32>
    %451 = tpu.matmul %450, %9, %cst_74 {dimension_numbers = #tpu.dot_dimension_numbers<[1], [0], [0], [1], [0, 0, 1, 1], [], []>} : vector<8x256xbf16>, vector<256x512xbf16>, vector<8x512xf32> -> vector<8x512xf32>
    %452 = arith.addf %451, %12 : vector<8x512xf32>
    %453 = vector.extract_strided_slice %452 {offsets = [0, 0], sizes = [8, 128], strides = [1, 1]} : vector<8x512xf32> to vector<8x128xf32>
    %454 = arith.negf %453 : vector<8x128xf32>
    %455 = math.exp %454 : vector<8x128xf32>
    %cst_75 = arith.constant 1.000000e+00 : f32
    %456 = vector.broadcast %cst_75 : f32 to vector<8x128xf32>
    %457 = arith.addf %456, %455 : vector<8x128xf32>
    %458 = arith.divf %456, %457 : vector<8x128xf32>
    %459 = vector.extract_strided_slice %452 {offsets = [0, 128], sizes = [8, 128], strides = [1, 1]} : vector<8x512xf32> to vector<8x128xf32>
    %460 = arith.negf %459 : vector<8x128xf32>
    %461 = math.exp %460 : vector<8x128xf32>
    %cst_76 = arith.constant 1.000000e+00 : f32
    %462 = vector.broadcast %cst_76 : f32 to vector<8x128xf32>
    %463 = arith.addf %462, %461 : vector<8x128xf32>
    %464 = arith.divf %462, %463 : vector<8x128xf32>
    %465 = vector.extract_strided_slice %452 {offsets = [0, 256], sizes = [8, 128], strides = [1, 1]} : vector<8x512xf32> to vector<8x128xf32>
    %466 = math.tanh %465 : vector<8x128xf32>
    %467 = vector.extract_strided_slice %452 {offsets = [0, 384], sizes = [8, 128], strides = [1, 1]} : vector<8x512xf32> to vector<8x128xf32>
    %468 = arith.negf %467 : vector<8x128xf32>
    %469 = math.exp %468 : vector<8x128xf32>
    %cst_77 = arith.constant 1.000000e+00 : f32
    %470 = vector.broadcast %cst_77 : f32 to vector<8x128xf32>
    %471 = arith.addf %470, %469 : vector<8x128xf32>
    %472 = arith.divf %470, %471 : vector<8x128xf32>
    %473 = arith.mulf %464, %417 : vector<8x128xf32>
    %474 = arith.mulf %458, %466 : vector<8x128xf32>
    %475 = arith.addf %473, %474 : vector<8x128xf32>
    %476 = math.tanh %475 : vector<8x128xf32>
    %477 = arith.mulf %472, %476 : vector<8x128xf32>
    %c0_78 = arith.constant 0 : index
    %c0_79 = arith.constant 0 : index
    %478 = vector.load %arg7[%c0_78, %c0_79] : memref<128x32xbf16, #tpu.memory_space<vmem>>, vector<128x32xbf16>
    %479 = arith.truncf %477 : vector<8x128xf32> to vector<8x128xbf16>
    %cst_80 = arith.constant dense<0.000000e+00> : vector<8x32xf32>
    %480 = tpu.matmul %479, %478, %cst_80 {dimension_numbers = #tpu.dot_dimension_numbers<[1], [0], [0], [1], [0, 0, 1, 1], [], []>} : vector<8x128xbf16>, vector<128x32xbf16>, vector<8x32xf32> -> vector<8x32xf32>
    %c0_81 = arith.constant 0 : index
    %c0_82 = arith.constant 0 : index
    %481 = vector.load %arg8[%c0_81, %c0_82] : memref<1x32xf32, #tpu.memory_space<vmem>>, vector<1x32xf32>
    %482 = vector.broadcast %481 : vector<1x32xf32> to vector<8x32xf32>
    %483 = arith.addf %480, %482 : vector<8x32xf32>
    %cst_83 = arith.constant dense<0.000000e+00> : vector<8xf32>
    %484 = vector.multi_reduction <add>, %483, %cst_83 [1] : vector<8x32xf32> to vector<8xf32>
    %485 = vector.shape_cast %484 : vector<8xf32> to vector<8x1xf32>
    %cst_84 = arith.constant 3.200000e+01 : f32
    %486 = vector.broadcast %cst_84 : f32 to vector<8x1xf32>
    %487 = arith.divf %485, %486 : vector<8x1xf32>
    %488 = vector.broadcast %487 : vector<8x1xf32> to vector<8x32xf32>
    %489 = arith.subf %483, %488 : vector<8x32xf32>
    %490 = arith.mulf %489, %489 : vector<8x32xf32>
    %cst_85 = arith.constant dense<0.000000e+00> : vector<8xf32>
    %491 = vector.multi_reduction <add>, %490, %cst_85 [1] : vector<8x32xf32> to vector<8xf32>
    %492 = vector.shape_cast %491 : vector<8xf32> to vector<8x1xf32>
    %cst_86 = arith.constant 3.200000e+01 : f32
    %493 = vector.broadcast %cst_86 : f32 to vector<8x1xf32>
    %494 = arith.divf %492, %493 : vector<8x1xf32>
    %495 = vector.broadcast %487 : vector<8x1xf32> to vector<8x32xf32>
    %496 = arith.subf %483, %495 : vector<8x32xf32>
    %cst_87 = arith.constant 9.99999974E-6 : f32
    %497 = vector.broadcast %cst_87 : f32 to vector<8x1xf32>
    %498 = arith.addf %494, %497 : vector<8x1xf32>
    %499 = math.rsqrt %498 : vector<8x1xf32>
    %500 = vector.broadcast %499 : vector<8x1xf32> to vector<8x32xf32>
    %501 = arith.mulf %496, %500 : vector<8x32xf32>
    %c0_88 = arith.constant 0 : index
    %c0_89 = arith.constant 0 : index
    %502 = vector.load %arg9[%c0_88, %c0_89] : memref<1x32xf32, #tpu.memory_space<vmem>>, vector<1x32xf32>
    %503 = vector.broadcast %502 : vector<1x32xf32> to vector<8x32xf32>
    %504 = arith.mulf %501, %503 : vector<8x32xf32>
    %c0_90 = arith.constant 0 : index
    %c0_91 = arith.constant 0 : index
    %505 = vector.load %arg10[%c0_90, %c0_91] : memref<1x32xf32, #tpu.memory_space<vmem>>, vector<1x32xf32>
    %506 = vector.broadcast %505 : vector<1x32xf32> to vector<8x32xf32>
    %507 = arith.addf %504, %506 : vector<8x32xf32>
    %cst_92 = arith.constant 0.000000e+00 : f32
    %508 = vector.broadcast %cst_92 : f32 to vector<8x32xf32>
    %509 = arith.cmpf ogt, %507, %508 : vector<8x32xf32>
    %cst_93 = arith.constant 0.00999999977 : f32
    %510 = vector.broadcast %cst_93 : f32 to vector<8x32xf32>
    %511 = arith.mulf %510, %507 : vector<8x32xf32>
    %512 = arith.select %509, %507, %511 : vector<8x32xi1>, vector<8x32xf32>
    %c0_94 = arith.constant 0 : index
    %c0_95 = arith.constant 0 : index
    %513 = vector.load %arg11[%c0_94, %c0_95] : memref<32x16xbf16, #tpu.memory_space<vmem>>, vector<32x16xbf16>
    %514 = arith.truncf %512 : vector<8x32xf32> to vector<8x32xbf16>
    %cst_96 = arith.constant dense<0.000000e+00> : vector<8x16xf32>
    %515 = tpu.matmul %514, %513, %cst_96 {dimension_numbers = #tpu.dot_dimension_numbers<[1], [0], [0], [1], [0, 0, 1, 1], [], []>} : vector<8x32xbf16>, vector<32x16xbf16>, vector<8x16xf32> -> vector<8x16xf32>
    %c0_97 = arith.constant 0 : index
    %c0_98 = arith.constant 0 : index
    %516 = vector.load %arg12[%c0_97, %c0_98] : memref<1x16xf32, #tpu.memory_space<vmem>>, vector<1x16xf32>
    %517 = vector.broadcast %516 : vector<1x16xf32> to vector<8x16xf32>
    %518 = arith.addf %515, %517 : vector<8x16xf32>
    %cst_99 = arith.constant 0.000000e+00 : f32
    %519 = vector.broadcast %cst_99 : f32 to vector<8x16xf32>
    %520 = arith.cmpf ogt, %518, %519 : vector<8x16xf32>
    %cst_100 = arith.constant 0.00999999977 : f32
    %521 = vector.broadcast %cst_100 : f32 to vector<8x16xf32>
    %522 = arith.mulf %521, %518 : vector<8x16xf32>
    %523 = arith.select %520, %518, %522 : vector<8x16xi1>, vector<8x16xf32>
    %c0_101 = arith.constant 0 : index
    %c0_102 = arith.constant 0 : index
    %524 = vector.load %arg13[%c0_101, %c0_102] : memref<16x1xbf16, #tpu.memory_space<vmem>>, vector<16x1xbf16>
    %525 = arith.truncf %523 : vector<8x16xf32> to vector<8x16xbf16>
    %cst_103 = arith.constant dense<0.000000e+00> : vector<8x1xf32>
    %526 = tpu.matmul %525, %524, %cst_103 {dimension_numbers = #tpu.dot_dimension_numbers<[1], [0], [0], [1], [0, 0, 1, 1], [], []>} : vector<8x16xbf16>, vector<16x1xbf16>, vector<8x1xf32> -> vector<8x1xf32>
    %c0_104 = arith.constant 0 : index
    %c0_105 = arith.constant 0 : index
    %527 = vector.load %arg14[%c0_104, %c0_105] : memref<1x1xf32, #tpu.memory_space<vmem>>, vector<1x1xf32>
    %528 = vector.broadcast %527 : vector<1x1xf32> to vector<8x1xf32>
    %529 = arith.addf %526, %528 : vector<8x1xf32>
    %c0_106 = arith.constant 0 : index
    %c0_107 = arith.constant 0 : index
    %530 = vector.load %arg15[%c0_106, %c0_107] : memref<8x1xf32, #tpu.memory_space<vmem>>, vector<8x1xf32>
    tpu.vector_store %arg15[%c0_106, %c0_107], %529 {strides = array<i32>} : memref<8x1xf32, #tpu.memory_space<vmem>>, vector<8x1xf32>,
    return
  }
  func.func @transform_0(%arg0: i32) -> (i32, i32, i32) {
    %c0_i32 = arith.constant 0 : i32
    %c0_i32_0 = arith.constant 0 : i32
    %c0_i32_1 = arith.constant 0 : i32
    return %c0_i32, %arg0, %c0_i32_0 : i32, i32, i32
  }
  func.func @transform_1(%arg0: i32) -> (i32, i32) {
    %c0_i32 = arith.constant 0 : i32
    %c0_i32_0 = arith.constant 0 : i32
    %c0_i32_1 = arith.constant 0 : i32
    return %c0_i32, %c0_i32_0 : i32, i32
  }
  func.func @transform_2(%arg0: i32) -> (i32, i32) {
    %c0_i32 = arith.constant 0 : i32
    %c0_i32_0 = arith.constant 0 : i32
    %c0_i32_1 = arith.constant 0 : i32
    return %c0_i32, %c0_i32_0 : i32, i32
  }
  func.func @transform_3(%arg0: i32) -> (i32, i32) {
    %c0_i32 = arith.constant 0 : i32
    %c0_i32_0 = arith.constant 0 : i32
    %c0_i32_1 = arith.constant 0 : i32
    return %c0_i32, %c0_i32_0 : i32, i32
  }
  func.func @transform_4(%arg0: i32) -> (i32, i32) {
    %c0_i32 = arith.constant 0 : i32
    %c0_i32_0 = arith.constant 0 : i32
    %c0_i32_1 = arith.constant 0 : i32
    return %c0_i32, %c0_i32_0 : i32, i32
  }
  func.func @transform_5(%arg0: i32) -> (i32, i32) {
    %c0_i32 = arith.constant 0 : i32
    %c0_i32_0 = arith.constant 0 : i32
    %c0_i32_1 = arith.constant 0 : i32
    return %c0_i32, %c0_i32_0 : i32, i32
  }
  func.func @transform_6(%arg0: i32) -> (i32, i32) {
    %c0_i32 = arith.constant 0 : i32
    %c0_i32_0 = arith.constant 0 : i32
    %c0_i32_1 = arith.constant 0 : i32
    return %c0_i32, %c0_i32_0 : i32, i32
  }
  func.func @transform_7(%arg0: i32) -> (i32, i32) {
    %c0_i32 = arith.constant 0 : i32
    %c0_i32_0 = arith.constant 0 : i32
    %c0_i32_1 = arith.constant 0 : i32
    return %c0_i32, %c0_i32_0 : i32, i32
  }
  func.func @transform_8(%arg0: i32) -> (i32, i32) {
    %c0_i32 = arith.constant 0 : i32
    %c0_i32_0 = arith.constant 0 : i32
    %c0_i32_1 = arith.constant 0 : i32
    return %c0_i32, %c0_i32_0 : i32, i32
  }
  func.func @transform_9(%arg0: i32) -> (i32, i32) {
    %c0_i32 = arith.constant 0 : i32
    %c0_i32_0 = arith.constant 0 : i32
    %c0_i32_1 = arith.constant 0 : i32
    return %c0_i32, %c0_i32_0 : i32, i32
  }
  func.func @transform_10(%arg0: i32) -> (i32, i32) {
    %c0_i32 = arith.constant 0 : i32
    %c0_i32_0 = arith.constant 0 : i32
    %c0_i32_1 = arith.constant 0 : i32
    return %c0_i32, %c0_i32_0 : i32, i32
  }
  func.func @transform_11(%arg0: i32) -> (i32, i32) {
    %c0_i32 = arith.constant 0 : i32
    %c0_i32_0 = arith.constant 0 : i32
    %c0_i32_1 = arith.constant 0 : i32
    return %c0_i32, %c0_i32_0 : i32, i32
  }
  func.func @transform_12(%arg0: i32) -> (i32, i32) {
    %c0_i32 = arith.constant 0 : i32
    %c0_i32_0 = arith.constant 0 : i32
    %c0_i32_1 = arith.constant 0 : i32
    return %c0_i32, %c0_i32_0 : i32, i32
  }
  func.func @transform_13(%arg0: i32) -> (i32, i32) {
    %c0_i32 = arith.constant 0 : i32
    %c0_i32_0 = arith.constant 0 : i32
    %c0_i32_1 = arith.constant 0 : i32
    return %c0_i32, %c0_i32_0 : i32, i32
  }
  func.func @transform_14(%arg0: i32) -> (i32, i32) {
    %c0_i32 = arith.constant 0 : i32
    %c0_i32_0 = arith.constant 0 : i32
    return %arg0, %c0_i32 : i32, i32
  }
}

</mosaic_0001>

<llo_original>
// kernel: weather_lstm_forward.1
$region0: #{weather_lstm_forward.1}
  #allocation0 [shape = 'u32[]', space=smem, size = 0x4, offset = 0x4, fixed_abs, tag = 'smem constant byte address 0x4 - core index']
  #allocation1 [shape = 'u32[72,128]{1,0:T(1,128)}', space=vmem, size = 0x9000, scoped, tag = 'internal scratch']
  #allocation2 [shape = 'f32[1,1]{1,0:T(1,128)S(1)}', space=vmem, size = 0x200, scoped, tag = 'scoped memory for weather_lstm_forward.1']
  %s0 = inlined_call_operand.vmem [shape: f32[8,8,5], index: 0, kind: input, shape index: {}]
  %s1 = inlined_call_operand.vmem [shape: bf16[5,512], index: 1, kind: input, shape index: {}]
  %s2 = inlined_call_operand.vmem [shape: bf16[128,512], index: 2, kind: input, shape index: {}]
  %s3 = inlined_call_operand.vmem [shape: f32[1,512], index: 3, kind: input, shape index: {}]
  %s4 = inlined_call_operand.vmem [shape: bf16[256,512], index: 4, kind: input, shape index: {}]
  %s5 = inlined_call_operand.vmem [shape: f32[1,512], index: 5, kind: input, shape index: {}]
  %s6 = inlined_call_operand.vmem [shape: bf16[128,32], index: 6, kind: input, shape index: {}]
  %s7 = inlined_call_operand.vmem [shape: f32[1,32], index: 7, kind: input, shape index: {}]
  %s8 = inlined_call_operand.vmem [shape: f32[1,32], index: 8, kind: input, shape index: {}]
  %s9 = inlined_call_operand.vmem [shape: f32[1,32], index: 9, kind: input, shape index: {}]
  %s10 = inlined_call_operand.vmem [shape: bf16[32,16], index: 10, kind: input, shape index: {}]
  %s11 = inlined_call_operand.vmem [shape: f32[1,16], index: 11, kind: input, shape index: {}]
  %s12 = inlined_call_operand.vmem [shape: bf16[16,1], index: 12, kind: input, shape index: {}]
  %s13 = inlined_call_operand.<no memory space> [shape: f32[1,1], index: 13, kind: input, shape index: {}]
  %s14 = inlined_call_operand.vmem [shape: f32[8,1], index: 14, kind: output, shape index: {}]
  %s15 = sld [smem:[#allocation0]]
  $region66: #{weather_lstm_forward.1} parent=0
    _
  %s17 = ssub.s32 1, %s15
  %s18 = scalar_select 0, %s17, %s15
  %v19 = vstv %s13
  %20 = vst [vmem:[#allocation2] sm:$0x1] %v19
  // Predicated region
  $region2: #{weather_lstm_forward.1} parent=0 // pred_check
    _
  $region3: #{weather_lstm_forward.1} parent=0 // pred_check_branch
    %22 = sbr.rel (0) target = $region5
  $region4: #{weather_lstm_forward.1} parent=0 // pred_region
    _
  $region5: #{weather_lstm_forward.1} parent=0 // pred_fallthru
    _
  // Predicated region
  $region6: #{weather_lstm_forward.1} parent=0 // pred_check
    _
  $region7: #{weather_lstm_forward.1} parent=0 // pred_check_branch
    %24 = sbr.rel (0) target = $region9
  $region8: #{weather_lstm_forward.1} parent=0 // pred_region
    _
  $region9: #{weather_lstm_forward.1} parent=0 // pred_fallthru
    _
  // Predicated region
  $region10: #{weather_lstm_forward.1} parent=0 // pred_check
    _
  $region11: #{weather_lstm_forward.1} parent=0 // pred_check_branch
    %26 = sbr.rel (0) target = $region13
  $region12: #{weather_lstm_forward.1} parent=0 // pred_region
    _
  $region13: #{weather_lstm_forward.1} parent=0 // pred_fallthru
    _
  // Predicated region
  $region14: #{weather_lstm_forward.1} parent=0 // pred_check
    _
  $region15: #{weather_lstm_forward.1} parent=0 // pred_check_branch
    %28 = sbr.rel (0) target = $region17
  $region16: #{weather_lstm_forward.1} parent=0 // pred_region
    _
  $region17: #{weather_lstm_forward.1} parent=0 // pred_fallthru
    _
  // Predicated region
  $region18: #{weather_lstm_forward.1} parent=0 // pred_check
    _
  $region19: #{weather_lstm_forward.1} parent=0 // pred_check_branch
    %30 = sbr.rel (0) target = $region21
  $region20: #{weather_lstm_forward.1} parent=0 // pred_region
    _
  $region21: #{weather_lstm_forward.1} parent=0 // pred_fallthru
    _
  // Predicated region
  $region22: #{weather_lstm_forward.1} parent=0 // pred_check
    _
  $region23: #{weather_lstm_forward.1} parent=0 // pred_check_branch
    %32 = sbr.rel (0) target = $region25
  $region24: #{weather_lstm_forward.1} parent=0 // pred_region
    _
  $region25: #{weather_lstm_forward.1} parent=0 // pred_fallthru
    _
  // Predicated region
  $region26: #{weather_lstm_forward.1} parent=0 // pred_check
    _
  $region27: #{weather_lstm_forward.1} parent=0 // pred_check_branch
    %34 = sbr.rel (0) target = $region29
  $region28: #{weather_lstm_forward.1} parent=0 // pred_region
    _
  $region29: #{weather_lstm_forward.1} parent=0 // pred_fallthru
    _
  // Predicated region
  $region30: #{weather_lstm_forward.1} parent=0 // pred_check
    _
  $region31: #{weather_lstm_forward.1} parent=0 // pred_check_branch
    %36 = sbr.rel (0) target = $region33
  $region32: #{weather_lstm_forward.1} parent=0 // pred_region
    _
  $region33: #{weather_lstm_forward.1} parent=0 // pred_fallthru
    _
  // Predicated region
  $region34: #{weather_lstm_forward.1} parent=0 // pred_check
    _
  $region35: #{weather_lstm_forward.1} parent=0 // pred_check_branch
    %38 = sbr.rel (0) target = $region37
  $region36: #{weather_lstm_forward.1} parent=0 // pred_region
    _
  $region37: #{weather_lstm_forward.1} parent=0 // pred_fallthru
    _
  // Predicated region
  $region38: #{weather_lstm_forward.1} parent=0 // pred_check
    _
  $region39: #{weather_lstm_forward.1} parent=0 // pred_check_branch
    %40 = sbr.rel (0) target = $region41
  $region40: #{weather_lstm_forward.1} parent=0 // pred_region
    _
  $region41: #{weather_lstm_forward.1} parent=0 // pred_fallthru
    _
  // Predicated region
  $region42: #{weather_lstm_forward.1} parent=0 // pred_check
    _
  $region43: #{weather_lstm_forward.1} parent=0 // pred_check_branch
    %42 = sbr.rel (0) target = $region45
  $region44: #{weather_lstm_forward.1} parent=0 // pred_region
    _
  $region45: #{weather_lstm_forward.1} parent=0 // pred_fallthru
    _
  // Predicated region
  $region46: #{weather_lstm_forward.1} parent=0 // pred_check
    _
  $region47: #{weather_lstm_forward.1} parent=0 // pred_check_branch
    %44 = sbr.rel (0) target = $region49
  $region48: #{weather_lstm_forward.1} parent=0 // pred_region
    _
  $region49: #{weather_lstm_forward.1} parent=0 // pred_fallthru
    _
  // Predicated region
  $region50: #{weather_lstm_forward.1} parent=0 // pred_check
    _
  $region51: #{weather_lstm_forward.1} parent=0 // pred_check_branch
    %46 = sbr.rel (0) target = $region53
  $region52: #{weather_lstm_forward.1} parent=0 // pred_region
    _
  $region53: #{weather_lstm_forward.1} parent=0 // pred_fallthru
    _
  // Predicated region
  $region54: #{weather_lstm_forward.1} parent=0 // pred_check
    _
  $region55: #{weather_lstm_forward.1} parent=0 // pred_check_branch
    %48 = sbr.rel (0) target = $region57
  $region56: #{weather_lstm_forward.1} parent=0 // pred_region
    _
  $region57: #{weather_lstm_forward.1} parent=0 // pred_fallthru
    _
  %v50 = vld [vmem:[%s0] sm:$0xff]
  %v51 = vld [vmem:[%s0 + $0x8] sm:$0xff]
  %v52 = vld [vmem:[%s0 + $0x10] sm:$0xff]
  %v53 = vld [vmem:[%s0 + $0x18] sm:$0xff]
  %v54 = vld [vmem:[%s0 + $0x20] sm:$0xff]
  %v55 = vld [vmem:[%s0 + $0x28] sm:$0xff]
  %v56 = vld [vmem:[%s0 + $0x30] sm:$0xff]
  %v57 = vld [vmem:[%s0 + $0x38] sm:$0xff]
  %v58 = vld [vmem:[%s1] sm:$0x77]
  %v59 = vld [vmem:[%s1 + $0x8] sm:$0x77]
  %v60 = vpack.c.bf16 %v51, %v50
  %v61 = vpack.c.bf16 %v53, %v52
  %v62 = vpack.c.bf16 %v55, %v54
  %v63 = vpack.c.bf16 %v57, %v56
  %v64 = vld [vmem:[%s3] sm:$0xf]
  %v66 = vperm.slane %v64, 0
  %v67 = vperm.slane %v64, 1
  %v68 = vperm.slane %v64, 2
  %v69 = vperm.slane %v64, 3
  %v76 = vunpack.c.l.b16 %v58
  %v77 = vunpack.c.h.b16 %v58
  %v78 = vunpack.c.l.b16 %v59
  %v79 = vunpack.c.h.b16 %v59
  %v80 = vpack.c.b16 %v76, %v76
  %v81 = vpack.c.b16 %v77, %v77
  %v82 = vpack.c.b16 %v78, %v78
  %v83 = vpack.c.b16 %v79, %v79
  %vm84 = vcmask 39936
  %v86 = vsel %vm84, %v60, 0
  %v89 = vsel %vm84, %v61, 0
  %v92 = vsel %vm84, %v62, 0
  %v95 = vsel %vm84, %v63, 0
  %vm97 = vcmask 1041408
  %vm98 = vcmask 1042432
  %v99 = vsel %vm97, 4294967295, 65535
  %v100 = vsel %vm98, %v99, 0
  %v102 = vand.u32 %v80, %v100
  %v105 = vand.u32 %v81, %v100
  %v108 = vand.u32 %v82, %v100
  %v111 = vand.u32 %v83, %v100
  %113 = vmatpush.bf16.msra.mxu0 0
  %114 = vmatpush.bf16.msra.mxu0 0
  %115 = vmatpush.bf16.msra.mxu0 0
  %116 = vmatpush.bf16.msra.mxu0 0
  %117 = vmatpush.bf16.msra.mxu0 0
  %118 = vmatpush.bf16.msra.mxu0 0
  %119 = vmatpush.bf16.msra.mxu0 0
  %120 = vmatpush.bf16.msra.mxu0 %v102
  %121 = vmatmul.bf16.gmra.mxu0 %v86
  %v122 = vpop.f32.mrf.mxu0
  %v123 = vadd.f32 %v66, %v122
  %v124 = vpop.f32.mrf.mxu0
  %v125 = vadd.f32 %v66, %v124
  %126 = vmatmul.bf16.gmra.mxu0 %v89
  %v127 = vpop.f32.mrf.mxu0
  %v128 = vadd.f32 %v66, %v127
  %v129 = vpop.f32.mrf.mxu0
  %v130 = vadd.f32 %v66, %v129
  %131 = vmatmul.bf16.gmra.mxu0 %v92
  %v132 = vpop.f32.mrf.mxu0
  %v133 = vadd.f32 %v66, %v132
  %v134 = vpop.f32.mrf.mxu0
  %v135 = vadd.f32 %v66, %v134
  %136 = vmatmul.bf16.gmra.mxu0 %v95
  %v137 = vpop.f32.mrf.mxu0
  %v138 = vadd.f32 %v66, %v137
  %v139 = vpop.f32.mrf.mxu0
  %v140 = vadd.f32 %v66, %v139
  %141 = vdwg.mxu0
  %142 = vmatpush.bf16.msra.mxu0 0
  %143 = vmatpush.bf16.msra.mxu0 0
  %144 = vmatpush.bf16.msra.mxu0 0
  %145 = vmatpush.bf16.msra.mxu0 0
  %146 = vmatpush.bf16.msra.mxu0 0
  %147 = vmatpush.bf16.msra.mxu0 0
  %148 = vmatpush.bf16.msra.mxu0 0
  %149 = vmatpush.bf16.msra.mxu0 %v105
  %150 = vmatmul.bf16.gmra.mxu0 %v86
  %v151 = vpop.f32.mrf.mxu0
  %v152 = vadd.f32 %v67, %v151
  %v153 = vpop.f32.mrf.mxu0
  %v154 = vadd.f32 %v67, %v153
  %155 = vmatmul.bf16.gmra.mxu0 %v89
  %v156 = vpop.f32.mrf.mxu0
  %v157 = vadd.f32 %v67, %v156
  %v158 = vpop.f32.mrf.mxu0
  %v159 = vadd.f32 %v67, %v158
  %160 = vmatmul.bf16.gmra.mxu0 %v92
  %v161 = vpop.f32.mrf.mxu0
  %v162 = vadd.f32 %v67, %v161
  %v163 = vpop.f32.mrf.mxu0
  %v164 = vadd.f32 %v67, %v163
  %165 = vmatmul.bf16.gmra.mxu0 %v95
  %v166 = vpop.f32.mrf.mxu0
  %v167 = vadd.f32 %v67, %v166
  %v168 = vpop.f32.mrf.mxu0
  %v169 = vadd.f32 %v67, %v168
  %170 = vdwg.mxu0
  %171 = vmatpush.bf16.msra.mxu0 0
  %172 = vmatpush.bf16.msra.mxu0 0
  %173 = vmatpush.bf16.msra.mxu0 0
  %174 = vmatpush.bf16.msra.mxu0 0
  %175 = vmatpush.bf16.msra.mxu0 0
  %176 = vmatpush.bf16.msra.mxu0 0
  %177 = vmatpush.bf16.msra.mxu0 0
  %178 = vmatpush.bf16.msra.mxu0 %v108
  %179 = vmatmul.bf16.gmra.mxu0 %v86
  %v180 = vpop.f32.mrf.mxu0
  %v181 = vadd.f32 %v68, %v180
  %v182 = vpop.f32.mrf.mxu0
  %v183 = vadd.f32 %v68, %v182
  %184 = vmatmul.bf16.gmra.mxu0 %v89
  %v185 = vpop.f32.mrf.mxu0
  %v186 = vadd.f32 %v68, %v185
  %v187 = vpop.f32.mrf.mxu0
  %v188 = vadd.f32 %v68, %v187
  %189 = vmatmul.bf16.gmra.mxu0 %v92
  %v190 = vpop.f32.mrf.mxu0
  %v191 = vadd.f32 %v68, %v190
  %v192 = vpop.f32.mrf.mxu0
  %v193 = vadd.f32 %v68, %v192
  %194 = vmatmul.bf16.gmra.mxu0 %v95
  %v195 = vpop.f32.mrf.mxu0
  %v196 = vadd.f32 %v68, %v195
  %v197 = vpop.f32.mrf.mxu0
  %v198 = vadd.f32 %v68, %v197
  %199 = vdwg.mxu0
  %200 = vmatpush.bf16.msra.mxu0 0
  %201 = vmatpush.bf16.msra.mxu0 0
  %202 = vmatpush.bf16.msra.mxu0 0
  %203 = vmatpush.bf16.msra.mxu0 0
  %204 = vmatpush.bf16.msra.mxu0 0
  %205 = vmatpush.bf16.msra.mxu0 0
  %206 = vmatpush.bf16.msra.mxu0 0
  %207 = vmatpush.bf16.msra.mxu0 %v111
  %208 = vmatmul.bf16.gmra.mxu0 %v86
  %v209 = vpop.f32.mrf.mxu0
  %v210 = vadd.f32 %v69, %v209
  %v211 = vpop.f32.mrf.mxu0
  %v212 = vadd.f32 %v69, %v211
  %213 = vmatmul.bf16.gmra.mxu0 %v89
  %v214 = vpop.f32.mrf.mxu0
  %v215 = vadd.f32 %v69, %v214
  %v216 = vpop.f32.mrf.mxu0
  %v217 = vadd.f32 %v69, %v216
  %218 = vmatmul.bf16.gmra.mxu0 %v92
  %v219 = vpop.f32.mrf.mxu0
  %v220 = vadd.f32 %v69, %v219
  %v221 = vpop.f32.mrf.mxu0
  %v222 = vadd.f32 %v69, %v221
  %223 = vmatmul.bf16.gmra.mxu0 %v95
  %v224 = vpop.f32.mrf.mxu0
  %v225 = vadd.f32 %v69, %v224
  %v226 = vpop.f32.mrf.mxu0
  %v227 = vadd.f32 %v69, %v226
  %228 = vdwg.mxu0
  %v229 = vld [vmem:[%s2] sm:$0xff]
  %v230 = vld [vmem:[%s2 + $0x8] sm:$0xff]
  %v231 = vld [vmem:[%s2 + $0x10] sm:$0xff]
  %v232 = vld [vmem:[%s2 + $0x18] sm:$0xff]
  %v233 = vld [vmem:[%s2 + $0x20] sm:$0xff]
  %v234 = vld [vmem:[%s2 + $0x28] sm:$0xff]
  %v235 = vld [vmem:[%s2 + $0x30] sm:$0xff]
  %v236 = vld [vmem:[%s2 + $0x38] sm:$0xff]
  %v237 = vld [vmem:[%s2 + $0x40] sm:$0xff]
  %v238 = vld [vmem:[%s2 + $0x48] sm:$0xff]
  %v239 = vld [vmem:[%s2 + $0x50] sm:$0xff]
  %v240 = vld [vmem:[%s2 + $0x58] sm:$0xff]
  %v241 = vld [vmem:[%s2 + $0x60] sm:$0xff]
  %v242 = vld [vmem:[%s2 + $0x68] sm:$0xff]
  %v243 = vld [vmem:[%s2 + $0x70] sm:$0xff]
  %v244 = vld [vmem:[%s2 + $0x78] sm:$0xff]
  %v245 = vld [vmem:[%s2 + $0x80] sm:$0xff]
  %v246 = vld [vmem:[%s2 + $0x88] sm:$0xff]
  %v247 = vld [vmem:[%s2 + $0x90] sm:$0xff]
  %v248 = vld [vmem:[%s2 + $0x98] sm:$0xff]
  %v249 = vld [vmem:[%s2 + $0xa0] sm:$0xff]
  %v250 = vld [vmem:[%s2 + $0xa8] sm:$0xff]
  %v251 = vld [vmem:[%s2 + $0xb0] sm:$0xff]
  %v252 = vld [vmem:[%s2 + $0xb8] sm:$0xff]
  %v253 = vld [vmem:[%s2 + $0xc0] sm:$0xff]
  %v254 = vld [vmem:[%s2 + $0xc8] sm:$0xff]
  %v255 = vld [vmem:[%s2 + $0xd0] sm:$0xff]
  %v256 = vld [vmem:[%s2 + $0xd8] sm:$0xff]
  %v257 = vld [vmem:[%s2 + $0xe0] sm:$0xff]
  %v258 = vld [vmem:[%s2 + $0xe8] sm:$0xff]
  %v259 = vld [vmem:[%s2 + $0xf0] sm:$0xff]
  %v260 = vld [vmem:[%s2 + $0xf8] sm:$0xff]
  %v261 = vld [vmem:[%s4] sm:$0xff]
  %v262 = vld [vmem:[%s4 + $0x8] sm:$0xff]
  %v263 = vld [vmem:[%s4 + $0x10] sm:$0xff]
  %v264 = vld [vmem:[%s4 + $0x18] sm:$0xff]
  %v265 = vld [vmem:[%s4 + $0x20] sm:$0xff]
  %v266 = vld [vmem:[%s4 + $0x28] sm:$0xff]
  %v267 = vld [vmem:[%s4 + $0x30] sm:$0xff]
  %v268 = vld [vmem:[%s4 + $0x38] sm:$0xff]
  %v269 = vld [vmem:[%s4 + $0x40] sm:$0xff]
  %v270 = vld [vmem:[%s4 + $0x48] sm:$0xff]
  %v271 = vld [vmem:[%s4 + $0x50] sm:$0xff]
  %v272 = vld [vmem:[%s4 + $0x58] sm:$0xff]
  %v273 = vld [vmem:[%s4 + $0x60] sm:$0xff]
  %v274 = vld [vmem:[%s4 + $0x68] sm:$0xff]
  %v275 = vld [vmem:[%s4 + $0x70] sm:$0xff]
  %v276 = vld [vmem:[%s4 + $0x78] sm:$0xff]
  %v277 = vld [vmem:[%s4 + $0x80] sm:$0xff]
  %v278 = vld [vmem:[%s4 + $0x88] sm:$0xff]
  %v279 = vld [vmem:[%s4 + $0x90] sm:$0xff]
  %v280 = vld [vmem:[%s4 + $0x98] sm:$0xff]
  %v281 = vld [vmem:[%s4 + $0xa0] sm:$0xff]
  %v282 = vld [vmem:[%s4 + $0xa8] sm:$0xff]
  %v283 = vld [vmem:[%s4 + $0xb0] sm:$0xff]
  %v284 = vld [vmem:[%s4 + $0xb8] sm:$0xff]
  %v285 = vld [vmem:[%s4 + $0xc0] sm:$0xff]
  %v286 = vld [vmem:[%s4 + $0xc8] sm:$0xff]
  %v287 = vld [vmem:[%s4 + $0xd0] sm:$0xff]
  %v288 = vld [vmem:[%s4 + $0xd8] sm:$0xff]
  %v289 = vld [vmem:[%s4 + $0xe0] sm:$0xff]
  %v290 = vld [vmem:[%s4 + $0xe8] sm:$0xff]
  %v291 = vld [vmem:[%s4 + $0xf0] sm:$0xff]
  %v292 = vld [vmem:[%s4 + $0xf8] sm:$0xff]
  %v293 = vld [vmem:[%s4 + $0x100] sm:$0xff]
  %v294 = vld [vmem:[%s4 + $0x108] sm:$0xff]
  %v295 = vld [vmem:[%s4 + $0x110] sm:$0xff]
  %v296 = vld [vmem:[%s4 + $0x118] sm:$0xff]
  %v297 = vld [vmem:[%s4 + $0x120] sm:$0xff]
  %v298 = vld [vmem:[%s4 + $0x128] sm:$0xff]
  %v299 = vld [vmem:[%s4 + $0x130] sm:$0xff]
  %v300 = vld [vmem:[%s4 + $0x138] sm:$0xff]
  %v301 = vld [vmem:[%s4 + $0x140] sm:$0xff]
  %v302 = vld [vmem:[%s4 + $0x148] sm:$0xff]
  %v303 = vld [vmem:[%s4 + $0x150] sm:$0xff]
  %v304 = vld [vmem:[%s4 + $0x158] sm:$0xff]
  %v305 = vld [vmem:[%s4 + $0x160] sm:$0xff]
  %v306 = vld [vmem:[%s4 + $0x168] sm:$0xff]
  %v307 = vld [vmem:[%s4 + $0x170] sm:$0xff]
  %v308 = vld [vmem:[%s4 + $0x178] sm:$0xff]
  %v309 = vld [vmem:[%s4 + $0x180] sm:$0xff]
  %v310 = vld [vmem:[%s4 + $0x188] sm:$0xff]
  %v311 = vld [vmem:[%s4 + $0x190] sm:$0xff]
  %v312 = vld [vmem:[%s4 + $0x198] sm:$0xff]
  %v313 = vld [vmem:[%s4 + $0x1a0] sm:$0xff]
  %v314 = vld [vmem:[%s4 + $0x1a8] sm:$0xff]
  %v315 = vld [vmem:[%s4 + $0x1b0] sm:$0xff]
  %v316 = vld [vmem:[%s4 + $0x1b8] sm:$0xff]
  %v317 = vld [vmem:[%s4 + $0x1c0] sm:$0xff]
  %v318 = vld [vmem:[%s4 + $0x1c8] sm:$0xff]
  %v319 = vld [vmem:[%s4 + $0x1d0] sm:$0xff]
  %v320 = vld [vmem:[%s4 + $0x1d8] sm:$0xff]
  %v321 = vld [vmem:[%s4 + $0x1e0] sm:$0xff]
  %v322 = vld [vmem:[%s4 + $0x1e8] sm:$0xff]
  %v323 = vld [vmem:[%s4 + $0x1f0] sm:$0xff]
  %v324 = vld [vmem:[%s4 + $0x1f8] sm:$0xff]
  %v325 = vld [vmem:[%s5] sm:$0xf]
  %v327 = vperm.slane %v325, 0
  %v328 = vperm.slane %v325, 1
  %v329 = vperm.slane %v325, 2
  %v330 = vperm.slane %v325, 3
  %v367 = vunpack.c.l.b16 %v229
  %v368 = vunpack.c.h.b16 %v229
  %v369 = vunpack.c.l.b16 %v230
  %v370 = vunpack.c.h.b16 %v230
  %v371 = vunpack.c.l.b16 %v231
  %v372 = vunpack.c.h.b16 %v231
  %v373 = vunpack.c.l.b16 %v232
  %v374 = vunpack.c.h.b16 %v232
  %v375 = vunpack.c.l.b16 %v233
  %v376 = vunpack.c.h.b16 %v233
  %v377 = vunpack.c.l.b16 %v234
  %v378 = vunpack.c.h.b16 %v234
  %v379 = vunpack.c.l.b16 %v235
  %v380 = vunpack.c.h.b16 %v235
  %v381 = vunpack.c.l.b16 %v236
  %v382 = vunpack.c.h.b16 %v236
  %v383 = vunpack.c.l.b16 %v237
  %v384 = vunpack.c.h.b16 %v237
  %v385 = vunpack.c.l.b16 %v238
  %v386 = vunpack.c.h.b16 %v238
  %v387 = vunpack.c.l.b16 %v239
  %v388 = vunpack.c.h.b16 %v239
  %v389 = vunpack.c.l.b16 %v240
  %v390 = vunpack.c.h.b16 %v240
  %v391 = vunpack.c.l.b16 %v241
  %v392 = vunpack.c.h.b16 %v241
  %v393 = vunpack.c.l.b16 %v242
  %v394 = vunpack.c.h.b16 %v242
  %v395 = vunpack.c.l.b16 %v243
  %v396 = vunpack.c.h.b16 %v243
  %v397 = vunpack.c.l.b16 %v244
  %v398 = vunpack.c.h.b16 %v244
  %v399 = vunpack.c.l.b16 %v245
  %v400 = vunpack.c.h.b16 %v245
  %v401 = vunpack.c.l.b16 %v246
  %v402 = vunpack.c.h.b16 %v246
  %v403 = vunpack.c.l.b16 %v247
  %v404 = vunpack.c.h.b16 %v247
  %v405 = vunpack.c.l.b16 %v248
  %v406 = vunpack.c.h.b16 %v248
  %v407 = vunpack.c.l.b16 %v249
  %v408 = vunpack.c.h.b16 %v249
  %v409 = vunpack.c.l.b16 %v250
  %v410 = vunpack.c.h.b16 %v250
  %v411 = vunpack.c.l.b16 %v251
  %v412 = vunpack.c.h.b16 %v251
  %v413 = vunpack.c.l.b16 %v252
  %v414 = vunpack.c.h.b16 %v252
  %v415 = vunpack.c.l.b16 %v253
  %v416 = vunpack.c.h.b16 %v253
  %v417 = vunpack.c.l.b16 %v254
  %v418 = vunpack.c.h.b16 %v254
  %v419 = vunpack.c.l.b16 %v255
  %v420 = vunpack.c.h.b16 %v255
  %v421 = vunpack.c.l.b16 %v256
  %v422 = vunpack.c.h.b16 %v256
  %v423 = vunpack.c.l.b16 %v257
  %v424 = vunpack.c.h.b16 %v257
  %v425 = vunpack.c.l.b16 %v258
  %v426 = vunpack.c.h.b16 %v258
  %v427 = vunpack.c.l.b16 %v259
  %v428 = vunpack.c.h.b16 %v259
  %v429 = vunpack.c.l.b16 %v260
  %v430 = vunpack.c.h.b16 %v260
  %v431 = vpack.c.b16 %v371, %v367
  %v432 = vpack.c.b16 %v372, %v368
  %v433 = vpack.c.b16 %v373, %v369
  %v434 = vpack.c.b16 %v374, %v370
  %v435 = vpack.c.b16 %v379, %v375
  %v436 = vpack.c.b16 %v380, %v376
  %v437 = vpack.c.b16 %v381, %v377
  %v438 = vpack.c.b16 %v382, %v378
  %v439 = vpack.c.b16 %v387, %v383
  %v440 = vpack.c.b16 %v388, %v384
  %v441 = vpack.c.b16 %v389, %v385
  %v442 = vpack.c.b16 %v390, %v386
  %v443 = vpack.c.b16 %v395, %v391
  %v444 = vpack.c.b16 %v396, %v392
  %v445 = vpack.c.b16 %v397, %v393
  %v446 = vpack.c.b16 %v398, %v394
  %v447 = vpack.c.b16 %v403, %v399
  %v448 = vpack.c.b16 %v404, %v400
  %v449 = vpack.c.b16 %v405, %v401
  %v450 = vpack.c.b16 %v406, %v402
  %v451 = vpack.c.b16 %v411, %v407
  %v452 = vpack.c.b16 %v412, %v408
  %v453 = vpack.c.b16 %v413, %v409
  %v454 = vpack.c.b16 %v414, %v410
  %v455 = vpack.c.b16 %v419, %v415
  %v456 = vpack.c.b16 %v420, %v416
  %v457 = vpack.c.b16 %v421, %v417
  %v458 = vpack.c.b16 %v422, %v418
  %v459 = vpack.c.b16 %v427, %v423
  %v460 = vpack.c.b16 %v428, %v424
  %v461 = vpack.c.b16 %v429, %v425
  %v462 = vpack.c.b16 %v430, %v426
  %495 = vmatpush.bf16.msra.mxu0 %v459
  %496 = vmatpush.bf16.msra.mxu0 %v455
  %497 = vmatpush.bf16.msra.mxu0 %v451
  %498 = vmatpush.bf16.msra.mxu0 %v447
  %499 = vmatpush.bf16.msra.mxu0 %v443
  %500 = vmatpush.bf16.msra.mxu0 %v439
  %501 = vmatpush.bf16.msra.mxu0 %v435
  %502 = vmatpush.bf16.msra.mxu0 %v431
  %503 = vmatmul.bf16.gmra.mxu0 0
  %v504 = vpop.f32.mrf.mxu0
  %v505 = vadd.f32 0.0, %v504
  %v506 = vpop.f32.mrf.mxu0
  %507 = vdwg.mxu0
  %508 = vmatpush.bf16.msra.mxu0 %v460
  %509 = vmatpush.bf16.msra.mxu0 %v456
  %510 = vmatpush.bf16.msra.mxu0 %v452
  %511 = vmatpush.bf16.msra.mxu0 %v448
  %512 = vmatpush.bf16.msra.mxu0 %v444
  %513 = vmatpush.bf16.msra.mxu0 %v440
  %514 = vmatpush.bf16.msra.mxu0 %v436
  %515 = vmatpush.bf16.msra.mxu0 %v432
  %516 = vmatmul.bf16.gmra.mxu0 0
  %v517 = vpop.f32.mrf.mxu0
  %v518 = vadd.f32 0.0, %v517
  %v519 = vpop.f32.mrf.mxu0
  %520 = vdwg.mxu0
  %521 = vmatpush.bf16.msra.mxu0 %v461
  %522 = vmatpush.bf16.msra.mxu0 %v457
  %523 = vmatpush.bf16.msra.mxu0 %v453
  %524 = vmatpush.bf16.msra.mxu0 %v449
  %525 = vmatpush.bf16.msra.mxu0 %v445
  %526 = vmatpush.bf16.msra.mxu0 %v441
  %527 = vmatpush.bf16.msra.mxu0 %v437
  %528 = vmatpush.bf16.msra.mxu0 %v433
  %529 = vmatmul.bf16.gmra.mxu0 0
  %v530 = vpop.f32.mrf.mxu0
  %v531 = vadd.f32 0.0, %v530
  %v532 = vpop.f32.mrf.mxu0
  %533 = vdwg.mxu0
  %534 = vmatpush.bf16.msra.mxu0 %v462
  %535 = vmatpush.bf16.msra.mxu0 %v458
  %536 = vmatpush.bf16.msra.mxu0 %v454
  %537 = vmatpush.bf16.msra.mxu0 %v450
  %538 = vmatpush.bf16.msra.mxu0 %v446
  %539 = vmatpush.bf16.msra.mxu0 %v442
  %540 = vmatpush.bf16.msra.mxu0 %v438
  %541 = vmatpush.bf16.msra.mxu0 %v434
  %542 = vmatmul.bf16.gmra.mxu0 0
  %v543 = vpop.f32.mrf.mxu0
  %v544 = vadd.f32 0.0, %v543
  %v545 = vpop.f32.mrf.mxu0
  %546 = vdwg.mxu0
  %v547 = vadd.f32 %v123, %v505
  %v548 = vadd.f32 %v152, %v518
  %v549 = vadd.f32 %v181, %v531
  %v550 = vadd.f32 %v210, %v544
  %v551 = vxor.u32 %v547, 2147483648
  %v552 = vmul.f32 %v551, 1.442695
  %v553 = vpow.pop %v552
  %v554 = vadd.f32 %v553, 1.0
  %v555 = vrcp.pop %v554
  %v556 = vmul.f32 %v554, %v555
  %v557 = vsub.f32 1.0, %v556
  %v558 = vmul.f32 %v555, %v557
  %v559 = vadd.f32 %v555, %v558
  %vm560 = vweird.f32 %v554
  %vm561 = vweird.f32 %v555
  %vm562 = vmor %vm560, %vm561
  %v563 = vsel %vm562, %v555, %v559
  %v564 = vand.u32 2147483647, %v554
  %vm565 = vcmp.eq.f32.partialorder %v564, 8.507059e+37
  %v566 = vand.u32 %v554, 2147483648
  %v567 = vor.u32 1.1754944e-38, %v566
  %v568 = vsel %vm565, %v567, %v563
  %v569 = vmul.f32 1.0, %v568
  %v570 = vxor.u32 %v548, 2147483648
  %v571 = vmul.f32 %v570, 1.442695
  %v572 = vpow.pop %v571
  %v573 = vadd.f32 %v572, 1.0
  %v574 = vrcp.pop %v573
  %v575 = vmul.f32 %v573, %v574
  %v576 = vsub.f32 1.0, %v575
  %v577 = vmul.f32 %v574, %v576
  %v578 = vadd.f32 %v574, %v577
  %vm579 = vweird.f32 %v573
  %vm580 = vweird.f32 %v574
  %vm581 = vmor %vm579, %vm580
  %v582 = vsel %vm581, %v574, %v578
  %v583 = vand.u32 2147483647, %v573
  %vm584 = vcmp.eq.f32.partialorder %v583, 8.507059e+37
  %v585 = vand.u32 %v573, 2147483648
  %v586 = vor.u32 1.1754944e-38, %v585
  %v587 = vsel %vm584, %v586, %v582
  %v588 = vmul.f32 1.0, %v587
  %v589 = vtanh.pop %v549
  %v590 = vxor.u32 %v550, 2147483648
  %v591 = vmul.f32 %v590, 1.442695
  %v592 = vpow.pop %v591
  %v593 = vadd.f32 %v592, 1.0
  %v594 = vrcp.pop %v593
  %v595 = vmul.f32 %v593, %v594
  %v596 = vsub.f32 1.0, %v595
  %v597 = vmul.f32 %v594, %v596
  %v598 = vadd.f32 %v594, %v597
  %vm599 = vweird.f32 %v593
  %vm600 = vweird.f32 %v594
  %vm601 = vmor %vm599, %vm600
  %v602 = vsel %vm601, %v594, %v598
  %v603 = vand.u32 2147483647, %v593
  %vm604 = vcmp.eq.f32.partialorder %v603, 8.507059e+37
  %v605 = vand.u32 %v593, 2147483648
  %v606 = vor.u32 1.1754944e-38, %v605
  %v607 = vsel %vm604, %v606, %v602
  %v608 = vmul.f32 1.0, %v607
  %v609 = vmul.f32 %v588, 0.0
  %v610 = vmul.f32 %v569, %v589
  %v611 = vadd.f32 %v609, %v610
  %v612 = vtanh.pop %v611
  %v613 = vmul.f32 %v608, %v612
  %v614 = vpack.c.bf16 %v613, %v613
  %v679 = vunpack.c.l.b16 %v261
  %v680 = vunpack.c.h.b16 %v261
  %v681 = vunpack.c.l.b16 %v262
  %v682 = vunpack.c.h.b16 %v262
  %v683 = vunpack.c.l.b16 %v263
  %v684 = vunpack.c.h.b16 %v263
  %v685 = vunpack.c.l.b16 %v264
  %v686 = vunpack.c.h.b16 %v264
  %v687 = vunpack.c.l.b16 %v265
  %v688 = vunpack.c.h.b16 %v265
  %v689 = vunpack.c.l.b16 %v266
  %v690 = vunpack.c.h.b16 %v266
  %v691 = vunpack.c.l.b16 %v267
  %v692 = vunpack.c.h.b16 %v267
  %v693 = vunpack.c.l.b16 %v268
  %v694 = vunpack.c.h.b16 %v268
  %v695 = vunpack.c.l.b16 %v269
  %v696 = vunpack.c.h.b16 %v269
  %v697 = vunpack.c.l.b16 %v270
  %v698 = vunpack.c.h.b16 %v270
  %v699 = vunpack.c.l.b16 %v271
  %v700 = vunpack.c.h.b16 %v271
  %v701 = vunpack.c.l.b16 %v272
  %v702 = vunpack.c.h.b16 %v272
  %v703 = vunpack.c.l.b16 %v273
  %v704 = vunpack.c.h.b16 %v273
  %v705 = vunpack.c.l.b16 %v274
  %v706 = vunpack.c.h.b16 %v274
  %v707 = vunpack.c.l.b16 %v275
  %v708 = vunpack.c.h.b16 %v275
  %v709 = vunpack.c.l.b16 %v276
  %v710 = vunpack.c.h.b16 %v276
  %v711 = vunpack.c.l.b16 %v277
  %v712 = vunpack.c.h.b16 %v277
  %v713 = vunpack.c.l.b16 %v278
  %v714 = vunpack.c.h.b16 %v278
  %v715 = vunpack.c.l.b16 %v279
  %v716 = vunpack.c.h.b16 %v279
  %v717 = vunpack.c.l.b16 %v280
  %v718 = vunpack.c.h.b16 %v280
  %v719 = vunpack.c.l.b16 %v281
  %v720 = vunpack.c.h.b16 %v281
  %v721 = vunpack.c.l.b16 %v282
  %v722 = vunpack.c.h.b16 %v282
  %v723 = vunpack.c.l.b16 %v283
  %v724 = vunpack.c.h.b16 %v283
  %v725 = vunpack.c.l.b16 %v284
  %v726 = vunpack.c.h.b16 %v284
  %v727 = vunpack.c.l.b16 %v285
  %v728 = vunpack.c.h.b16 %v285
  %v729 = vunpack.c.l.b16 %v286
  %v730 = vunpack.c.h.b16 %v286
  %v731 = vunpack.c.l.b16 %v287
  %v732 = vunpack.c.h.b16 %v287
  %v733 = vunpack.c.l.b16 %v288
  %v734 = vunpack.c.h.b16 %v288
  %v735 = vunpack.c.l.b16 %v289
  %v736 = vunpack.c.h.b16 %v289
  %v737 = vunpack.c.l.b16 %v290
  %v738 = vunpack.c.h.b16 %v290
  %v739 = vunpack.c.l.b16 %v291
  %v740 = vunpack.c.h.b16 %v291
  %v741 = vunpack.c.l.b16 %v292
  %v742 = vunpack.c.h.b16 %v292
  %v743 = vunpack.c.l.b16 %v293
  %v744 = vunpack.c.h.b16 %v293
  %v745 = vunpack.c.l.b16 %v294
  %v746 = vunpack.c.h.b16 %v294
  %v747 = vunpack.c.l.b16 %v295
  %v748 = vunpack.c.h.b16 %v295
  %v749 = vunpack.c.l.b16 %v296
  %v750 = vunpack.c.h.b16 %v296
  %v751 = vunpack.c.l.b16 %v297
  %v752 = vunpack.c.h.b16 %v297
  %v753 = vunpack.c.l.b16 %v298
  %v754 = vunpack.c.h.b16 %v298
  %v755 = vunpack.c.l.b16 %v299
  %v756 = vunpack.c.h.b16 %v299
  %v757 = vunpack.c.l.b16 %v300
  %v758 = vunpack.c.h.b16 %v300
  %v759 = vunpack.c.l.b16 %v301
  %v760 = vunpack.c.h.b16 %v301
  %v761 = vunpack.c.l.b16 %v302
  %v762 = vunpack.c.h.b16 %v302
  %v763 = vunpack.c.l.b16 %v303
  %v764 = vunpack.c.h.b16 %v303
  %v765 = vunpack.c.l.b16 %v304
  %v766 = vunpack.c.h.b16 %v304
  %v767 = vunpack.c.l.b16 %v305
  %v768 = vunpack.c.h.b16 %v305
  %v769 = vunpack.c.l.b16 %v306
  %v770 = vunpack.c.h.b16 %v306
  %v771 = vunpack.c.l.b16 %v307
  %v772 = vunpack.c.h.b16 %v307
  %v773 = vunpack.c.l.b16 %v308
  %v774 = vunpack.c.h.b16 %v308
  %v775 = vunpack.c.l.b16 %v309
  %v776 = vunpack.c.h.b16 %v309
  %v777 = vunpack.c.l.b16 %v310
  %v778 = vunpack.c.h.b16 %v310
  %v779 = vunpack.c.l.b16 %v311
  %v780 = vunpack.c.h.b16 %v311
  %v781 = vunpack.c.l.b16 %v312
  %v782 = vunpack.c.h.b16 %v312
  %v783 = vunpack.c.l.b16 %v313
  %v784 = vunpack.c.h.b16 %v313
  %v785 = vunpack.c.l.b16 %v314
  %v786 = vunpack.c.h.b16 %v314
  %v787 = vunpack.c.l.b16 %v315
  %v788 = vunpack.c.h.b16 %v315
  %v789 = vunpack.c.l.b16 %v316
  %v790 = vunpack.c.h.b16 %v316
  %v791 = vunpack.c.l.b16 %v317
  %v792 = vunpack.c.h.b16 %v317
  %v793 = vunpack.c.l.b16 %v318
  %v794 = vunpack.c.h.b16 %v318
  %v795 = vunpack.c.l.b16 %v319
  %v796 = vunpack.c.h.b16 %v319
  %v797 = vunpack.c.l.b16 %v320
  %v798 = vunpack.c.h.b16 %v320
  %v799 = vunpack.c.l.b16 %v321
  %v800 = vunpack.c.h.b16 %v321
  %v801 = vunpack.c.l.b16 %v322
  %v802 = vunpack.c.h.b16 %v322
  %v803 = vunpack.c.l.b16 %v323
  %v804 = vunpack.c.h.b16 %v323
  %v805 = vunpack.c.l.b16 %v324
  %v806 = vunpack.c.h.b16 %v324
  %v807 = vpack.c.b16 %v683, %v679
  %v808 = vpack.c.b16 %v684, %v680
  %v809 = vpack.c.b16 %v685, %v681
  %v810 = vpack.c.b16 %v686, %v682
  %v811 = vpack.c.b16 %v691, %v687
  %v812 = vpack.c.b16 %v692, %v688
  %v813 = vpack.c.b16 %v693, %v689
  %v814 = vpack.c.b16 %v694, %v690
  %v815 = vpack.c.b16 %v699, %v695
  %v816 = vpack.c.b16 %v700, %v696
  %v817 = vpack.c.b16 %v701, %v697
  %v818 = vpack.c.b16 %v702, %v698
  %v819 = vpack.c.b16 %v707, %v703
  %v820 = vpack.c.b16 %v708, %v704
  %v821 = vpack.c.b16 %v709, %v705
  %v822 = vpack.c.b16 %v710, %v706
  %v823 = vpack.c.b16 %v715, %v711
  %v824 = vpack.c.b16 %v716, %v712
  %v825 = vpack.c.b16 %v717, %v713
  %v826 = vpack.c.b16 %v718, %v714
  %v827 = vpack.c.b16 %v723, %v719
  %v828 = vpack.c.b16 %v724, %v720
  %v829 = vpack.c.b16 %v725, %v721
  %v830 = vpack.c.b16 %v726, %v722
  %v831 = vpack.c.b16 %v731, %v727
  %v832 = vpack.c.b16 %v732, %v728
  %v833 = vpack.c.b16 %v733, %v729
  %v834 = vpack.c.b16 %v734, %v730
  %v835 = vpack.c.b16 %v739, %v735
  %v836 = vpack.c.b16 %v740, %v736
  %v837 = vpack.c.b16 %v741, %v737
  %v838 = vpack.c.b16 %v742, %v738
  %v839 = vpack.c.b16 %v747, %v743
  %v840 = vpack.c.b16 %v748, %v744
  %v841 = vpack.c.b16 %v749, %v745
  %v842 = vpack.c.b16 %v750, %v746
  %v843 = vpack.c.b16 %v755, %v751
  %v844 = vpack.c.b16 %v756, %v752
  %v845 = vpack.c.b16 %v757, %v753
  %v846 = vpack.c.b16 %v758, %v754
  %v847 = vpack.c.b16 %v763, %v759
  %v848 = vpack.c.b16 %v764, %v760
  %v849 = vpack.c.b16 %v765, %v761
  %v850 = vpack.c.b16 %v766, %v762
  %v851 = vpack.c.b16 %v771, %v767
  %v852 = vpack.c.b16 %v772, %v768
  %v853 = vpack.c.b16 %v773, %v769
  %v854 = vpack.c.b16 %v774, %v770
  %v855 = vpack.c.b16 %v779, %v775
  %v856 = vpack.c.b16 %v780, %v776
  %v857 = vpack.c.b16 %v781, %v777
  %v858 = vpack.c.b16 %v782, %v778
  %v859 = vpack.c.b16 %v787, %v783
  %v860 = vpack.c.b16 %v788, %v784
  %v861 = vpack.c.b16 %v789, %v785
  %v862 = vpack.c.b16 %v790, %v786
  %v863 = vpack.c.b16 %v795, %v791
  %v864 = vpack.c.b16 %v796, %v792
  %v865 = vpack.c.b16 %v797, %v793
  %v866 = vpack.c.b16 %v798, %v794
  %v867 = vpack.c.b16 %v803, %v799
  %v868 = vpack.c.b16 %v804, %v800
  %v869 = vpack.c.b16 %v805, %v801
  %v870 = vpack.c.b16 %v806, %v802
  %935 = vmatpush.bf16.msra.mxu0 %v835
  %936 = vmatpush.bf16.msra.mxu0 %v831
  %937 = vmatpush.bf16.msra.mxu0 %v827
  %938 = vmatpush.bf16.msra.mxu0 %v823
  %939 = vmatpush.bf16.msra.mxu0 %v819
  %940 = vmatpush.bf16.msra.mxu0 %v815
  %941 = vmatpush.bf16.msra.mxu0 %v811
  %942 = vmatpush.bf16.msra.mxu0 %v807
  %943 = vmatmul.bf16.gmra.mxu0 %v614
  %v944 = vpop.f32.mrf.mxu0
  %v945 = vadd.f32 %v327, %v944
  %v946 = vpop.f32.mrf.mxu0
  %947 = vdwg.mxu0
  %948 = vmatpush.bf16.msra.mxu0 %v867
  %949 = vmatpush.bf16.msra.mxu0 %v863
  %950 = vmatpush.bf16.msra.mxu0 %v859
  %951 = vmatpush.bf16.msra.mxu0 %v855
  %952 = vmatpush.bf16.msra.mxu0 %v851
  %953 = vmatpush.bf16.msra.mxu0 %v847
  %954 = vmatpush.bf16.msra.mxu0 %v843
  %955 = vmatpush.bf16.msra.mxu0 %v839
  %956 = vmatmul.bf16.gmra.mxu0 0
  %v957 = vpop.f32.mrf.mxu0
  %v958 = vadd.f32 %v945, %v957
  %v959 = vpop.f32.mrf.mxu0
  %960 = vdwg.mxu0
  %961 = vmatpush.bf16.msra.mxu0 %v836
  %962 = vmatpush.bf16.msra.mxu0 %v832
  %963 = vmatpush.bf16.msra.mxu0 %v828
  %964 = vmatpush.bf16.msra.mxu0 %v824
  %965 = vmatpush.bf16.msra.mxu0 %v820
  %966 = vmatpush.bf16.msra.mxu0 %v816
  %967 = vmatpush.bf16.msra.mxu0 %v812
  %968 = vmatpush.bf16.msra.mxu0 %v808
  %969 = vmatmul.bf16.gmra.mxu0 %v614
  %v970 = vpop.f32.mrf.mxu0
  %v971 = vadd.f32 %v328, %v970
  %v972 = vpop.f32.mrf.mxu0
  %973 = vdwg.mxu0
  %974 = vmatpush.bf16.msra.mxu0 %v868
  %975 = vmatpush.bf16.msra.mxu0 %v864
  %976 = vmatpush.bf16.msra.mxu0 %v860
  %977 = vmatpush.bf16.msra.mxu0 %v856
  %978 = vmatpush.bf16.msra.mxu0 %v852
  %979 = vmatpush.bf16.msra.mxu0 %v848
  %980 = vmatpush.bf16.msra.mxu0 %v844
  %981 = vmatpush.bf16.msra.mxu0 %v840
  %982 = vmatmul.bf16.gmra.mxu0 0
  %v983 = vpop.f32.mrf.mxu0
  %v984 = vadd.f32 %v971, %v983
  %v985 = vpop.f32.mrf.mxu0
  %986 = vdwg.mxu0
  %987 = vmatpush.bf16.msra.mxu0 %v837
  %988 = vmatpush.bf16.msra.mxu0 %v833
  %989 = vmatpush.bf16.msra.mxu0 %v829
  %990 = vmatpush.bf16.msra.mxu0 %v825
  %991 = vmatpush.bf16.msra.mxu0 %v821
  %992 = vmatpush.bf16.msra.mxu0 %v817
  %993 = vmatpush.bf16.msra.mxu0 %v813
  %994 = vmatpush.bf16.msra.mxu0 %v809
  %995 = vmatmul.bf16.gmra.mxu0 %v614
  %v996 = vpop.f32.mrf.mxu0
  %v997 = vadd.f32 %v329, %v996
  %v998 = vpop.f32.mrf.mxu0
  %999 = vdwg.mxu0
  %1000 = vmatpush.bf16.msra.mxu0 %v869
  %1001 = vmatpush.bf16.msra.mxu0 %v865
  %1002 = vmatpush.bf16.msra.mxu0 %v861
  %1003 = vmatpush.bf16.msra.mxu0 %v857
  %1004 = vmatpush.bf16.msra.mxu0 %v853
  %1005 = vmatpush.bf16.msra.mxu0 %v849
  %1006 = vmatpush.bf16.msra.mxu0 %v845
  %1007 = vmatpush.bf16.msra.mxu0 %v841
  %1008 = vmatmul.bf16.gmra.mxu0 0
  %v1009 = vpop.f32.mrf.mxu0
  %v1010 = vadd.f32 %v997, %v1009
  %v1011 = vpop.f32.mrf.mxu0
  %1012 = vdwg.mxu0
  %1013 = vmatpush.bf16.msra.mxu0 %v838
  %1014 = vmatpush.bf16.msra.mxu0 %v834
  %1015 = vmatpush.bf16.msra.mxu0 %v830
  %1016 = vmatpush.bf16.msra.mxu0 %v826
  %1017 = vmatpush.bf16.msra.mxu0 %v822
  %1018 = vmatpush.bf16.msra.mxu0 %v818
  %1019 = vmatpush.bf16.msra.mxu0 %v814
  %1020 = vmatpush.bf16.msra.mxu0 %v810
  %1021 = vmatmul.bf16.gmra.mxu0 %v614
  %v1022 = vpop.f32.mrf.mxu0
  %v1023 = vadd.f32 %v330, %v1022
  %v1024 = vpop.f32.mrf.mxu0
  %1025 = vdwg.mxu0
  %1026 = vmatpush.bf16.msra.mxu0 %v870
  %1027 = vmatpush.bf16.msra.mxu0 %v866
  %1028 = vmatpush.bf16.msra.mxu0 %v862
  %1029 = vmatpush.bf16.msra.mxu0 %v858
  %1030 = vmatpush.bf16.msra.mxu0 %v854
  %1031 = vmatpush.bf16.msra.mxu0 %v850
  %1032 = vmatpush.bf16.msra.mxu0 %v846
  %1033 = vmatpush.bf16.msra.mxu0 %v842
  %1034 = vmatmul.bf16.gmra.mxu0 0
  %v1035 = vpop.f32.mrf.mxu0
  %v1036 = vadd.f32 %v1023, %v1035
  %v1037 = vpop.f32.mrf.mxu0
  %1038 = vdwg.mxu0
  %v1039 = vxor.u32 %v958, 2147483648
  %v1040 = vmul.f32 %v1039, 1.442695
  %v1041 = vpow.pop %v1040
  %v1042 = vadd.f32 %v1041, 1.0
  %v1043 = vrcp.pop %v1042
  %v1044 = vmul.f32 %v1042, %v1043
  %v1045 = vsub.f32 1.0, %v1044
  %v1046 = vmul.f32 %v1043, %v1045
  %v1047 = vadd.f32 %v1043, %v1046
  %vm1048 = vweird.f32 %v1042
  %vm1049 = vweird.f32 %v1043
  %vm1050 = vmor %vm1048, %vm1049
  %v1051 = vsel %vm1050, %v1043, %v1047
  %v1052 = vand.u32 2147483647, %v1042
  %vm1053 = vcmp.eq.f32.partialorder %v1052, 8.507059e+37
  %v1054 = vand.u32 %v1042, 2147483648
  %v1055 = vor.u32 1.1754944e-38, %v1054
  %v1056 = vsel %vm1053, %v1055, %v1051
  %v1057 = vmul.f32 1.0, %v1056
  %v1058 = vxor.u32 %v984, 2147483648
  %v1059 = vmul.f32 %v1058, 1.442695
  %v1060 = vpow.pop %v1059
  %v1061 = vadd.f32 %v1060, 1.0
  %v1062 = vrcp.pop %v1061
  %v1063 = vmul.f32 %v1061, %v1062
  %v1064 = vsub.f32 1.0, %v1063
  %v1065 = vmul.f32 %v1062, %v1064
  %v1066 = vadd.f32 %v1062, %v1065
  %vm1067 = vweird.f32 %v1061
  %vm1068 = vweird.f32 %v1062
  %vm1069 = vmor %vm1067, %vm1068
  %v1070 = vsel %vm1069, %v1062, %v1066
  %v1071 = vand.u32 2147483647, %v1061
  %vm1072 = vcmp.eq.f32.partialorder %v1071, 8.507059e+37
  %v1073 = vand.u32 %v1061, 2147483648
  %v1074 = vor.u32 1.1754944e-38, %v1073
  %v1075 = vsel %vm1072, %v1074, %v1070
  %v1076 = vmul.f32 1.0, %v1075
  %v1077 = vtanh.pop %v1010
  %v1078 = vxor.u32 %v1036, 2147483648
  %v1079 = vmul.f32 %v1078, 1.442695
  %v1080 = vpow.pop %v1079
  %v1081 = vadd.f32 %v1080, 1.0
  %v1082 = vrcp.pop %v1081
  %v1083 = vmul.f32 %v1081, %v1082
  %v1084 = vsub.f32 1.0, %v1083
  %v1085 = vmul.f32 %v1082, %v1084
  %v1086 = vadd.f32 %v1082, %v1085
  %vm1087 = vweird.f32 %v1081
  %vm1088 = vweird.f32 %v1082
  %vm1089 = vmor %vm1087, %vm1088
  %v1090 = vsel %vm1089, %v1082, %v1086
  %v1091 = vand.u32 2147483647, %v1081
  %vm1092 = vcmp.eq.f32.partialorder %v1091, 8.507059e+37
  %v1093 = vand.u32 %v1081, 2147483648
  %v1094 = vor.u32 1.1754944e-38, %v1093
  %v1095 = vsel %vm1092, %v1094, %v1090
  %v1096 = vmul.f32 1.0, %v1095
  %v1097 = vmul.f32 %v1076, 0.0
  %v1098 = vmul.f32 %v1057, %v1077
  %v1099 = vadd.f32 %v1097, %v1098
  %v1100 = vtanh.pop %v1099
  %v1101 = vmul.f32 %v1096, %v1100
  %v1102 = vpack.c.bf16 %v1101, %v1101
  %1103 = vmatpush.bf16.msra.mxu0 %v459
  %1104 = vmatpush.bf16.msra.mxu0 %v455
  %1105 = vmatpush.bf16.msra.mxu0 %v451
  %1106 = vmatpush.bf16.msra.mxu0 %v447
  %1107 = vmatpush.bf16.msra.mxu0 %v443
  %1108 = vmatpush.bf16.msra.mxu0 %v439
  %1109 = vmatpush.bf16.msra.mxu0 %v435
  %1110 = vmatpush.bf16.msra.mxu0 %v431
  %1111 = vmatmul.bf16.gmra.mxu0 %v614
  %v1112 = vpop.f32.mrf.mxu0
  %v1113 = vadd.f32 0.0, %v1112
  %v1114 = vpop.f32.mrf.mxu0
  %1115 = vdwg.mxu0
  %1116 = vmatpush.bf16.msra.mxu0 %v460
  %1117 = vmatpush.bf16.msra.mxu0 %v456
  %1118 = vmatpush.bf16.msra.mxu0 %v452
  %1119 = vmatpush.bf16.msra.mxu0 %v448
  %1120 = vmatpush.bf16.msra.mxu0 %v444
  %1121 = vmatpush.bf16.msra.mxu0 %v440
  %1122 = vmatpush.bf16.msra.mxu0 %v436
  %1123 = vmatpush.bf16.msra.mxu0 %v432
  %1124 = vmatmul.bf16.gmra.mxu0 %v614
  %v1125 = vpop.f32.mrf.mxu0
  %v1126 = vadd.f32 0.0, %v1125
  %v1127 = vpop.f32.mrf.mxu0
  %1128 = vdwg.mxu0
  %1129 = vmatpush.bf16.msra.mxu0 %v461
  %1130 = vmatpush.bf16.msra.mxu0 %v457
  %1131 = vmatpush.bf16.msra.mxu0 %v453
  %1132 = vmatpush.bf16.msra.mxu0 %v449
  %1133 = vmatpush.bf16.msra.mxu0 %v445
  %1134 = vmatpush.bf16.msra.mxu0 %v441
  %1135 = vmatpush.bf16.msra.mxu0 %v437
  %1136 = vmatpush.bf16.msra.mxu0 %v433
  %1137 = vmatmul.bf16.gmra.mxu0 %v614
  %v1138 = vpop.f32.mrf.mxu0
  %v1139 = vadd.f32 0.0, %v1138
  %v1140 = vpop.f32.mrf.mxu0
  %1141 = vdwg.mxu0
  %1142 = vmatpush.bf16.msra.mxu0 %v462
  %1143 = vmatpush.bf16.msra.mxu0 %v458
  %1144 = vmatpush.bf16.msra.mxu0 %v454
  %1145 = vmatpush.bf16.msra.mxu0 %v450
  %1146 = vmatpush.bf16.msra.mxu0 %v446
  %1147 = vmatpush.bf16.msra.mxu0 %v442
  %1148 = vmatpush.bf16.msra.mxu0 %v438
  %1149 = vmatpush.bf16.msra.mxu0 %v434
  %1150 = vmatmul.bf16.gmra.mxu0 %v614
  %v1151 = vpop.f32.mrf.mxu0
  %v1152 = vadd.f32 0.0, %v1151
  %v1153 = vpop.f32.mrf.mxu0
  %1154 = vdwg.mxu0
  %v1155 = vadd.f32 %v125, %v1113
  %v1156 = vadd.f32 %v154, %v1126
  %v1157 = vadd.f32 %v183, %v1139
  %v1158 = vadd.f32 %v212, %v1152
  %v1159 = vxor.u32 %v1155, 2147483648
  %v1160 = vmul.f32 %v1159, 1.442695
  %v1161 = vpow.pop %v1160
  %v1162 = vadd.f32 %v1161, 1.0
  %v1163 = vrcp.pop %v1162
  %v1164 = vmul.f32 %v1162, %v1163
  %v1165 = vsub.f32 1.0, %v1164
  %v1166 = vmul.f32 %v1163, %v1165
  %v1167 = vadd.f32 %v1163, %v1166
  %vm1168 = vweird.f32 %v1162
  %vm1169 = vweird.f32 %v1163
  %vm1170 = vmor %vm1168, %vm1169
  %v1171 = vsel %vm1170, %v1163, %v1167
  %v1172 = vand.u32 2147483647, %v1162
  %vm1173 = vcmp.eq.f32.partialorder %v1172, 8.507059e+37
  %v1174 = vand.u32 %v1162, 2147483648
  %v1175 = vor.u32 1.1754944e-38, %v1174
  %v1176 = vsel %vm1173, %v1175, %v1171
  %v1177 = vmul.f32 1.0, %v1176
  %v1178 = vxor.u32 %v1156, 2147483648
  %v1179 = vmul.f32 %v1178, 1.442695
  %v1180 = vpow.pop %v1179
  %v1181 = vadd.f32 %v1180, 1.0
  %v1182 = vrcp.pop %v1181
  %v1183 = vmul.f32 %v1181, %v1182
  %v1184 = vsub.f32 1.0, %v1183
  %v1185 = vmul.f32 %v1182, %v1184
  %v1186 = vadd.f32 %v1182, %v1185
  %vm1187 = vweird.f32 %v1181
  %vm1188 = vweird.f32 %v1182
  %vm1189 = vmor %vm1187, %vm1188
  %v1190 = vsel %vm1189, %v1182, %v1186
  %v1191 = vand.u32 2147483647, %v1181
  %vm1192 = vcmp.eq.f32.partialorder %v1191, 8.507059e+37
  %v1193 = vand.u32 %v1181, 2147483648
  %v1194 = vor.u32 1.1754944e-38, %v1193
  %v1195 = vsel %vm1192, %v1194, %v1190
  %v1196 = vmul.f32 1.0, %v1195
  %v1197 = vtanh.pop %v1157
  %v1198 = vxor.u32 %v1158, 2147483648
  %v1199 = vmul.f32 %v1198, 1.442695
  %v1200 = vpow.pop %v1199
  %v1201 = vadd.f32 %v1200, 1.0
  %v1202 = vrcp.pop %v1201
  %v1203 = vmul.f32 %v1201, %v1202
  %v1204 = vsub.f32 1.0, %v1203
  %v1205 = vmul.f32 %v1202, %v1204
  %v1206 = vadd.f32 %v1202, %v1205
  %vm1207 = vweird.f32 %v1201
  %vm1208 = vweird.f32 %v1202
  %vm1209 = vmor %vm1207, %vm1208
  %v1210 = vsel %vm1209, %v1202, %v1206
  %v1211 = vand.u32 2147483647, %v1201
  %vm1212 = vcmp.eq.f32.partialorder %v1211, 8.507059e+37
  %v1213 = vand.u32 %v1201, 2147483648
  %v1214 = vor.u32 1.1754944e-38, %v1213
  %v1215 = vsel %vm1212, %v1214, %v1210
  %v1216 = vmul.f32 1.0, %v1215
  %v1217 = vmul.f32 %v1196, %v611
  %v1218 = vmul.f32 %v1177, %v1197
  %v1219 = vadd.f32 %v1217, %v1218
  %v1220 = vtanh.pop %v1219
  %v1221 = vmul.f32 %v1216, %v1220
  %v1222 = vpack.c.bf16 %v1221, %v1221
  %1223 = vmatpush.bf16.msra.mxu0 %v835
  %1224 = vmatpush.bf16.msra.mxu0 %v831
  %1225 = vmatpush.bf16.msra.mxu0 %v827
  %1226 = vmatpush.bf16.msra.mxu0 %v823
  %1227 = vmatpush.bf16.msra.mxu0 %v819
  %1228 = vmatpush.bf16.msra.mxu0 %v815
  %1229 = vmatpush.bf16.msra.mxu0 %v811
  %1230 = vmatpush.bf16.msra.mxu0 %v807
  %1231 = vmatmul.bf16.gmra.mxu0 %v1222
  %v1232 = vpop.f32.mrf.mxu0
  %v1233 = vadd.f32 %v327, %v1232
  %v1234 = vpop.f32.mrf.mxu0
  %1235 = vdwg.mxu0
  %1236 = vmatpush.bf16.msra.mxu0 %v867
  %1237 = vmatpush.bf16.msra.mxu0 %v863
  %1238 = vmatpush.bf16.msra.mxu0 %v859
  %1239 = vmatpush.bf16.msra.mxu0 %v855
  %1240 = vmatpush.bf16.msra.mxu0 %v851
  %1241 = vmatpush.bf16.msra.mxu0 %v847
  %1242 = vmatpush.bf16.msra.mxu0 %v843
  %1243 = vmatpush.bf16.msra.mxu0 %v839
  %1244 = vmatmul.bf16.gmra.mxu0 %v1102
  %v1245 = vpop.f32.mrf.mxu0
  %v1246 = vadd.f32 %v1233, %v1245
  %v1247 = vpop.f32.mrf.mxu0
  %1248 = vdwg.mxu0
  %1249 = vmatpush.bf16.msra.mxu0 %v836
  %1250 = vmatpush.bf16.msra.mxu0 %v832
  %1251 = vmatpush.bf16.msra.mxu0 %v828
  %1252 = vmatpush.bf16.msra.mxu0 %v824
  %1253 = vmatpush.bf16.msra.mxu0 %v820
  %1254 = vmatpush.bf16.msra.mxu0 %v816
  %1255 = vmatpush.bf16.msra.mxu0 %v812
  %1256 = vmatpush.bf16.msra.mxu0 %v808
  %1257 = vmatmul.bf16.gmra.mxu0 %v1222
  %v1258 = vpop.f32.mrf.mxu0
  %v1259 = vadd.f32 %v328, %v1258
  %v1260 = vpop.f32.mrf.mxu0
  %1261 = vdwg.mxu0
  %1262 = vmatpush.bf16.msra.mxu0 %v868
  %1263 = vmatpush.bf16.msra.mxu0 %v864
  %1264 = vmatpush.bf16.msra.mxu0 %v860
  %1265 = vmatpush.bf16.msra.mxu0 %v856
  %1266 = vmatpush.bf16.msra.mxu0 %v852
  %1267 = vmatpush.bf16.msra.mxu0 %v848
  %1268 = vmatpush.bf16.msra.mxu0 %v844
  %1269 = vmatpush.bf16.msra.mxu0 %v840
  %1270 = vmatmul.bf16.gmra.mxu0 %v1102
  %v1271 = vpop.f32.mrf.mxu0
  %v1272 = vadd.f32 %v1259, %v1271
  %v1273 = vpop.f32.mrf.mxu0
  %1274 = vdwg.mxu0
  %1275 = vmatpush.bf16.msra.mxu0 %v837
  %1276 = vmatpush.bf16.msra.mxu0 %v833
  %1277 = vmatpush.bf16.msra.mxu0 %v829
  %1278 = vmatpush.bf16.msra.mxu0 %v825
  %1279 = vmatpush.bf16.msra.mxu0 %v821
  %1280 = vmatpush.bf16.msra.mxu0 %v817
  %1281 = vmatpush.bf16.msra.mxu0 %v813
  %1282 = vmatpush.bf16.msra.mxu0 %v809
  %1283 = vmatmul.bf16.gmra.mxu0 %v1222
  %v1284 = vpop.f32.mrf.mxu0
  %v1285 = vadd.f32 %v329, %v1284
  %v1286 = vpop.f32.mrf.mxu0
  %1287 = vdwg.mxu0
  %1288 = vmatpush.bf16.msra.mxu0 %v869
  %1289 = vmatpush.bf16.msra.mxu0 %v865
  %1290 = vmatpush.bf16.msra.mxu0 %v861
  %1291 = vmatpush.bf16.msra.mxu0 %v857
  %1292 = vmatpush.bf16.msra.mxu0 %v853
  %1293 = vmatpush.bf16.msra.mxu0 %v849
  %1294 = vmatpush.bf16.msra.mxu0 %v845
  %1295 = vmatpush.bf16.msra.mxu0 %v841
  %1296 = vmatmul.bf16.gmra.mxu0 %v1102
  %v1297 = vpop.f32.mrf.mxu0
  %v1298 = vadd.f32 %v1285, %v1297
  %v1299 = vpop.f32.mrf.mxu0
  %1300 = vdwg.mxu0
  %1301 = vmatpush.bf16.msra.mxu0 %v838
  %1302 = vmatpush.bf16.msra.mxu0 %v834
  %1303 = vmatpush.bf16.msra.mxu0 %v830
  %1304 = vmatpush.bf16.msra.mxu0 %v826
  %1305 = vmatpush.bf16.msra.mxu0 %v822
  %1306 = vmatpush.bf16.msra.mxu0 %v818
  %1307 = vmatpush.bf16.msra.mxu0 %v814
  %1308 = vmatpush.bf16.msra.mxu0 %v810
  %1309 = vmatmul.bf16.gmra.mxu0 %v1222
  %v1310 = vpop.f32.mrf.mxu0
  %v1311 = vadd.f32 %v330, %v1310
  %v1312 = vpop.f32.mrf.mxu0
  %1313 = vdwg.mxu0
  %1314 = vmatpush.bf16.msra.mxu0 %v870
  %1315 = vmatpush.bf16.msra.mxu0 %v866
  %1316 = vmatpush.bf16.msra.mxu0 %v862
  %1317 = vmatpush.bf16.msra.mxu0 %v858
  %1318 = vmatpush.bf16.msra.mxu0 %v854
  %1319 = vmatpush.bf16.msra.mxu0 %v850
  %1320 = vmatpush.bf16.msra.mxu0 %v846
  %1321 = vmatpush.bf16.msra.mxu0 %v842
  %1322 = vmatmul.bf16.gmra.mxu0 %v1102
  %v1323 = vpop.f32.mrf.mxu0
  %v1324 = vadd.f32 %v1311, %v1323
  %v1325 = vpop.f32.mrf.mxu0
  %1326 = vdwg.mxu0
  %v1327 = vxor.u32 %v1246, 2147483648
  %v1328 = vmul.f32 %v1327, 1.442695
  %v1329 = vpow.pop %v1328
  %v1330 = vadd.f32 %v1329, 1.0
  %v1331 = vrcp.pop %v1330
  %v1332 = vmul.f32 %v1330, %v1331
  %v1333 = vsub.f32 1.0, %v1332
  %v1334 = vmul.f32 %v1331, %v1333
  %v1335 = vadd.f32 %v1331, %v1334
  %vm1336 = vweird.f32 %v1330
  %vm1337 = vweird.f32 %v1331
  %vm1338 = vmor %vm1336, %vm1337
  %v1339 = vsel %vm1338, %v1331, %v1335
  %v1340 = vand.u32 2147483647, %v1330
  %vm1341 = vcmp.eq.f32.partialorder %v1340, 8.507059e+37
  %v1342 = vand.u32 %v1330, 2147483648
  %v1343 = vor.u32 1.1754944e-38, %v1342
  %v1344 = vsel %vm1341, %v1343, %v1339
  %v1345 = vmul.f32 1.0, %v1344
  %v1346 = vxor.u32 %v1272, 2147483648
  %v1347 = vmul.f32 %v1346, 1.442695
  %v1348 = vpow.pop %v1347
  %v1349 = vadd.f32 %v1348, 1.0
  %v1350 = vrcp.pop %v1349
  %v1351 = vmul.f32 %v1349, %v1350
  %v1352 = vsub.f32 1.0, %v1351
  %v1353 = vmul.f32 %v1350, %v1352
  %v1354 = vadd.f32 %v1350, %v1353
  %vm1355 = vweird.f32 %v1349
  %vm1356 = vweird.f32 %v1350
  %vm1357 = vmor %vm1355, %vm1356
  %v1358 = vsel %vm1357, %v1350, %v1354
  %v1359 = vand.u32 2147483647, %v1349
  %vm1360 = vcmp.eq.f32.partialorder %v1359, 8.507059e+37
  %v1361 = vand.u32 %v1349, 2147483648
  %v1362 = vor.u32 1.1754944e-38, %v1361
  %v1363 = vsel %vm1360, %v1362, %v1358
  %v1364 = vmul.f32 1.0, %v1363
  %v1365 = vtanh.pop %v1298
  %v1366 = vxor.u32 %v1324, 2147483648
  %v1367 = vmul.f32 %v1366, 1.442695
  %v1368 = vpow.pop %v1367
  %v1369 = vadd.f32 %v1368, 1.0
  %v1370 = vrcp.pop %v1369
  %v1371 = vmul.f32 %v1369, %v1370
  %v1372 = vsub.f32 1.0, %v1371
  %v1373 = vmul.f32 %v1370, %v1372
  %v1374 = vadd.f32 %v1370, %v1373
  %vm1375 = vweird.f32 %v1369
  %vm1376 = vweird.f32 %v1370
  %vm1377 = vmor %vm1375, %vm1376
  %v1378 = vsel %vm1377, %v1370, %v1374
  %v1379 = vand.u32 2147483647, %v1369
  %vm1380 = vcmp.eq.f32.partialorder %v1379, 8.507059e+37
  %v1381 = vand.u32 %v1369, 2147483648
  %v1382 = vor.u32 1.1754944e-38, %v1381
  %v1383 = vsel %vm1380, %v1382, %v1378
  %v1384 = vmul.f32 1.0, %v1383
  %v1385 = vmul.f32 %v1364, %v1099
  %v1386 = vmul.f32 %v1345, %v1365
  %v1387 = vadd.f32 %v1385, %v1386
  %v1388 = vtanh.pop %v1387
  %v1389 = vmul.f32 %v1384, %v1388
  %v1390 = vpack.c.bf16 %v1389, %v1389
  %1391 = vmatpush.bf16.msra.mxu0 %v459
  %1392 = vmatpush.bf16.msra.mxu0 %v455
  %1393 = vmatpush.bf16.msra.mxu0 %v451
  %1394 = vmatpush.bf16.msra.mxu0 %v447
  %1395 = vmatpush.bf16.msra.mxu0 %v443
  %1396 = vmatpush.bf16.msra.mxu0 %v439
  %1397 = vmatpush.bf16.msra.mxu0 %v435
  %1398 = vmatpush.bf16.msra.mxu0 %v431
  %1399 = vmatmul.bf16.gmra.mxu0 %v1222
  %v1400 = vpop.f32.mrf.mxu0
  %v1401 = vadd.f32 0.0, %v1400
  %v1402 = vpop.f32.mrf.mxu0
  %1403 = vdwg.mxu0
  %1404 = vmatpush.bf16.msra.mxu0 %v460
  %1405 = vmatpush.bf16.msra.mxu0 %v456
  %1406 = vmatpush.bf16.msra.mxu0 %v452
  %1407 = vmatpush.bf16.msra.mxu0 %v448
  %1408 = vmatpush.bf16.msra.mxu0 %v444
  %1409 = vmatpush.bf16.msra.mxu0 %v440
  %1410 = vmatpush.bf16.msra.mxu0 %v436
  %1411 = vmatpush.bf16.msra.mxu0 %v432
  %1412 = vmatmul.bf16.gmra.mxu0 %v1222
  %v1413 = vpop.f32.mrf.mxu0
  %v1414 = vadd.f32 0.0, %v1413
  %v1415 = vpop.f32.mrf.mxu0
  %1416 = vdwg.mxu0
  %1417 = vmatpush.bf16.msra.mxu0 %v461
  %1418 = vmatpush.bf16.msra.mxu0 %v457
  %1419 = vmatpush.bf16.msra.mxu0 %v453
  %1420 = vmatpush.bf16.msra.mxu0 %v449
  %1421 = vmatpush.bf16.msra.mxu0 %v445
  %1422 = vmatpush.bf16.msra.mxu0 %v441
  %1423 = vmatpush.bf16.msra.mxu0 %v437
  %1424 = vmatpush.bf16.msra.mxu0 %v433
  %1425 = vmatmul.bf16.gmra.mxu0 %v1222
  %v1426 = vpop.f32.mrf.mxu0
  %v1427 = vadd.f32 0.0, %v1426
  %v1428 = vpop.f32.mrf.mxu0
  %1429 = vdwg.mxu0
  %1430 = vmatpush.bf16.msra.mxu0 %v462
  %1431 = vmatpush.bf16.msra.mxu0 %v458
  %1432 = vmatpush.bf16.msra.mxu0 %v454
  %1433 = vmatpush.bf16.msra.mxu0 %v450
  %1434 = vmatpush.bf16.msra.mxu0 %v446
  %1435 = vmatpush.bf16.msra.mxu0 %v442
  %1436 = vmatpush.bf16.msra.mxu0 %v438
  %1437 = vmatpush.bf16.msra.mxu0 %v434
  %1438 = vmatmul.bf16.gmra.mxu0 %v1222
  %v1439 = vpop.f32.mrf.mxu0
  %v1440 = vadd.f32 0.0, %v1439
  %v1441 = vpop.f32.mrf.mxu0
  %1442 = vdwg.mxu0
  %v1443 = vadd.f32 %v128, %v1401
  %v1444 = vadd.f32 %v157, %v1414
  %v1445 = vadd.f32 %v186, %v1427
  %v1446 = vadd.f32 %v215, %v1440
  %v1447 = vxor.u32 %v1443, 2147483648
  %v1448 = vmul.f32 %v1447, 1.442695
  %v1449 = vpow.pop %v1448
  %v1450 = vadd.f32 %v1449, 1.0
  %v1451 = vrcp.pop %v1450
  %v1452 = vmul.f32 %v1450, %v1451
  %v1453 = vsub.f32 1.0, %v1452
  %v1454 = vmul.f32 %v1451, %v1453
  %v1455 = vadd.f32 %v1451, %v1454
  %vm1456 = vweird.f32 %v1450
  %vm1457 = vweird.f32 %v1451
  %vm1458 = vmor %vm1456, %vm1457
  %v1459 = vsel %vm1458, %v1451, %v1455
  %v1460 = vand.u32 2147483647, %v1450
  %vm1461 = vcmp.eq.f32.partialorder %v1460, 8.507059e+37
  %v1462 = vand.u32 %v1450, 2147483648
  %v1463 = vor.u32 1.1754944e-38, %v1462
  %v1464 = vsel %vm1461, %v1463, %v1459
  %v1465 = vmul.f32 1.0, %v1464
  %v1466 = vxor.u32 %v1444, 2147483648
  %v1467 = vmul.f32 %v1466, 1.442695
  %v1468 = vpow.pop %v1467
  %v1469 = vadd.f32 %v1468, 1.0
  %v1470 = vrcp.pop %v1469
  %v1471 = vmul.f32 %v1469, %v1470
  %v1472 = vsub.f32 1.0, %v1471
  %v1473 = vmul.f32 %v1470, %v1472
  %v1474 = vadd.f32 %v1470, %v1473
  %vm1475 = vweird.f32 %v1469
  %vm1476 = vweird.f32 %v1470
  %vm1477 = vmor %vm1475, %vm1476
  %v1478 = vsel %vm1477, %v1470, %v1474
  %v1479 = vand.u32 2147483647, %v1469
  %vm1480 = vcmp.eq.f32.partialorder %v1479, 8.507059e+37
  %v1481 = vand.u32 %v1469, 2147483648
  %v1482 = vor.u32 1.1754944e-38, %v1481
  %v1483 = vsel %vm1480, %v1482, %v1478
  %v1484 = vmul.f32 1.0, %v1483
  %v1485 = vtanh.pop %v1445
  %v1486 = vxor.u32 %v1446, 2147483648
  %v1487 = vmul.f32 %v1486, 1.442695
  %v1488 = vpow.pop %v1487
  %v1489 = vadd.f32 %v1488, 1.0
  %v1490 = vrcp.pop %v1489
  %v1491 = vmul.f32 %v1489, %v1490
  %v1492 = vsub.f32 1.0, %v1491
  %v1493 = vmul.f32 %v1490, %v1492
  %v1494 = vadd.f32 %v1490, %v1493
  %vm1495 = vweird.f32 %v1489
  %vm1496 = vweird.f32 %v1490
  %vm1497 = vmor %vm1495, %vm1496
  %v1498 = vsel %vm1497, %v1490, %v1494
  %v1499 = vand.u32 2147483647, %v1489
  %vm1500 = vcmp.eq.f32.partialorder %v1499, 8.507059e+37
  %v1501 = vand.u32 %v1489, 2147483648
  %v1502 = vor.u32 1.1754944e-38, %v1501
  %v1503 = vsel %vm1500, %v1502, %v1498
  %v1504 = vmul.f32 1.0, %v1503
  %v1505 = vmul.f32 %v1484, %v1219
  %v1506 = vmul.f32 %v1465, %v1485
  %v1507 = vadd.f32 %v1505, %v1506
  %v1508 = vtanh.pop %v1507
  %v1509 = vmul.f32 %v1504, %v1508
  %v1510 = vpack.c.bf16 %v1509, %v1509
  %1511 = vmatpush.bf16.msra.mxu0 %v835
  %1512 = vmatpush.bf16.msra.mxu0 %v831
  %1513 = vmatpush.bf16.msra.mxu0 %v827
  %1514 = vmatpush.bf16.msra.mxu0 %v823
  %1515 = vmatpush.bf16.msra.mxu0 %v819
  %1516 = vmatpush.bf16.msra.mxu0 %v815
  %1517 = vmatpush.bf16.msra.mxu0 %v811
  %1518 = vmatpush.bf16.msra.mxu0 %v807
  %1519 = vmatmul.bf16.gmra.mxu0 %v1510
  %v1520 = vpop.f32.mrf.mxu0
  %v1521 = vadd.f32 %v327, %v1520
  %v1522 = vpop.f32.mrf.mxu0
  %1523 = vdwg.mxu0
  %1524 = vmatpush.bf16.msra.mxu0 %v867
  %1525 = vmatpush.bf16.msra.mxu0 %v863
  %1526 = vmatpush.bf16.msra.mxu0 %v859
  %1527 = vmatpush.bf16.msra.mxu0 %v855
  %1528 = vmatpush.bf16.msra.mxu0 %v851
  %1529 = vmatpush.bf16.msra.mxu0 %v847
  %1530 = vmatpush.bf16.msra.mxu0 %v843
  %1531 = vmatpush.bf16.msra.mxu0 %v839
  %1532 = vmatmul.bf16.gmra.mxu0 %v1390
  %v1533 = vpop.f32.mrf.mxu0
  %v1534 = vadd.f32 %v1521, %v1533
  %v1535 = vpop.f32.mrf.mxu0
  %1536 = vdwg.mxu0
  %1537 = vmatpush.bf16.msra.mxu0 %v836
  %1538 = vmatpush.bf16.msra.mxu0 %v832
  %1539 = vmatpush.bf16.msra.mxu0 %v828
  %1540 = vmatpush.bf16.msra.mxu0 %v824
  %1541 = vmatpush.bf16.msra.mxu0 %v820
  %1542 = vmatpush.bf16.msra.mxu0 %v816
  %1543 = vmatpush.bf16.msra.mxu0 %v812
  %1544 = vmatpush.bf16.msra.mxu0 %v808
  %1545 = vmatmul.bf16.gmra.mxu0 %v1510
  %v1546 = vpop.f32.mrf.mxu0
  %v1547 = vadd.f32 %v328, %v1546
  %v1548 = vpop.f32.mrf.mxu0
  %1549 = vdwg.mxu0
  %1550 = vmatpush.bf16.msra.mxu0 %v868
  %1551 = vmatpush.bf16.msra.mxu0 %v864
  %1552 = vmatpush.bf16.msra.mxu0 %v860
  %1553 = vmatpush.bf16.msra.mxu0 %v856
  %1554 = vmatpush.bf16.msra.mxu0 %v852
  %1555 = vmatpush.bf16.msra.mxu0 %v848
  %1556 = vmatpush.bf16.msra.mxu0 %v844
  %1557 = vmatpush.bf16.msra.mxu0 %v840
  %1558 = vmatmul.bf16.gmra.mxu0 %v1390
  %v1559 = vpop.f32.mrf.mxu0
  %v1560 = vadd.f32 %v1547, %v1559
  %v1561 = vpop.f32.mrf.mxu0
  %1562 = vdwg.mxu0
  %1563 = vmatpush.bf16.msra.mxu0 %v837
  %1564 = vmatpush.bf16.msra.mxu0 %v833
  %1565 = vmatpush.bf16.msra.mxu0 %v829
  %1566 = vmatpush.bf16.msra.mxu0 %v825
  %1567 = vmatpush.bf16.msra.mxu0 %v821
  %1568 = vmatpush.bf16.msra.mxu0 %v817
  %1569 = vmatpush.bf16.msra.mxu0 %v813
  %1570 = vmatpush.bf16.msra.mxu0 %v809
  %1571 = vmatmul.bf16.gmra.mxu0 %v1510
  %v1572 = vpop.f32.mrf.mxu0
  %v1573 = vadd.f32 %v329, %v1572
  %v1574 = vpop.f32.mrf.mxu0
  %1575 = vdwg.mxu0
  %1576 = vmatpush.bf16.msra.mxu0 %v869
  %1577 = vmatpush.bf16.msra.mxu0 %v865
  %1578 = vmatpush.bf16.msra.mxu0 %v861
  %1579 = vmatpush.bf16.msra.mxu0 %v857
  %1580 = vmatpush.bf16.msra.mxu0 %v853
  %1581 = vmatpush.bf16.msra.mxu0 %v849
  %1582 = vmatpush.bf16.msra.mxu0 %v845
  %1583 = vmatpush.bf16.msra.mxu0 %v841
  %1584 = vmatmul.bf16.gmra.mxu0 %v1390
  %v1585 = vpop.f32.mrf.mxu0
  %v1586 = vadd.f32 %v1573, %v1585
  %v1587 = vpop.f32.mrf.mxu0
  %1588 = vdwg.mxu0
  %1589 = vmatpush.bf16.msra.mxu0 %v838
  %1590 = vmatpush.bf16.msra.mxu0 %v834
  %1591 = vmatpush.bf16.msra.mxu0 %v830
  %1592 = vmatpush.bf16.msra.mxu0 %v826
  %1593 = vmatpush.bf16.msra.mxu0 %v822
  %1594 = vmatpush.bf16.msra.mxu0 %v818
  %1595 = vmatpush.bf16.msra.mxu0 %v814
  %1596 = vmatpush.bf16.msra.mxu0 %v810
  %1597 = vmatmul.bf16.gmra.mxu0 %v1510
  %v1598 = vpop.f32.mrf.mxu0
  %v1599 = vadd.f32 %v330, %v1598
  %v1600 = vpop.f32.mrf.mxu0
  %1601 = vdwg.mxu0
  %1602 = vmatpush.bf16.msra.mxu0 %v870
  %1603 = vmatpush.bf16.msra.mxu0 %v866
  %1604 = vmatpush.bf16.msra.mxu0 %v862
  %1605 = vmatpush.bf16.msra.mxu0 %v858
  %1606 = vmatpush.bf16.msra.mxu0 %v854
  %1607 = vmatpush.bf16.msra.mxu0 %v850
  %1608 = vmatpush.bf16.msra.mxu0 %v846
  %1609 = vmatpush.bf16.msra.mxu0 %v842
  %1610 = vmatmul.bf16.gmra.mxu0 %v1390
  %v1611 = vpop.f32.mrf.mxu0
  %v1612 = vadd.f32 %v1599, %v1611
  %v1613 = vpop.f32.mrf.mxu0
  %1614 = vdwg.mxu0
  %v1615 = vxor.u32 %v1534, 2147483648
  %v1616 = vmul.f32 %v1615, 1.442695
  %v1617 = vpow.pop %v1616
  %v1618 = vadd.f32 %v1617, 1.0
  %v1619 = vrcp.pop %v1618
  %v1620 = vmul.f32 %v1618, %v1619
  %v1621 = vsub.f32 1.0, %v1620
  %v1622 = vmul.f32 %v1619, %v1621
  %v1623 = vadd.f32 %v1619, %v1622
  %vm1624 = vweird.f32 %v1618
  %vm1625 = vweird.f32 %v1619
  %vm1626 = vmor %vm1624, %vm1625
  %v1627 = vsel %vm1626, %v1619, %v1623
  %v1628 = vand.u32 2147483647, %v1618
  %vm1629 = vcmp.eq.f32.partialorder %v1628, 8.507059e+37
  %v1630 = vand.u32 %v1618, 2147483648
  %v1631 = vor.u32 1.1754944e-38, %v1630
  %v1632 = vsel %vm1629, %v1631, %v1627
  %v1633 = vmul.f32 1.0, %v1632
  %v1634 = vxor.u32 %v1560, 2147483648
  %v1635 = vmul.f32 %v1634, 1.442695
  %v1636 = vpow.pop %v1635
  %v1637 = vadd.f32 %v1636, 1.0
  %v1638 = vrcp.pop %v1637
  %v1639 = vmul.f32 %v1637, %v1638
  %v1640 = vsub.f32 1.0, %v1639
  %v1641 = vmul.f32 %v1638, %v1640
  %v1642 = vadd.f32 %v1638, %v1641
  %vm1643 = vweird.f32 %v1637
  %vm1644 = vweird.f32 %v1638
  %vm1645 = vmor %vm1643, %vm1644
  %v1646 = vsel %vm1645, %v1638, %v1642
  %v1647 = vand.u32 2147483647, %v1637
  %vm1648 = vcmp.eq.f32.partialorder %v1647, 8.507059e+37
  %v1649 = vand.u32 %v1637, 2147483648
  %v1650 = vor.u32 1.1754944e-38, %v1649
  %v1651 = vsel %vm1648, %v1650, %v1646
  %v1652 = vmul.f32 1.0, %v1651
  %v1653 = vtanh.pop %v1586
  %v1654 = vxor.u32 %v1612, 2147483648
  %v1655 = vmul.f32 %v1654, 1.442695
  %v1656 = vpow.pop %v1655
  %v1657 = vadd.f32 %v1656, 1.0
  %v1658 = vrcp.pop %v1657
  %v1659 = vmul.f32 %v1657, %v1658
  %v1660 = vsub.f32 1.0, %v1659
  %v1661 = vmul.f32 %v1658, %v1660
  %v1662 = vadd.f32 %v1658, %v1661
  %vm1663 = vweird.f32 %v1657
  %vm1664 = vweird.f32 %v1658
  %vm1665 = vmor %vm1663, %vm1664
  %v1666 = vsel %vm1665, %v1658, %v1662
  %v1667 = vand.u32 2147483647, %v1657
  %vm1668 = vcmp.eq.f32.partialorder %v1667, 8.507059e+37
  %v1669 = vand.u32 %v1657, 2147483648
  %v1670 = vor.u32 1.1754944e-38, %v1669
  %v1671 = vsel %vm1668, %v1670, %v1666
  %v1672 = vmul.f32 1.0, %v1671
  %v1673 = vmul.f32 %v1652, %v1387
  %v1674 = vmul.f32 %v1633, %v1653
  %v1675 = vadd.f32 %v1673, %v1674
  %v1676 = vtanh.pop %v1675
  %v1677 = vmul.f32 %v1672, %v1676
  %v1678 = vpack.c.bf16 %v1677, %v1677
  %1679 = vmatpush.bf16.msra.mxu0 %v459
  %1680 = vmatpush.bf16.msra.mxu0 %v455
  %1681 = vmatpush.bf16.msra.mxu0 %v451
  %1682 = vmatpush.bf16.msra.mxu0 %v447
  %1683 = vmatpush.bf16.msra.mxu0 %v443
  %1684 = vmatpush.bf16.msra.mxu0 %v439
  %1685 = vmatpush.bf16.msra.mxu0 %v435
  %1686 = vmatpush.bf16.msra.mxu0 %v431
  %1687 = vmatmul.bf16.gmra.mxu0 %v1510
  %v1688 = vpop.f32.mrf.mxu0
  %v1689 = vadd.f32 0.0, %v1688
  %v1690 = vpop.f32.mrf.mxu0
  %1691 = vdwg.mxu0
  %1692 = vmatpush.bf16.msra.mxu0 %v460
  %1693 = vmatpush.bf16.msra.mxu0 %v456
  %1694 = vmatpush.bf16.msra.mxu0 %v452
  %1695 = vmatpush.bf16.msra.mxu0 %v448
  %1696 = vmatpush.bf16.msra.mxu0 %v444
  %1697 = vmatpush.bf16.msra.mxu0 %v440
  %1698 = vmatpush.bf16.msra.mxu0 %v436
  %1699 = vmatpush.bf16.msra.mxu0 %v432
  %1700 = vmatmul.bf16.gmra.mxu0 %v1510
  %v1701 = vpop.f32.mrf.mxu0
  %v1702 = vadd.f32 0.0, %v1701
  %v1703 = vpop.f32.mrf.mxu0
  %1704 = vdwg.mxu0
  %1705 = vmatpush.bf16.msra.mxu0 %v461
  %1706 = vmatpush.bf16.msra.mxu0 %v457
  %1707 = vmatpush.bf16.msra.mxu0 %v453
  %1708 = vmatpush.bf16.msra.mxu0 %v449
  %1709 = vmatpush.bf16.msra.mxu0 %v445
  %1710 = vmatpush.bf16.msra.mxu0 %v441
  %1711 = vmatpush.bf16.msra.mxu0 %v437
  %1712 = vmatpush.bf16.msra.mxu0 %v433
  %1713 = vmatmul.bf16.gmra.mxu0 %v1510
  %v1714 = vpop.f32.mrf.mxu0
  %v1715 = vadd.f32 0.0, %v1714
  %v1716 = vpop.f32.mrf.mxu0
  %1717 = vdwg.mxu0
  %1718 = vmatpush.bf16.msra.mxu0 %v462
  %1719 = vmatpush.bf16.msra.mxu0 %v458
  %1720 = vmatpush.bf16.msra.mxu0 %v454
  %1721 = vmatpush.bf16.msra.mxu0 %v450
  %1722 = vmatpush.bf16.msra.mxu0 %v446
  %1723 = vmatpush.bf16.msra.mxu0 %v442
  %1724 = vmatpush.bf16.msra.mxu0 %v438
  %1725 = vmatpush.bf16.msra.mxu0 %v434
  %1726 = vmatmul.bf16.gmra.mxu0 %v1510
  %v1727 = vpop.f32.mrf.mxu0
  %v1728 = vadd.f32 0.0, %v1727
  %v1729 = vpop.f32.mrf.mxu0
  %1730 = vdwg.mxu0
  %v1731 = vadd.f32 %v130, %v1689
  %v1732 = vadd.f32 %v159, %v1702
  %v1733 = vadd.f32 %v188, %v1715
  %v1734 = vadd.f32 %v217, %v1728
  %v1735 = vxor.u32 %v1731, 2147483648
  %v1736 = vmul.f32 %v1735, 1.442695
  %v1737 = vpow.pop %v1736
  %v1738 = vadd.f32 %v1737, 1.0
  %v1739 = vrcp.pop %v1738
  %v1740 = vmul.f32 %v1738, %v1739
  %v1741 = vsub.f32 1.0, %v1740
  %v1742 = vmul.f32 %v1739, %v1741
  %v1743 = vadd.f32 %v1739, %v1742
  %vm1744 = vweird.f32 %v1738
  %vm1745 = vweird.f32 %v1739
  %vm1746 = vmor %vm1744, %vm1745
  %v1747 = vsel %vm1746, %v1739, %v1743
  %v1748 = vand.u32 2147483647, %v1738
  %vm1749 = vcmp.eq.f32.partialorder %v1748, 8.507059e+37
  %v1750 = vand.u32 %v1738, 2147483648
  %v1751 = vor.u32 1.1754944e-38, %v1750
  %v1752 = vsel %vm1749, %v1751, %v1747
  %v1753 = vmul.f32 1.0, %v1752
  %v1754 = vxor.u32 %v1732, 2147483648
  %v1755 = vmul.f32 %v1754, 1.442695
  %v1756 = vpow.pop %v1755
  %v1757 = vadd.f32 %v1756, 1.0
  %v1758 = vrcp.pop %v1757
  %v1759 = vmul.f32 %v1757, %v1758
  %v1760 = vsub.f32 1.0, %v1759
  %v1761 = vmul.f32 %v1758, %v1760
  %v1762 = vadd.f32 %v1758, %v1761
  %vm1763 = vweird.f32 %v1757
  %vm1764 = vweird.f32 %v1758
  %vm1765 = vmor %vm1763, %vm1764
  %v1766 = vsel %vm1765, %v1758, %v1762
  %v1767 = vand.u32 2147483647, %v1757
  %vm1768 = vcmp.eq.f32.partialorder %v1767, 8.507059e+37
  %v1769 = vand.u32 %v1757, 2147483648
  %v1770 = vor.u32 1.1754944e-38, %v1769
  %v1771 = vsel %vm1768, %v1770, %v1766
  %v1772 = vmul.f32 1.0, %v1771
  %v1773 = vtanh.pop %v1733
  %v1774 = vxor.u32 %v1734, 2147483648
  %v1775 = vmul.f32 %v1774, 1.442695
  %v1776 = vpow.pop %v1775
  %v1777 = vadd.f32 %v1776, 1.0
  %v1778 = vrcp.pop %v1777
  %v1779 = vmul.f32 %v1777, %v1778
  %v1780 = vsub.f32 1.0, %v1779
  %v1781 = vmul.f32 %v1778, %v1780
  %v1782 = vadd.f32 %v1778, %v1781
  %vm1783 = vweird.f32 %v1777
  %vm1784 = vweird.f32 %v1778
  %vm1785 = vmor %vm1783, %vm1784
  %v1786 = vsel %vm1785, %v1778, %v1782
  %v1787 = vand.u32 2147483647, %v1777
  %vm1788 = vcmp.eq.f32.partialorder %v1787, 8.507059e+37
  %v1789 = vand.u32 %v1777, 2147483648
  %v1790 = vor.u32 1.1754944e-38, %v1789
  %v1791 = vsel %vm1788, %v1790, %v1786
  %v1792 = vmul.f32 1.0, %v1791
  %v1793 = vmul.f32 %v1772, %v1507
  %v1794 = vmul.f32 %v1753, %v1773
  %v1795 = vadd.f32 %v1793, %v1794
  %v1796 = vtanh.pop %v1795
  %v1797 = vmul.f32 %v1792, %v1796
  %v1798 = vpack.c.bf16 %v1797, %v1797
  %1799 = vmatpush.bf16.msra.mxu0 %v835
  %1800 = vmatpush.bf16.msra.mxu0 %v831
  %1801 = vmatpush.bf16.msra.mxu0 %v827
  %1802 = vmatpush.bf16.msra.mxu0 %v823
  %1803 = vmatpush.bf16.msra.mxu0 %v819
  %1804 = vmatpush.bf16.msra.mxu0 %v815
  %1805 = vmatpush.bf16.msra.mxu0 %v811
  %1806 = vmatpush.bf16.msra.mxu0 %v807
  %1807 = vmatmul.bf16.gmra.mxu0 %v1798
  %v1808 = vpop.f32.mrf.mxu0
  %v1809 = vadd.f32 %v327, %v1808
  %v1810 = vpop.f32.mrf.mxu0
  %1811 = vdwg.mxu0
  %1812 = vmatpush.bf16.msra.mxu0 %v867
  %1813 = vmatpush.bf16.msra.mxu0 %v863
  %1814 = vmatpush.bf16.msra.mxu0 %v859
  %1815 = vmatpush.bf16.msra.mxu0 %v855
  %1816 = vmatpush.bf16.msra.mxu0 %v851
  %1817 = vmatpush.bf16.msra.mxu0 %v847
  %1818 = vmatpush.bf16.msra.mxu0 %v843
  %1819 = vmatpush.bf16.msra.mxu0 %v839
  %1820 = vmatmul.bf16.gmra.mxu0 %v1678
  %v1821 = vpop.f32.mrf.mxu0
  %v1822 = vadd.f32 %v1809, %v1821
  %v1823 = vpop.f32.mrf.mxu0
  %1824 = vdwg.mxu0
  %1825 = vmatpush.bf16.msra.mxu0 %v836
  %1826 = vmatpush.bf16.msra.mxu0 %v832
  %1827 = vmatpush.bf16.msra.mxu0 %v828
  %1828 = vmatpush.bf16.msra.mxu0 %v824
  %1829 = vmatpush.bf16.msra.mxu0 %v820
  %1830 = vmatpush.bf16.msra.mxu0 %v816
  %1831 = vmatpush.bf16.msra.mxu0 %v812
  %1832 = vmatpush.bf16.msra.mxu0 %v808
  %1833 = vmatmul.bf16.gmra.mxu0 %v1798
  %v1834 = vpop.f32.mrf.mxu0
  %v1835 = vadd.f32 %v328, %v1834
  %v1836 = vpop.f32.mrf.mxu0
  %1837 = vdwg.mxu0
  %1838 = vmatpush.bf16.msra.mxu0 %v868
  %1839 = vmatpush.bf16.msra.mxu0 %v864
  %1840 = vmatpush.bf16.msra.mxu0 %v860
  %1841 = vmatpush.bf16.msra.mxu0 %v856
  %1842 = vmatpush.bf16.msra.mxu0 %v852
  %1843 = vmatpush.bf16.msra.mxu0 %v848
  %1844 = vmatpush.bf16.msra.mxu0 %v844
  %1845 = vmatpush.bf16.msra.mxu0 %v840
  %1846 = vmatmul.bf16.gmra.mxu0 %v1678
  %v1847 = vpop.f32.mrf.mxu0
  %v1848 = vadd.f32 %v1835, %v1847
  %v1849 = vpop.f32.mrf.mxu0
  %1850 = vdwg.mxu0
  %1851 = vmatpush.bf16.msra.mxu0 %v837
  %1852 = vmatpush.bf16.msra.mxu0 %v833
  %1853 = vmatpush.bf16.msra.mxu0 %v829
  %1854 = vmatpush.bf16.msra.mxu0 %v825
  %1855 = vmatpush.bf16.msra.mxu0 %v821
  %1856 = vmatpush.bf16.msra.mxu0 %v817
  %1857 = vmatpush.bf16.msra.mxu0 %v813
  %1858 = vmatpush.bf16.msra.mxu0 %v809
  %1859 = vmatmul.bf16.gmra.mxu0 %v1798
  %v1860 = vpop.f32.mrf.mxu0
  %v1861 = vadd.f32 %v329, %v1860
  %v1862 = vpop.f32.mrf.mxu0
  %1863 = vdwg.mxu0
  %1864 = vmatpush.bf16.msra.mxu0 %v869
  %1865 = vmatpush.bf16.msra.mxu0 %v865
  %1866 = vmatpush.bf16.msra.mxu0 %v861
  %1867 = vmatpush.bf16.msra.mxu0 %v857
  %1868 = vmatpush.bf16.msra.mxu0 %v853
  %1869 = vmatpush.bf16.msra.mxu0 %v849
  %1870 = vmatpush.bf16.msra.mxu0 %v845
  %1871 = vmatpush.bf16.msra.mxu0 %v841
  %1872 = vmatmul.bf16.gmra.mxu0 %v1678
  %v1873 = vpop.f32.mrf.mxu0
  %v1874 = vadd.f32 %v1861, %v1873
  %v1875 = vpop.f32.mrf.mxu0
  %1876 = vdwg.mxu0
  %1877 = vmatpush.bf16.msra.mxu0 %v838
  %1878 = vmatpush.bf16.msra.mxu0 %v834
  %1879 = vmatpush.bf16.msra.mxu0 %v830
  %1880 = vmatpush.bf16.msra.mxu0 %v826
  %1881 = vmatpush.bf16.msra.mxu0 %v822
  %1882 = vmatpush.bf16.msra.mxu0 %v818
  %1883 = vmatpush.bf16.msra.mxu0 %v814
  %1884 = vmatpush.bf16.msra.mxu0 %v810
  %1885 = vmatmul.bf16.gmra.mxu0 %v1798
  %v1886 = vpop.f32.mrf.mxu0
  %v1887 = vadd.f32 %v330, %v1886
  %v1888 = vpop.f32.mrf.mxu0
  %1889 = vdwg.mxu0
  %1890 = vmatpush.bf16.msra.mxu0 %v870
  %1891 = vmatpush.bf16.msra.mxu0 %v866
  %1892 = vmatpush.bf16.msra.mxu0 %v862
  %1893 = vmatpush.bf16.msra.mxu0 %v858
  %1894 = vmatpush.bf16.msra.mxu0 %v854
  %1895 = vmatpush.bf16.msra.mxu0 %v850
  %1896 = vmatpush.bf16.msra.mxu0 %v846
  %1897 = vmatpush.bf16.msra.mxu0 %v842
  %1898 = vmatmul.bf16.gmra.mxu0 %v1678
  %v1899 = vpop.f32.mrf.mxu0
  %v1900 = vadd.f32 %v1887, %v1899
  %v1901 = vpop.f32.mrf.mxu0
  %1902 = vdwg.mxu0
  %v1903 = vxor.u32 %v1822, 2147483648
  %v1904 = vmul.f32 %v1903, 1.442695
  %v1905 = vpow.pop %v1904
  %v1906 = vadd.f32 %v1905, 1.0
  %v1907 = vrcp.pop %v1906
  %v1908 = vmul.f32 %v1906, %v1907
  %v1909 = vsub.f32 1.0, %v1908
  %v1910 = vmul.f32 %v1907, %v1909
  %v1911 = vadd.f32 %v1907, %v1910
  %vm1912 = vweird.f32 %v1906
  %vm1913 = vweird.f32 %v1907
  %vm1914 = vmor %vm1912, %vm1913
  %v1915 = vsel %vm1914, %v1907, %v1911
  %v1916 = vand.u32 2147483647, %v1906
  %vm1917 = vcmp.eq.f32.partialorder %v1916, 8.507059e+37
  %v1918 = vand.u32 %v1906, 2147483648
  %v1919 = vor.u32 1.1754944e-38, %v1918
  %v1920 = vsel %vm1917, %v1919, %v1915
  %v1921 = vmul.f32 1.0, %v1920
  %v1922 = vxor.u32 %v1848, 2147483648
  %v1923 = vmul.f32 %v1922, 1.442695
  %v1924 = vpow.pop %v1923
  %v1925 = vadd.f32 %v1924, 1.0
  %v1926 = vrcp.pop %v1925
  %v1927 = vmul.f32 %v1925, %v1926
  %v1928 = vsub.f32 1.0, %v1927
  %v1929 = vmul.f32 %v1926, %v1928
  %v1930 = vadd.f32 %v1926, %v1929
  %vm1931 = vweird.f32 %v1925
  %vm1932 = vweird.f32 %v1926
  %vm1933 = vmor %vm1931, %vm1932
  %v1934 = vsel %vm1933, %v1926, %v1930
  %v1935 = vand.u32 2147483647, %v1925
  %vm1936 = vcmp.eq.f32.partialorder %v1935, 8.507059e+37
  %v1937 = vand.u32 %v1925, 2147483648
  %v1938 = vor.u32 1.1754944e-38, %v1937
  %v1939 = vsel %vm1936, %v1938, %v1934
  %v1940 = vmul.f32 1.0, %v1939
  %v1941 = vtanh.pop %v1874
  %v1942 = vxor.u32 %v1900, 2147483648
  %v1943 = vmul.f32 %v1942, 1.442695
  %v1944 = vpow.pop %v1943
  %v1945 = vadd.f32 %v1944, 1.0
  %v1946 = vrcp.pop %v1945
  %v1947 = vmul.f32 %v1945, %v1946
  %v1948 = vsub.f32 1.0, %v1947
  %v1949 = vmul.f32 %v1946, %v1948
  %v1950 = vadd.f32 %v1946, %v1949
  %vm1951 = vweird.f32 %v1945
  %vm1952 = vweird.f32 %v1946
  %vm1953 = vmor %vm1951, %vm1952
  %v1954 = vsel %vm1953, %v1946, %v1950
  %v1955 = vand.u32 2147483647, %v1945
  %vm1956 = vcmp.eq.f32.partialorder %v1955, 8.507059e+37
  %v1957 = vand.u32 %v1945, 2147483648
  %v1958 = vor.u32 1.1754944e-38, %v1957
  %v1959 = vsel %vm1956, %v1958, %v1954
  %v1960 = vmul.f32 1.0, %v1959
  %v1961 = vmul.f32 %v1940, %v1675
  %v1962 = vmul.f32 %v1921, %v1941
  %v1963 = vadd.f32 %v1961, %v1962
  %v1964 = vtanh.pop %v1963
  %v1965 = vmul.f32 %v1960, %v1964
  %v1966 = vpack.c.bf16 %v1965, %v1965
  %1967 = vmatpush.bf16.msra.mxu0 %v459
  %1968 = vmatpush.bf16.msra.mxu0 %v455
  %1969 = vmatpush.bf16.msra.mxu0 %v451
  %1970 = vmatpush.bf16.msra.mxu0 %v447
  %1971 = vmatpush.bf16.msra.mxu0 %v443
  %1972 = vmatpush.bf16.msra.mxu0 %v439
  %1973 = vmatpush.bf16.msra.mxu0 %v435
  %1974 = vmatpush.bf16.msra.mxu0 %v431
  %1975 = vmatmul.bf16.gmra.mxu0 %v1798
  %v1976 = vpop.f32.mrf.mxu0
  %v1977 = vadd.f32 0.0, %v1976
  %v1978 = vpop.f32.mrf.mxu0
  %1979 = vdwg.mxu0
  %1980 = vmatpush.bf16.msra.mxu0 %v460
  %1981 = vmatpush.bf16.msra.mxu0 %v456
  %1982 = vmatpush.bf16.msra.mxu0 %v452
  %1983 = vmatpush.bf16.msra.mxu0 %v448
  %1984 = vmatpush.bf16.msra.mxu0 %v444
  %1985 = vmatpush.bf16.msra.mxu0 %v440
  %1986 = vmatpush.bf16.msra.mxu0 %v436
  %1987 = vmatpush.bf16.msra.mxu0 %v432
  %1988 = vmatmul.bf16.gmra.mxu0 %v1798
  %v1989 = vpop.f32.mrf.mxu0
  %v1990 = vadd.f32 0.0, %v1989
  %v1991 = vpop.f32.mrf.mxu0
  %1992 = vdwg.mxu0
  %1993 = vmatpush.bf16.msra.mxu0 %v461
  %1994 = vmatpush.bf16.msra.mxu0 %v457
  %1995 = vmatpush.bf16.msra.mxu0 %v453
  %1996 = vmatpush.bf16.msra.mxu0 %v449
  %1997 = vmatpush.bf16.msra.mxu0 %v445
  %1998 = vmatpush.bf16.msra.mxu0 %v441
  %1999 = vmatpush.bf16.msra.mxu0 %v437
  %2000 = vmatpush.bf16.msra.mxu0 %v433
  %2001 = vmatmul.bf16.gmra.mxu0 %v1798
  %v2002 = vpop.f32.mrf.mxu0
  %v2003 = vadd.f32 0.0, %v2002
  %v2004 = vpop.f32.mrf.mxu0
  %2005 = vdwg.mxu0
  %2006 = vmatpush.bf16.msra.mxu0 %v462
  %2007 = vmatpush.bf16.msra.mxu0 %v458
  %2008 = vmatpush.bf16.msra.mxu0 %v454
  %2009 = vmatpush.bf16.msra.mxu0 %v450
  %2010 = vmatpush.bf16.msra.mxu0 %v446
  %2011 = vmatpush.bf16.msra.mxu0 %v442
  %2012 = vmatpush.bf16.msra.mxu0 %v438
  %2013 = vmatpush.bf16.msra.mxu0 %v434
  %2014 = vmatmul.bf16.gmra.mxu0 %v1798
  %v2015 = vpop.f32.mrf.mxu0
  %v2016 = vadd.f32 0.0, %v2015
  %v2017 = vpop.f32.mrf.mxu0
  %2018 = vdwg.mxu0
  %v2019 = vadd.f32 %v133, %v1977
  %v2020 = vadd.f32 %v162, %v1990
  %v2021 = vadd.f32 %v191, %v2003
  %v2022 = vadd.f32 %v220, %v2016
  %v2023 = vxor.u32 %v2019, 2147483648
  %v2024 = vmul.f32 %v2023, 1.442695
  %v2025 = vpow.pop %v2024
  %v2026 = vadd.f32 %v2025, 1.0
  %v2027 = vrcp.pop %v2026
  %v2028 = vmul.f32 %v2026, %v2027
  %v2029 = vsub.f32 1.0, %v2028
  %v2030 = vmul.f32 %v2027, %v2029
  %v2031 = vadd.f32 %v2027, %v2030
  %vm2032 = vweird.f32 %v2026
  %vm2033 = vweird.f32 %v2027
  %vm2034 = vmor %vm2032, %vm2033
  %v2035 = vsel %vm2034, %v2027, %v2031
  %v2036 = vand.u32 2147483647, %v2026
  %vm2037 = vcmp.eq.f32.partialorder %v2036, 8.507059e+37
  %v2038 = vand.u32 %v2026, 2147483648
  %v2039 = vor.u32 1.1754944e-38, %v2038
  %v2040 = vsel %vm2037, %v2039, %v2035
  %v2041 = vmul.f32 1.0, %v2040
  %v2042 = vxor.u32 %v2020, 2147483648
  %v2043 = vmul.f32 %v2042, 1.442695
  %v2044 = vpow.pop %v2043
  %v2045 = vadd.f32 %v2044, 1.0
  %v2046 = vrcp.pop %v2045
  %v2047 = vmul.f32 %v2045, %v2046
  %v2048 = vsub.f32 1.0, %v2047
  %v2049 = vmul.f32 %v2046, %v2048
  %v2050 = vadd.f32 %v2046, %v2049
  %vm2051 = vweird.f32 %v2045
  %vm2052 = vweird.f32 %v2046
  %vm2053 = vmor %vm2051, %vm2052
  %v2054 = vsel %vm2053, %v2046, %v2050
  %v2055 = vand.u32 2147483647, %v2045
  %vm2056 = vcmp.eq.f32.partialorder %v2055, 8.507059e+37
  %v2057 = vand.u32 %v2045, 2147483648
  %v2058 = vor.u32 1.1754944e-38, %v2057
  %v2059 = vsel %vm2056, %v2058, %v2054
  %v2060 = vmul.f32 1.0, %v2059
  %v2061 = vtanh.pop %v2021
  %v2062 = vxor.u32 %v2022, 2147483648
  %v2063 = vmul.f32 %v2062, 1.442695
  %v2064 = vpow.pop %v2063
  %v2065 = vadd.f32 %v2064, 1.0
  %v2066 = vrcp.pop %v2065
  %v2067 = vmul.f32 %v2065, %v2066
  %v2068 = vsub.f32 1.0, %v2067
  %v2069 = vmul.f32 %v2066, %v2068
  %v2070 = vadd.f32 %v2066, %v2069
  %vm2071 = vweird.f32 %v2065
  %vm2072 = vweird.f32 %v2066
  %vm2073 = vmor %vm2071, %vm2072
  %v2074 = vsel %vm2073, %v2066, %v2070
  %v2075 = vand.u32 2147483647, %v2065
  %vm2076 = vcmp.eq.f32.partialorder %v2075, 8.507059e+37
  %v2077 = vand.u32 %v2065, 2147483648
  %v2078 = vor.u32 1.1754944e-38, %v2077
  %v2079 = vsel %vm2076, %v2078, %v2074
  %v2080 = vmul.f32 1.0, %v2079
  %v2081 = vmul.f32 %v2060, %v1795
  %v2082 = vmul.f32 %v2041, %v2061
  %v2083 = vadd.f32 %v2081, %v2082
  %v2084 = vtanh.pop %v2083
  %v2085 = vmul.f32 %v2080, %v2084
  %v2086 = vpack.c.bf16 %v2085, %v2085
  %2087 = vmatpush.bf16.msra.mxu0 %v835
  %2088 = vmatpush.bf16.msra.mxu0 %v831
  %2089 = vmatpush.bf16.msra.mxu0 %v827
  %2090 = vmatpush.bf16.msra.mxu0 %v823
  %2091 = vmatpush.bf16.msra.mxu0 %v819
  %2092 = vmatpush.bf16.msra.mxu0 %v815
  %2093 = vmatpush.bf16.msra.mxu0 %v811
  %2094 = vmatpush.bf16.msra.mxu0 %v807
  %2095 = vmatmul.bf16.gmra.mxu0 %v2086
  %v2096 = vpop.f32.mrf.mxu0
  %v2097 = vadd.f32 %v327, %v2096
  %v2098 = vpop.f32.mrf.mxu0
  %2099 = vdwg.mxu0
  %2100 = vmatpush.bf16.msra.mxu0 %v867
  %2101 = vmatpush.bf16.msra.mxu0 %v863
  %2102 = vmatpush.bf16.msra.mxu0 %v859
  %2103 = vmatpush.bf16.msra.mxu0 %v855
  %2104 = vmatpush.bf16.msra.mxu0 %v851
  %2105 = vmatpush.bf16.msra.mxu0 %v847
  %2106 = vmatpush.bf16.msra.mxu0 %v843
  %2107 = vmatpush.bf16.msra.mxu0 %v839
  %2108 = vmatmul.bf16.gmra.mxu0 %v1966
  %v2109 = vpop.f32.mrf.mxu0
  %v2110 = vadd.f32 %v2097, %v2109
  %v2111 = vpop.f32.mrf.mxu0
  %2112 = vdwg.mxu0
  %2113 = vmatpush.bf16.msra.mxu0 %v836
  %2114 = vmatpush.bf16.msra.mxu0 %v832
  %2115 = vmatpush.bf16.msra.mxu0 %v828
  %2116 = vmatpush.bf16.msra.mxu0 %v824
  %2117 = vmatpush.bf16.msra.mxu0 %v820
  %2118 = vmatpush.bf16.msra.mxu0 %v816
  %2119 = vmatpush.bf16.msra.mxu0 %v812
  %2120 = vmatpush.bf16.msra.mxu0 %v808
  %2121 = vmatmul.bf16.gmra.mxu0 %v2086
  %v2122 = vpop.f32.mrf.mxu0
  %v2123 = vadd.f32 %v328, %v2122
  %v2124 = vpop.f32.mrf.mxu0
  %2125 = vdwg.mxu0
  %2126 = vmatpush.bf16.msra.mxu0 %v868
  %2127 = vmatpush.bf16.msra.mxu0 %v864
  %2128 = vmatpush.bf16.msra.mxu0 %v860
  %2129 = vmatpush.bf16.msra.mxu0 %v856
  %2130 = vmatpush.bf16.msra.mxu0 %v852
  %2131 = vmatpush.bf16.msra.mxu0 %v848
  %2132 = vmatpush.bf16.msra.mxu0 %v844
  %2133 = vmatpush.bf16.msra.mxu0 %v840
  %2134 = vmatmul.bf16.gmra.mxu0 %v1966
  %v2135 = vpop.f32.mrf.mxu0
  %v2136 = vadd.f32 %v2123, %v2135
  %v2137 = vpop.f32.mrf.mxu0
  %2138 = vdwg.mxu0
  %2139 = vmatpush.bf16.msra.mxu0 %v837
  %2140 = vmatpush.bf16.msra.mxu0 %v833
  %2141 = vmatpush.bf16.msra.mxu0 %v829
  %2142 = vmatpush.bf16.msra.mxu0 %v825
  %2143 = vmatpush.bf16.msra.mxu0 %v821
  %2144 = vmatpush.bf16.msra.mxu0 %v817
  %2145 = vmatpush.bf16.msra.mxu0 %v813
  %2146 = vmatpush.bf16.msra.mxu0 %v809
  %2147 = vmatmul.bf16.gmra.mxu0 %v2086
  %v2148 = vpop.f32.mrf.mxu0
  %v2149 = vadd.f32 %v329, %v2148
  %v2150 = vpop.f32.mrf.mxu0
  %2151 = vdwg.mxu0
  %2152 = vmatpush.bf16.msra.mxu0 %v869
  %2153 = vmatpush.bf16.msra.mxu0 %v865
  %2154 = vmatpush.bf16.msra.mxu0 %v861
  %2155 = vmatpush.bf16.msra.mxu0 %v857
  %2156 = vmatpush.bf16.msra.mxu0 %v853
  %2157 = vmatpush.bf16.msra.mxu0 %v849
  %2158 = vmatpush.bf16.msra.mxu0 %v845
  %2159 = vmatpush.bf16.msra.mxu0 %v841
  %2160 = vmatmul.bf16.gmra.mxu0 %v1966
  %v2161 = vpop.f32.mrf.mxu0
  %v2162 = vadd.f32 %v2149, %v2161
  %v2163 = vpop.f32.mrf.mxu0
  %2164 = vdwg.mxu0
  %2165 = vmatpush.bf16.msra.mxu0 %v838
  %2166 = vmatpush.bf16.msra.mxu0 %v834
  %2167 = vmatpush.bf16.msra.mxu0 %v830
  %2168 = vmatpush.bf16.msra.mxu0 %v826
  %2169 = vmatpush.bf16.msra.mxu0 %v822
  %2170 = vmatpush.bf16.msra.mxu0 %v818
  %2171 = vmatpush.bf16.msra.mxu0 %v814
  %2172 = vmatpush.bf16.msra.mxu0 %v810
  %2173 = vmatmul.bf16.gmra.mxu0 %v2086
  %v2174 = vpop.f32.mrf.mxu0
  %v2175 = vadd.f32 %v330, %v2174
  %v2176 = vpop.f32.mrf.mxu0
  %2177 = vdwg.mxu0
  %2178 = vmatpush.bf16.msra.mxu0 %v870
  %2179 = vmatpush.bf16.msra.mxu0 %v866
  %2180 = vmatpush.bf16.msra.mxu0 %v862
  %2181 = vmatpush.bf16.msra.mxu0 %v858
  %2182 = vmatpush.bf16.msra.mxu0 %v854
  %2183 = vmatpush.bf16.msra.mxu0 %v850
  %2184 = vmatpush.bf16.msra.mxu0 %v846
  %2185 = vmatpush.bf16.msra.mxu0 %v842
  %2186 = vmatmul.bf16.gmra.mxu0 %v1966
  %v2187 = vpop.f32.mrf.mxu0
  %v2188 = vadd.f32 %v2175, %v2187
  %v2189 = vpop.f32.mrf.mxu0
  %2190 = vdwg.mxu0
  %v2191 = vxor.u32 %v2110, 2147483648
  %v2192 = vmul.f32 %v2191, 1.442695
  %v2193 = vpow.pop %v2192
  %v2194 = vadd.f32 %v2193, 1.0
  %v2195 = vrcp.pop %v2194
  %v2196 = vmul.f32 %v2194, %v2195
  %v2197 = vsub.f32 1.0, %v2196
  %v2198 = vmul.f32 %v2195, %v2197
  %v2199 = vadd.f32 %v2195, %v2198
  %vm2200 = vweird.f32 %v2194
  %vm2201 = vweird.f32 %v2195
  %vm2202 = vmor %vm2200, %vm2201
  %v2203 = vsel %vm2202, %v2195, %v2199
  %v2204 = vand.u32 2147483647, %v2194
  %vm2205 = vcmp.eq.f32.partialorder %v2204, 8.507059e+37
  %v2206 = vand.u32 %v2194, 2147483648
  %v2207 = vor.u32 1.1754944e-38, %v2206
  %v2208 = vsel %vm2205, %v2207, %v2203
  %v2209 = vmul.f32 1.0, %v2208
  %v2210 = vxor.u32 %v2136, 2147483648
  %v2211 = vmul.f32 %v2210, 1.442695
  %v2212 = vpow.pop %v2211
  %v2213 = vadd.f32 %v2212, 1.0
  %v2214 = vrcp.pop %v2213
  %v2215 = vmul.f32 %v2213, %v2214
  %v2216 = vsub.f32 1.0, %v2215
  %v2217 = vmul.f32 %v2214, %v2216
  %v2218 = vadd.f32 %v2214, %v2217
  %vm2219 = vweird.f32 %v2213
  %vm2220 = vweird.f32 %v2214
  %vm2221 = vmor %vm2219, %vm2220
  %v2222 = vsel %vm2221, %v2214, %v2218
  %v2223 = vand.u32 2147483647, %v2213
  %vm2224 = vcmp.eq.f32.partialorder %v2223, 8.507059e+37
  %v2225 = vand.u32 %v2213, 2147483648
  %v2226 = vor.u32 1.1754944e-38, %v2225
  %v2227 = vsel %vm2224, %v2226, %v2222
  %v2228 = vmul.f32 1.0, %v2227
  %v2229 = vtanh.pop %v2162
  %v2230 = vxor.u32 %v2188, 2147483648
  %v2231 = vmul.f32 %v2230, 1.442695
  %v2232 = vpow.pop %v2231
  %v2233 = vadd.f32 %v2232, 1.0
  %v2234 = vrcp.pop %v2233
  %v2235 = vmul.f32 %v2233, %v2234
  %v2236 = vsub.f32 1.0, %v2235
  %v2237 = vmul.f32 %v2234, %v2236
  %v2238 = vadd.f32 %v2234, %v2237
  %vm2239 = vweird.f32 %v2233
  %vm2240 = vweird.f32 %v2234
  %vm2241 = vmor %vm2239, %vm2240
  %v2242 = vsel %vm2241, %v2234, %v2238
  %v2243 = vand.u32 2147483647, %v2233
  %vm2244 = vcmp.eq.f32.partialorder %v2243, 8.507059e+37
  %v2245 = vand.u32 %v2233, 2147483648
  %v2246 = vor.u32 1.1754944e-38, %v2245
  %v2247 = vsel %vm2244, %v2246, %v2242
  %v2248 = vmul.f32 1.0, %v2247
  %v2249 = vmul.f32 %v2228, %v1963
  %v2250 = vmul.f32 %v2209, %v2229
  %v2251 = vadd.f32 %v2249, %v2250
  %v2252 = vtanh.pop %v2251
  %v2253 = vmul.f32 %v2248, %v2252
  %v2254 = vpack.c.bf16 %v2253, %v2253
  %2255 = vmatpush.bf16.msra.mxu0 %v459
  %2256 = vmatpush.bf16.msra.mxu0 %v455
  %2257 = vmatpush.bf16.msra.mxu0 %v451
  %2258 = vmatpush.bf16.msra.mxu0 %v447
  %2259 = vmatpush.bf16.msra.mxu0 %v443
  %2260 = vmatpush.bf16.msra.mxu0 %v439
  %2261 = vmatpush.bf16.msra.mxu0 %v435
  %2262 = vmatpush.bf16.msra.mxu0 %v431
  %2263 = vmatmul.bf16.gmra.mxu0 %v2086
  %v2264 = vpop.f32.mrf.mxu0
  %v2265 = vadd.f32 0.0, %v2264
  %v2266 = vpop.f32.mrf.mxu0
  %2267 = vdwg.mxu0
  %2268 = vmatpush.bf16.msra.mxu0 %v460
  %2269 = vmatpush.bf16.msra.mxu0 %v456
  %2270 = vmatpush.bf16.msra.mxu0 %v452
  %2271 = vmatpush.bf16.msra.mxu0 %v448
  %2272 = vmatpush.bf16.msra.mxu0 %v444
  %2273 = vmatpush.bf16.msra.mxu0 %v440
  %2274 = vmatpush.bf16.msra.mxu0 %v436
  %2275 = vmatpush.bf16.msra.mxu0 %v432
  %2276 = vmatmul.bf16.gmra.mxu0 %v2086
  %v2277 = vpop.f32.mrf.mxu0
  %v2278 = vadd.f32 0.0, %v2277
  %v2279 = vpop.f32.mrf.mxu0
  %2280 = vdwg.mxu0
  %2281 = vmatpush.bf16.msra.mxu0 %v461
  %2282 = vmatpush.bf16.msra.mxu0 %v457
  %2283 = vmatpush.bf16.msra.mxu0 %v453
  %2284 = vmatpush.bf16.msra.mxu0 %v449
  %2285 = vmatpush.bf16.msra.mxu0 %v445
  %2286 = vmatpush.bf16.msra.mxu0 %v441
  %2287 = vmatpush.bf16.msra.mxu0 %v437
  %2288 = vmatpush.bf16.msra.mxu0 %v433
  %2289 = vmatmul.bf16.gmra.mxu0 %v2086
  %v2290 = vpop.f32.mrf.mxu0
  %v2291 = vadd.f32 0.0, %v2290
  %v2292 = vpop.f32.mrf.mxu0
  %2293 = vdwg.mxu0
  %2294 = vmatpush.bf16.msra.mxu0 %v462
  %2295 = vmatpush.bf16.msra.mxu0 %v458
  %2296 = vmatpush.bf16.msra.mxu0 %v454
  %2297 = vmatpush.bf16.msra.mxu0 %v450
  %2298 = vmatpush.bf16.msra.mxu0 %v446
  %2299 = vmatpush.bf16.msra.mxu0 %v442
  %2300 = vmatpush.bf16.msra.mxu0 %v438
  %2301 = vmatpush.bf16.msra.mxu0 %v434
  %2302 = vmatmul.bf16.gmra.mxu0 %v2086
  %v2303 = vpop.f32.mrf.mxu0
  %v2304 = vadd.f32 0.0, %v2303
  %v2305 = vpop.f32.mrf.mxu0
  %2306 = vdwg.mxu0
  %v2307 = vadd.f32 %v135, %v2265
  %v2308 = vadd.f32 %v164, %v2278
  %v2309 = vadd.f32 %v193, %v2291
  %v2310 = vadd.f32 %v222, %v2304
  %v2311 = vxor.u32 %v2307, 2147483648
  %v2312 = vmul.f32 %v2311, 1.442695
  %v2313 = vpow.pop %v2312
  %v2314 = vadd.f32 %v2313, 1.0
  %v2315 = vrcp.pop %v2314
  %v2316 = vmul.f32 %v2314, %v2315
  %v2317 = vsub.f32 1.0, %v2316
  %v2318 = vmul.f32 %v2315, %v2317
  %v2319 = vadd.f32 %v2315, %v2318
  %vm2320 = vweird.f32 %v2314
  %vm2321 = vweird.f32 %v2315
  %vm2322 = vmor %vm2320, %vm2321
  %v2323 = vsel %vm2322, %v2315, %v2319
  %v2324 = vand.u32 2147483647, %v2314
  %vm2325 = vcmp.eq.f32.partialorder %v2324, 8.507059e+37
  %v2326 = vand.u32 %v2314, 2147483648
  %v2327 = vor.u32 1.1754944e-38, %v2326
  %v2328 = vsel %vm2325, %v2327, %v2323
  %v2329 = vmul.f32 1.0, %v2328
  %v2330 = vxor.u32 %v2308, 2147483648
  %v2331 = vmul.f32 %v2330, 1.442695
  %v2332 = vpow.pop %v2331
  %v2333 = vadd.f32 %v2332, 1.0
  %v2334 = vrcp.pop %v2333
  %v2335 = vmul.f32 %v2333, %v2334
  %v2336 = vsub.f32 1.0, %v2335
  %v2337 = vmul.f32 %v2334, %v2336
  %v2338 = vadd.f32 %v2334, %v2337
  %vm2339 = vweird.f32 %v2333
  %vm2340 = vweird.f32 %v2334
  %vm2341 = vmor %vm2339, %vm2340
  %v2342 = vsel %vm2341, %v2334, %v2338
  %v2343 = vand.u32 2147483647, %v2333
  %vm2344 = vcmp.eq.f32.partialorder %v2343, 8.507059e+37
  %v2345 = vand.u32 %v2333, 2147483648
  %v2346 = vor.u32 1.1754944e-38, %v2345
  %v2347 = vsel %vm2344, %v2346, %v2342
  %v2348 = vmul.f32 1.0, %v2347
  %v2349 = vtanh.pop %v2309
  %v2350 = vxor.u32 %v2310, 2147483648
  %v2351 = vmul.f32 %v2350, 1.442695
  %v2352 = vpow.pop %v2351
  %v2353 = vadd.f32 %v2352, 1.0
  %v2354 = vrcp.pop %v2353
  %v2355 = vmul.f32 %v2353, %v2354
  %v2356 = vsub.f32 1.0, %v2355
  %v2357 = vmul.f32 %v2354, %v2356
  %v2358 = vadd.f32 %v2354, %v2357
  %vm2359 = vweird.f32 %v2353
  %vm2360 = vweird.f32 %v2354
  %vm2361 = vmor %vm2359, %vm2360
  %v2362 = vsel %vm2361, %v2354, %v2358
  %v2363 = vand.u32 2147483647, %v2353
  %vm2364 = vcmp.eq.f32.partialorder %v2363, 8.507059e+37
  %v2365 = vand.u32 %v2353, 2147483648
  %v2366 = vor.u32 1.1754944e-38, %v2365
  %v2367 = vsel %vm2364, %v2366, %v2362
  %v2368 = vmul.f32 1.0, %v2367
  %v2369 = vmul.f32 %v2348, %v2083
  %v2370 = vmul.f32 %v2329, %v2349
  %v2371 = vadd.f32 %v2369, %v2370
  %v2372 = vtanh.pop %v2371
  %v2373 = vmul.f32 %v2368, %v2372
  %v2374 = vpack.c.bf16 %v2373, %v2373
  %2375 = vmatpush.bf16.msra.mxu0 %v835
  %2376 = vmatpush.bf16.msra.mxu0 %v831
  %2377 = vmatpush.bf16.msra.mxu0 %v827
  %2378 = vmatpush.bf16.msra.mxu0 %v823
  %2379 = vmatpush.bf16.msra.mxu0 %v819
  %2380 = vmatpush.bf16.msra.mxu0 %v815
  %2381 = vmatpush.bf16.msra.mxu0 %v811
  %2382 = vmatpush.bf16.msra.mxu0 %v807
  %2383 = vmatmul.bf16.gmra.mxu0 %v2374
  %v2384 = vpop.f32.mrf.mxu0
  %v2385 = vadd.f32 %v327, %v2384
  %v2386 = vpop.f32.mrf.mxu0
  %2387 = vdwg.mxu0
  %2388 = vmatpush.bf16.msra.mxu0 %v867
  %2389 = vmatpush.bf16.msra.mxu0 %v863
  %2390 = vmatpush.bf16.msra.mxu0 %v859
  %2391 = vmatpush.bf16.msra.mxu0 %v855
  %2392 = vmatpush.bf16.msra.mxu0 %v851
  %2393 = vmatpush.bf16.msra.mxu0 %v847
  %2394 = vmatpush.bf16.msra.mxu0 %v843
  %2395 = vmatpush.bf16.msra.mxu0 %v839
  %2396 = vmatmul.bf16.gmra.mxu0 %v2254
  %v2397 = vpop.f32.mrf.mxu0
  %v2398 = vadd.f32 %v2385, %v2397
  %v2399 = vpop.f32.mrf.mxu0
  %2400 = vdwg.mxu0
  %2401 = vmatpush.bf16.msra.mxu0 %v836
  %2402 = vmatpush.bf16.msra.mxu0 %v832
  %2403 = vmatpush.bf16.msra.mxu0 %v828
  %2404 = vmatpush.bf16.msra.mxu0 %v824
  %2405 = vmatpush.bf16.msra.mxu0 %v820
  %2406 = vmatpush.bf16.msra.mxu0 %v816
  %2407 = vmatpush.bf16.msra.mxu0 %v812
  %2408 = vmatpush.bf16.msra.mxu0 %v808
  %2409 = vmatmul.bf16.gmra.mxu0 %v2374
  %v2410 = vpop.f32.mrf.mxu0
  %v2411 = vadd.f32 %v328, %v2410
  %v2412 = vpop.f32.mrf.mxu0
  %2413 = vdwg.mxu0
  %2414 = vmatpush.bf16.msra.mxu0 %v868
  %2415 = vmatpush.bf16.msra.mxu0 %v864
  %2416 = vmatpush.bf16.msra.mxu0 %v860
  %2417 = vmatpush.bf16.msra.mxu0 %v856
  %2418 = vmatpush.bf16.msra.mxu0 %v852
  %2419 = vmatpush.bf16.msra.mxu0 %v848
  %2420 = vmatpush.bf16.msra.mxu0 %v844
  %2421 = vmatpush.bf16.msra.mxu0 %v840
  %2422 = vmatmul.bf16.gmra.mxu0 %v2254
  %v2423 = vpop.f32.mrf.mxu0
  %v2424 = vadd.f32 %v2411, %v2423
  %v2425 = vpop.f32.mrf.mxu0
  %2426 = vdwg.mxu0
  %2427 = vmatpush.bf16.msra.mxu0 %v837
  %2428 = vmatpush.bf16.msra.mxu0 %v833
  %2429 = vmatpush.bf16.msra.mxu0 %v829
  %2430 = vmatpush.bf16.msra.mxu0 %v825
  %2431 = vmatpush.bf16.msra.mxu0 %v821
  %2432 = vmatpush.bf16.msra.mxu0 %v817
  %2433 = vmatpush.bf16.msra.mxu0 %v813
  %2434 = vmatpush.bf16.msra.mxu0 %v809
  %2435 = vmatmul.bf16.gmra.mxu0 %v2374
  %v2436 = vpop.f32.mrf.mxu0
  %v2437 = vadd.f32 %v329, %v2436
  %v2438 = vpop.f32.mrf.mxu0
  %2439 = vdwg.mxu0
  %2440 = vmatpush.bf16.msra.mxu0 %v869
  %2441 = vmatpush.bf16.msra.mxu0 %v865
  %2442 = vmatpush.bf16.msra.mxu0 %v861
  %2443 = vmatpush.bf16.msra.mxu0 %v857
  %2444 = vmatpush.bf16.msra.mxu0 %v853
  %2445 = vmatpush.bf16.msra.mxu0 %v849
  %2446 = vmatpush.bf16.msra.mxu0 %v845
  %2447 = vmatpush.bf16.msra.mxu0 %v841
  %2448 = vmatmul.bf16.gmra.mxu0 %v2254
  %v2449 = vpop.f32.mrf.mxu0
  %v2450 = vadd.f32 %v2437, %v2449
  %v2451 = vpop.f32.mrf.mxu0
  %2452 = vdwg.mxu0
  %2453 = vmatpush.bf16.msra.mxu0 %v838
  %2454 = vmatpush.bf16.msra.mxu0 %v834
  %2455 = vmatpush.bf16.msra.mxu0 %v830
  %2456 = vmatpush.bf16.msra.mxu0 %v826
  %2457 = vmatpush.bf16.msra.mxu0 %v822
  %2458 = vmatpush.bf16.msra.mxu0 %v818
  %2459 = vmatpush.bf16.msra.mxu0 %v814
  %2460 = vmatpush.bf16.msra.mxu0 %v810
  %2461 = vmatmul.bf16.gmra.mxu0 %v2374
  %v2462 = vpop.f32.mrf.mxu0
  %v2463 = vadd.f32 %v330, %v2462
  %v2464 = vpop.f32.mrf.mxu0
  %2465 = vdwg.mxu0
  %2466 = vmatpush.bf16.msra.mxu0 %v870
  %2467 = vmatpush.bf16.msra.mxu0 %v866
  %2468 = vmatpush.bf16.msra.mxu0 %v862
  %2469 = vmatpush.bf16.msra.mxu0 %v858
  %2470 = vmatpush.bf16.msra.mxu0 %v854
  %2471 = vmatpush.bf16.msra.mxu0 %v850
  %2472 = vmatpush.bf16.msra.mxu0 %v846
  %2473 = vmatpush.bf16.msra.mxu0 %v842
  %2474 = vmatmul.bf16.gmra.mxu0 %v2254
  %v2475 = vpop.f32.mrf.mxu0
  %v2476 = vadd.f32 %v2463, %v2475
  %v2477 = vpop.f32.mrf.mxu0
  %2478 = vdwg.mxu0
  %v2479 = vxor.u32 %v2398, 2147483648
  %v2480 = vmul.f32 %v2479, 1.442695
  %v2481 = vpow.pop %v2480
  %v2482 = vadd.f32 %v2481, 1.0
  %v2483 = vrcp.pop %v2482
  %v2484 = vmul.f32 %v2482, %v2483
  %v2485 = vsub.f32 1.0, %v2484
  %v2486 = vmul.f32 %v2483, %v2485
  %v2487 = vadd.f32 %v2483, %v2486
  %vm2488 = vweird.f32 %v2482
  %vm2489 = vweird.f32 %v2483
  %vm2490 = vmor %vm2488, %vm2489
  %v2491 = vsel %vm2490, %v2483, %v2487
  %v2492 = vand.u32 2147483647, %v2482
  %vm2493 = vcmp.eq.f32.partialorder %v2492, 8.507059e+37
  %v2494 = vand.u32 %v2482, 2147483648
  %v2495 = vor.u32 1.1754944e-38, %v2494
  %v2496 = vsel %vm2493, %v2495, %v2491
  %v2497 = vmul.f32 1.0, %v2496
  %v2498 = vxor.u32 %v2424, 2147483648
  %v2499 = vmul.f32 %v2498, 1.442695
  %v2500 = vpow.pop %v2499
  %v2501 = vadd.f32 %v2500, 1.0
  %v2502 = vrcp.pop %v2501
  %v2503 = vmul.f32 %v2501, %v2502
  %v2504 = vsub.f32 1.0, %v2503
  %v2505 = vmul.f32 %v2502, %v2504
  %v2506 = vadd.f32 %v2502, %v2505
  %vm2507 = vweird.f32 %v2501
  %vm2508 = vweird.f32 %v2502
  %vm2509 = vmor %vm2507, %vm2508
  %v2510 = vsel %vm2509, %v2502, %v2506
  %v2511 = vand.u32 2147483647, %v2501
  %vm2512 = vcmp.eq.f32.partialorder %v2511, 8.507059e+37
  %v2513 = vand.u32 %v2501, 2147483648
  %v2514 = vor.u32 1.1754944e-38, %v2513
  %v2515 = vsel %vm2512, %v2514, %v2510
  %v2516 = vmul.f32 1.0, %v2515
  %v2517 = vtanh.pop %v2450
  %v2518 = vxor.u32 %v2476, 2147483648
  %v2519 = vmul.f32 %v2518, 1.442695
  %v2520 = vpow.pop %v2519
  %v2521 = vadd.f32 %v2520, 1.0
  %v2522 = vrcp.pop %v2521
  %v2523 = vmul.f32 %v2521, %v2522
  %v2524 = vsub.f32 1.0, %v2523
  %v2525 = vmul.f32 %v2522, %v2524
  %v2526 = vadd.f32 %v2522, %v2525
  %vm2527 = vweird.f32 %v2521
  %vm2528 = vweird.f32 %v2522
  %vm2529 = vmor %vm2527, %vm2528
  %v2530 = vsel %vm2529, %v2522, %v2526
  %v2531 = vand.u32 2147483647, %v2521
  %vm2532 = vcmp.eq.f32.partialorder %v2531, 8.507059e+37
  %v2533 = vand.u32 %v2521, 2147483648
  %v2534 = vor.u32 1.1754944e-38, %v2533
  %v2535 = vsel %vm2532, %v2534, %v2530
  %v2536 = vmul.f32 1.0, %v2535
  %v2537 = vmul.f32 %v2516, %v2251
  %v2538 = vmul.f32 %v2497, %v2517
  %v2539 = vadd.f32 %v2537, %v2538
  %v2540 = vtanh.pop %v2539
  %v2541 = vmul.f32 %v2536, %v2540
  %v2542 = vpack.c.bf16 %v2541, %v2541
  %2543 = vmatpush.bf16.msra.mxu0 %v459
  %2544 = vmatpush.bf16.msra.mxu0 %v455
  %2545 = vmatpush.bf16.msra.mxu0 %v451
  %2546 = vmatpush.bf16.msra.mxu0 %v447
  %2547 = vmatpush.bf16.msra.mxu0 %v443
  %2548 = vmatpush.bf16.msra.mxu0 %v439
  %2549 = vmatpush.bf16.msra.mxu0 %v435
  %2550 = vmatpush.bf16.msra.mxu0 %v431
  %2551 = vmatmul.bf16.gmra.mxu0 %v2374
  %v2552 = vpop.f32.mrf.mxu0
  %v2553 = vadd.f32 0.0, %v2552
  %v2554 = vpop.f32.mrf.mxu0
  %2555 = vdwg.mxu0
  %2556 = vmatpush.bf16.msra.mxu0 %v460
  %2557 = vmatpush.bf16.msra.mxu0 %v456
  %2558 = vmatpush.bf16.msra.mxu0 %v452
  %2559 = vmatpush.bf16.msra.mxu0 %v448
  %2560 = vmatpush.bf16.msra.mxu0 %v444
  %2561 = vmatpush.bf16.msra.mxu0 %v440
  %2562 = vmatpush.bf16.msra.mxu0 %v436
  %2563 = vmatpush.bf16.msra.mxu0 %v432
  %2564 = vmatmul.bf16.gmra.mxu0 %v2374
  %v2565 = vpop.f32.mrf.mxu0
  %v2566 = vadd.f32 0.0, %v2565
  %v2567 = vpop.f32.mrf.mxu0
  %2568 = vdwg.mxu0
  %2569 = vmatpush.bf16.msra.mxu0 %v461
  %2570 = vmatpush.bf16.msra.mxu0 %v457
  %2571 = vmatpush.bf16.msra.mxu0 %v453
  %2572 = vmatpush.bf16.msra.mxu0 %v449
  %2573 = vmatpush.bf16.msra.mxu0 %v445
  %2574 = vmatpush.bf16.msra.mxu0 %v441
  %2575 = vmatpush.bf16.msra.mxu0 %v437
  %2576 = vmatpush.bf16.msra.mxu0 %v433
  %2577 = vmatmul.bf16.gmra.mxu0 %v2374
  %v2578 = vpop.f32.mrf.mxu0
  %v2579 = vadd.f32 0.0, %v2578
  %v2580 = vpop.f32.mrf.mxu0
  %2581 = vdwg.mxu0
  %2582 = vmatpush.bf16.msra.mxu0 %v462
  %2583 = vmatpush.bf16.msra.mxu0 %v458
  %2584 = vmatpush.bf16.msra.mxu0 %v454
  %2585 = vmatpush.bf16.msra.mxu0 %v450
  %2586 = vmatpush.bf16.msra.mxu0 %v446
  %2587 = vmatpush.bf16.msra.mxu0 %v442
  %2588 = vmatpush.bf16.msra.mxu0 %v438
  %2589 = vmatpush.bf16.msra.mxu0 %v434
  %2590 = vmatmul.bf16.gmra.mxu0 %v2374
  %v2591 = vpop.f32.mrf.mxu0
  %v2592 = vadd.f32 0.0, %v2591
  %v2593 = vpop.f32.mrf.mxu0
  %2594 = vdwg.mxu0
  %v2595 = vadd.f32 %v138, %v2553
  %v2596 = vadd.f32 %v167, %v2566
  %v2597 = vadd.f32 %v196, %v2579
  %v2598 = vadd.f32 %v225, %v2592
  %v2599 = vxor.u32 %v2595, 2147483648
  %v2600 = vmul.f32 %v2599, 1.442695
  %v2601 = vpow.pop %v2600
  %v2602 = vadd.f32 %v2601, 1.0
  %v2603 = vrcp.pop %v2602
  %v2604 = vmul.f32 %v2602, %v2603
  %v2605 = vsub.f32 1.0, %v2604
  %v2606 = vmul.f32 %v2603, %v2605
  %v2607 = vadd.f32 %v2603, %v2606
  %vm2608 = vweird.f32 %v2602
  %vm2609 = vweird.f32 %v2603
  %vm2610 = vmor %vm2608, %vm2609
  %v2611 = vsel %vm2610, %v2603, %v2607
  %v2612 = vand.u32 2147483647, %v2602
  %vm2613 = vcmp.eq.f32.partialorder %v2612, 8.507059e+37
  %v2614 = vand.u32 %v2602, 2147483648
  %v2615 = vor.u32 1.1754944e-38, %v2614
  %v2616 = vsel %vm2613, %v2615, %v2611
  %v2617 = vmul.f32 1.0, %v2616
  %v2618 = vxor.u32 %v2596, 2147483648
  %v2619 = vmul.f32 %v2618, 1.442695
  %v2620 = vpow.pop %v2619
  %v2621 = vadd.f32 %v2620, 1.0
  %v2622 = vrcp.pop %v2621
  %v2623 = vmul.f32 %v2621, %v2622
  %v2624 = vsub.f32 1.0, %v2623
  %v2625 = vmul.f32 %v2622, %v2624
  %v2626 = vadd.f32 %v2622, %v2625
  %vm2627 = vweird.f32 %v2621
  %vm2628 = vweird.f32 %v2622
  %vm2629 = vmor %vm2627, %vm2628
  %v2630 = vsel %vm2629, %v2622, %v2626
  %v2631 = vand.u32 2147483647, %v2621
  %vm2632 = vcmp.eq.f32.partialorder %v2631, 8.507059e+37
  %v2633 = vand.u32 %v2621, 2147483648
  %v2634 = vor.u32 1.1754944e-38, %v2633
  %v2635 = vsel %vm2632, %v2634, %v2630
  %v2636 = vmul.f32 1.0, %v2635
  %v2637 = vtanh.pop %v2597
  %v2638 = vxor.u32 %v2598, 2147483648
  %v2639 = vmul.f32 %v2638, 1.442695
  %v2640 = vpow.pop %v2639
  %v2641 = vadd.f32 %v2640, 1.0
  %v2642 = vrcp.pop %v2641
  %v2643 = vmul.f32 %v2641, %v2642
  %v2644 = vsub.f32 1.0, %v2643
  %v2645 = vmul.f32 %v2642, %v2644
  %v2646 = vadd.f32 %v2642, %v2645
  %vm2647 = vweird.f32 %v2641
  %vm2648 = vweird.f32 %v2642
  %vm2649 = vmor %vm2647, %vm2648
  %v2650 = vsel %vm2649, %v2642, %v2646
  %v2651 = vand.u32 2147483647, %v2641
  %vm2652 = vcmp.eq.f32.partialorder %v2651, 8.507059e+37
  %v2653 = vand.u32 %v2641, 2147483648
  %v2654 = vor.u32 1.1754944e-38, %v2653
  %v2655 = vsel %vm2652, %v2654, %v2650
  %v2656 = vmul.f32 1.0, %v2655
  %v2657 = vmul.f32 %v2636, %v2371
  %v2658 = vmul.f32 %v2617, %v2637
  %v2659 = vadd.f32 %v2657, %v2658
  %v2660 = vtanh.pop %v2659
  %v2661 = vmul.f32 %v2656, %v2660
  %v2662 = vpack.c.bf16 %v2661, %v2661
  %2663 = vmatpush.bf16.msra.mxu0 %v835
  %2664 = vmatpush.bf16.msra.mxu0 %v831
  %2665 = vmatpush.bf16.msra.mxu0 %v827
  %2666 = vmatpush.bf16.msra.mxu0 %v823
  %2667 = vmatpush.bf16.msra.mxu0 %v819
  %2668 = vmatpush.bf16.msra.mxu0 %v815
  %2669 = vmatpush.bf16.msra.mxu0 %v811
  %2670 = vmatpush.bf16.msra.mxu0 %v807
  %2671 = vmatmul.bf16.gmra.mxu0 %v2662
  %v2672 = vpop.f32.mrf.mxu0
  %v2673 = vadd.f32 %v327, %v2672
  %v2674 = vpop.f32.mrf.mxu0
  %2675 = vdwg.mxu0
  %2676 = vmatpush.bf16.msra.mxu0 %v867
  %2677 = vmatpush.bf16.msra.mxu0 %v863
  %2678 = vmatpush.bf16.msra.mxu0 %v859
  %2679 = vmatpush.bf16.msra.mxu0 %v855
  %2680 = vmatpush.bf16.msra.mxu0 %v851
  %2681 = vmatpush.bf16.msra.mxu0 %v847
  %2682 = vmatpush.bf16.msra.mxu0 %v843
  %2683 = vmatpush.bf16.msra.mxu0 %v839
  %2684 = vmatmul.bf16.gmra.mxu0 %v2542
  %v2685 = vpop.f32.mrf.mxu0
  %v2686 = vadd.f32 %v2673, %v2685
  %v2687 = vpop.f32.mrf.mxu0
  %2688 = vdwg.mxu0
  %2689 = vmatpush.bf16.msra.mxu0 %v836
  %2690 = vmatpush.bf16.msra.mxu0 %v832
  %2691 = vmatpush.bf16.msra.mxu0 %v828
  %2692 = vmatpush.bf16.msra.mxu0 %v824
  %2693 = vmatpush.bf16.msra.mxu0 %v820
  %2694 = vmatpush.bf16.msra.mxu0 %v816
  %2695 = vmatpush.bf16.msra.mxu0 %v812
  %2696 = vmatpush.bf16.msra.mxu0 %v808
  %2697 = vmatmul.bf16.gmra.mxu0 %v2662
  %v2698 = vpop.f32.mrf.mxu0
  %v2699 = vadd.f32 %v328, %v2698
  %v2700 = vpop.f32.mrf.mxu0
  %2701 = vdwg.mxu0
  %2702 = vmatpush.bf16.msra.mxu0 %v868
  %2703 = vmatpush.bf16.msra.mxu0 %v864
  %2704 = vmatpush.bf16.msra.mxu0 %v860
  %2705 = vmatpush.bf16.msra.mxu0 %v856
  %2706 = vmatpush.bf16.msra.mxu0 %v852
  %2707 = vmatpush.bf16.msra.mxu0 %v848
  %2708 = vmatpush.bf16.msra.mxu0 %v844
  %2709 = vmatpush.bf16.msra.mxu0 %v840
  %2710 = vmatmul.bf16.gmra.mxu0 %v2542
  %v2711 = vpop.f32.mrf.mxu0
  %v2712 = vadd.f32 %v2699, %v2711
  %v2713 = vpop.f32.mrf.mxu0
  %2714 = vdwg.mxu0
  %2715 = vmatpush.bf16.msra.mxu0 %v837
  %2716 = vmatpush.bf16.msra.mxu0 %v833
  %2717 = vmatpush.bf16.msra.mxu0 %v829
  %2718 = vmatpush.bf16.msra.mxu0 %v825
  %2719 = vmatpush.bf16.msra.mxu0 %v821
  %2720 = vmatpush.bf16.msra.mxu0 %v817
  %2721 = vmatpush.bf16.msra.mxu0 %v813
  %2722 = vmatpush.bf16.msra.mxu0 %v809
  %2723 = vmatmul.bf16.gmra.mxu0 %v2662
  %v2724 = vpop.f32.mrf.mxu0
  %v2725 = vadd.f32 %v329, %v2724
  %v2726 = vpop.f32.mrf.mxu0
  %2727 = vdwg.mxu0
  %2728 = vmatpush.bf16.msra.mxu0 %v869
  %2729 = vmatpush.bf16.msra.mxu0 %v865
  %2730 = vmatpush.bf16.msra.mxu0 %v861
  %2731 = vmatpush.bf16.msra.mxu0 %v857
  %2732 = vmatpush.bf16.msra.mxu0 %v853
  %2733 = vmatpush.bf16.msra.mxu0 %v849
  %2734 = vmatpush.bf16.msra.mxu0 %v845
  %2735 = vmatpush.bf16.msra.mxu0 %v841
  %2736 = vmatmul.bf16.gmra.mxu0 %v2542
  %v2737 = vpop.f32.mrf.mxu0
  %v2738 = vadd.f32 %v2725, %v2737
  %v2739 = vpop.f32.mrf.mxu0
  %2740 = vdwg.mxu0
  %2741 = vmatpush.bf16.msra.mxu0 %v838
  %2742 = vmatpush.bf16.msra.mxu0 %v834
  %2743 = vmatpush.bf16.msra.mxu0 %v830
  %2744 = vmatpush.bf16.msra.mxu0 %v826
  %2745 = vmatpush.bf16.msra.mxu0 %v822
  %2746 = vmatpush.bf16.msra.mxu0 %v818
  %2747 = vmatpush.bf16.msra.mxu0 %v814
  %2748 = vmatpush.bf16.msra.mxu0 %v810
  %2749 = vmatmul.bf16.gmra.mxu0 %v2662
  %v2750 = vpop.f32.mrf.mxu0
  %v2751 = vadd.f32 %v330, %v2750
  %v2752 = vpop.f32.mrf.mxu0
  %2753 = vdwg.mxu0
  %2754 = vmatpush.bf16.msra.mxu0 %v870
  %2755 = vmatpush.bf16.msra.mxu0 %v866
  %2756 = vmatpush.bf16.msra.mxu0 %v862
  %2757 = vmatpush.bf16.msra.mxu0 %v858
  %2758 = vmatpush.bf16.msra.mxu0 %v854
  %2759 = vmatpush.bf16.msra.mxu0 %v850
  %2760 = vmatpush.bf16.msra.mxu0 %v846
  %2761 = vmatpush.bf16.msra.mxu0 %v842
  %2762 = vmatmul.bf16.gmra.mxu0 %v2542
  %v2763 = vpop.f32.mrf.mxu0
  %v2764 = vadd.f32 %v2751, %v2763
  %v2765 = vpop.f32.mrf.mxu0
  %2766 = vdwg.mxu0
  %v2767 = vxor.u32 %v2686, 2147483648
  %v2768 = vmul.f32 %v2767, 1.442695
  %v2769 = vpow.pop %v2768
  %v2770 = vadd.f32 %v2769, 1.0
  %v2771 = vrcp.pop %v2770
  %v2772 = vmul.f32 %v2770, %v2771
  %v2773 = vsub.f32 1.0, %v2772
  %v2774 = vmul.f32 %v2771, %v2773
  %v2775 = vadd.f32 %v2771, %v2774
  %vm2776 = vweird.f32 %v2770
  %vm2777 = vweird.f32 %v2771
  %vm2778 = vmor %vm2776, %vm2777
  %v2779 = vsel %vm2778, %v2771, %v2775
  %v2780 = vand.u32 2147483647, %v2770
  %vm2781 = vcmp.eq.f32.partialorder %v2780, 8.507059e+37
  %v2782 = vand.u32 %v2770, 2147483648
  %v2783 = vor.u32 1.1754944e-38, %v2782
  %v2784 = vsel %vm2781, %v2783, %v2779
  %v2785 = vmul.f32 1.0, %v2784
  %v2786 = vxor.u32 %v2712, 2147483648
  %v2787 = vmul.f32 %v2786, 1.442695
  %v2788 = vpow.pop %v2787
  %v2789 = vadd.f32 %v2788, 1.0
  %v2790 = vrcp.pop %v2789
  %v2791 = vmul.f32 %v2789, %v2790
  %v2792 = vsub.f32 1.0, %v2791
  %v2793 = vmul.f32 %v2790, %v2792
  %v2794 = vadd.f32 %v2790, %v2793
  %vm2795 = vweird.f32 %v2789
  %vm2796 = vweird.f32 %v2790
  %vm2797 = vmor %vm2795, %vm2796
  %v2798 = vsel %vm2797, %v2790, %v2794
  %v2799 = vand.u32 2147483647, %v2789
  %vm2800 = vcmp.eq.f32.partialorder %v2799, 8.507059e+37
  %v2801 = vand.u32 %v2789, 2147483648
  %v2802 = vor.u32 1.1754944e-38, %v2801
  %v2803 = vsel %vm2800, %v2802, %v2798
  %v2804 = vmul.f32 1.0, %v2803
  %v2805 = vtanh.pop %v2738
  %v2806 = vxor.u32 %v2764, 2147483648
  %v2807 = vmul.f32 %v2806, 1.442695
  %v2808 = vpow.pop %v2807
  %v2809 = vadd.f32 %v2808, 1.0
  %v2810 = vrcp.pop %v2809
  %v2811 = vmul.f32 %v2809, %v2810
  %v2812 = vsub.f32 1.0, %v2811
  %v2813 = vmul.f32 %v2810, %v2812
  %v2814 = vadd.f32 %v2810, %v2813
  %vm2815 = vweird.f32 %v2809
  %vm2816 = vweird.f32 %v2810
  %vm2817 = vmor %vm2815, %vm2816
  %v2818 = vsel %vm2817, %v2810, %v2814
  %v2819 = vand.u32 2147483647, %v2809
  %vm2820 = vcmp.eq.f32.partialorder %v2819, 8.507059e+37
  %v2821 = vand.u32 %v2809, 2147483648
  %v2822 = vor.u32 1.1754944e-38, %v2821
  %v2823 = vsel %vm2820, %v2822, %v2818
  %v2824 = vmul.f32 1.0, %v2823
  %v2825 = vmul.f32 %v2804, %v2539
  %v2826 = vmul.f32 %v2785, %v2805
  %v2827 = vadd.f32 %v2825, %v2826
  %v2828 = vtanh.pop %v2827
  %v2829 = vmul.f32 %v2824, %v2828
  %v2830 = vpack.c.bf16 %v2829, %v2829
  %2831 = vmatpush.bf16.msra.mxu0 %v459
  %2832 = vmatpush.bf16.msra.mxu0 %v455
  %2833 = vmatpush.bf16.msra.mxu0 %v451
  %2834 = vmatpush.bf16.msra.mxu0 %v447
  %2835 = vmatpush.bf16.msra.mxu0 %v443
  %2836 = vmatpush.bf16.msra.mxu0 %v439
  %2837 = vmatpush.bf16.msra.mxu0 %v435
  %2838 = vmatpush.bf16.msra.mxu0 %v431
  %2839 = vmatmul.bf16.gmra.mxu0 %v2662
  %v2840 = vpop.f32.mrf.mxu0
  %v2841 = vadd.f32 0.0, %v2840
  %v2842 = vpop.f32.mrf.mxu0
  %2843 = vdwg.mxu0
  %2844 = vmatpush.bf16.msra.mxu0 %v460
  %2845 = vmatpush.bf16.msra.mxu0 %v456
  %2846 = vmatpush.bf16.msra.mxu0 %v452
  %2847 = vmatpush.bf16.msra.mxu0 %v448
  %2848 = vmatpush.bf16.msra.mxu0 %v444
  %2849 = vmatpush.bf16.msra.mxu0 %v440
  %2850 = vmatpush.bf16.msra.mxu0 %v436
  %2851 = vmatpush.bf16.msra.mxu0 %v432
  %2852 = vmatmul.bf16.gmra.mxu0 %v2662
  %v2853 = vpop.f32.mrf.mxu0
  %v2854 = vadd.f32 0.0, %v2853
  %v2855 = vpop.f32.mrf.mxu0
  %2856 = vdwg.mxu0
  %2857 = vmatpush.bf16.msra.mxu0 %v461
  %2858 = vmatpush.bf16.msra.mxu0 %v457
  %2859 = vmatpush.bf16.msra.mxu0 %v453
  %2860 = vmatpush.bf16.msra.mxu0 %v449
  %2861 = vmatpush.bf16.msra.mxu0 %v445
  %2862 = vmatpush.bf16.msra.mxu0 %v441
  %2863 = vmatpush.bf16.msra.mxu0 %v437
  %2864 = vmatpush.bf16.msra.mxu0 %v433
  %2865 = vmatmul.bf16.gmra.mxu0 %v2662
  %v2866 = vpop.f32.mrf.mxu0
  %v2867 = vadd.f32 0.0, %v2866
  %v2868 = vpop.f32.mrf.mxu0
  %2869 = vdwg.mxu0
  %2870 = vmatpush.bf16.msra.mxu0 %v462
  %2871 = vmatpush.bf16.msra.mxu0 %v458
  %2872 = vmatpush.bf16.msra.mxu0 %v454
  %2873 = vmatpush.bf16.msra.mxu0 %v450
  %2874 = vmatpush.bf16.msra.mxu0 %v446
  %2875 = vmatpush.bf16.msra.mxu0 %v442
  %2876 = vmatpush.bf16.msra.mxu0 %v438
  %2877 = vmatpush.bf16.msra.mxu0 %v434
  %2878 = vmatmul.bf16.gmra.mxu0 %v2662
  %v2879 = vpop.f32.mrf.mxu0
  %v2880 = vadd.f32 0.0, %v2879
  %v2881 = vpop.f32.mrf.mxu0
  %2882 = vdwg.mxu0
  %v2883 = vadd.f32 %v140, %v2841
  %v2884 = vadd.f32 %v169, %v2854
  %v2885 = vadd.f32 %v198, %v2867
  %v2886 = vadd.f32 %v227, %v2880
  %v2887 = vxor.u32 %v2883, 2147483648
  %v2888 = vmul.f32 %v2887, 1.442695
  %v2889 = vpow.pop %v2888
  %v2890 = vadd.f32 %v2889, 1.0
  %v2891 = vrcp.pop %v2890
  %v2892 = vmul.f32 %v2890, %v2891
  %v2893 = vsub.f32 1.0, %v2892
  %v2894 = vmul.f32 %v2891, %v2893
  %v2895 = vadd.f32 %v2891, %v2894
  %vm2896 = vweird.f32 %v2890
  %vm2897 = vweird.f32 %v2891
  %vm2898 = vmor %vm2896, %vm2897
  %v2899 = vsel %vm2898, %v2891, %v2895
  %v2900 = vand.u32 2147483647, %v2890
  %vm2901 = vcmp.eq.f32.partialorder %v2900, 8.507059e+37
  %v2902 = vand.u32 %v2890, 2147483648
  %v2903 = vor.u32 1.1754944e-38, %v2902
  %v2904 = vsel %vm2901, %v2903, %v2899
  %v2905 = vmul.f32 1.0, %v2904
  %v2906 = vxor.u32 %v2884, 2147483648
  %v2907 = vmul.f32 %v2906, 1.442695
  %v2908 = vpow.pop %v2907
  %v2909 = vadd.f32 %v2908, 1.0
  %v2910 = vrcp.pop %v2909
  %v2911 = vmul.f32 %v2909, %v2910
  %v2912 = vsub.f32 1.0, %v2911
  %v2913 = vmul.f32 %v2910, %v2912
  %v2914 = vadd.f32 %v2910, %v2913
  %vm2915 = vweird.f32 %v2909
  %vm2916 = vweird.f32 %v2910
  %vm2917 = vmor %vm2915, %vm2916
  %v2918 = vsel %vm2917, %v2910, %v2914
  %v2919 = vand.u32 2147483647, %v2909
  %vm2920 = vcmp.eq.f32.partialorder %v2919, 8.507059e+37
  %v2921 = vand.u32 %v2909, 2147483648
  %v2922 = vor.u32 1.1754944e-38, %v2921
  %v2923 = vsel %vm2920, %v2922, %v2918
  %v2924 = vmul.f32 1.0, %v2923
  %v2925 = vtanh.pop %v2885
  %v2926 = vxor.u32 %v2886, 2147483648
  %v2927 = vmul.f32 %v2926, 1.442695
  %v2928 = vpow.pop %v2927
  %v2929 = vadd.f32 %v2928, 1.0
  %v2930 = vrcp.pop %v2929
  %v2931 = vmul.f32 %v2929, %v2930
  %v2932 = vsub.f32 1.0, %v2931
  %v2933 = vmul.f32 %v2930, %v2932
  %v2934 = vadd.f32 %v2930, %v2933
  %vm2935 = vweird.f32 %v2929
  %vm2936 = vweird.f32 %v2930
  %vm2937 = vmor %vm2935, %vm2936
  %v2938 = vsel %vm2937, %v2930, %v2934
  %v2939 = vand.u32 2147483647, %v2929
  %vm2940 = vcmp.eq.f32.partialorder %v2939, 8.507059e+37
  %v2941 = vand.u32 %v2929, 2147483648
  %v2942 = vor.u32 1.1754944e-38, %v2941
  %v2943 = vsel %vm2940, %v2942, %v2938
  %v2944 = vmul.f32 1.0, %v2943
  %v2945 = vmul.f32 %v2924, %v2659
  %v2946 = vmul.f32 %v2905, %v2925
  %v2947 = vadd.f32 %v2945, %v2946
  %v2948 = vtanh.pop %v2947
  %v2949 = vmul.f32 %v2944, %v2948
  %v2950 = vpack.c.bf16 %v2949, %v2949
  %2951 = vmatpush.bf16.msra.mxu0 %v835
  %2952 = vmatpush.bf16.msra.mxu0 %v831
  %2953 = vmatpush.bf16.msra.mxu0 %v827
  %2954 = vmatpush.bf16.msra.mxu0 %v823
  %2955 = vmatpush.bf16.msra.mxu0 %v819
  %2956 = vmatpush.bf16.msra.mxu0 %v815
  %2957 = vmatpush.bf16.msra.mxu0 %v811
  %2958 = vmatpush.bf16.msra.mxu0 %v807
  %2959 = vmatmul.bf16.gmra.mxu0 %v2950
  %v2960 = vpop.f32.mrf.mxu0
  %v2961 = vadd.f32 %v327, %v2960
  %v2962 = vpop.f32.mrf.mxu0
  %2963 = vdwg.mxu0
  %2964 = vmatpush.bf16.msra.mxu0 %v867
  %2965 = vmatpush.bf16.msra.mxu0 %v863
  %2966 = vmatpush.bf16.msra.mxu0 %v859
  %2967 = vmatpush.bf16.msra.mxu0 %v855
  %2968 = vmatpush.bf16.msra.mxu0 %v851
  %2969 = vmatpush.bf16.msra.mxu0 %v847
  %2970 = vmatpush.bf16.msra.mxu0 %v843
  %2971 = vmatpush.bf16.msra.mxu0 %v839
  %2972 = vmatmul.bf16.gmra.mxu0 %v2830
  %v2973 = vpop.f32.mrf.mxu0
  %v2974 = vadd.f32 %v2961, %v2973
  %v2975 = vpop.f32.mrf.mxu0
  %2976 = vdwg.mxu0
  %2977 = vmatpush.bf16.msra.mxu0 %v836
  %2978 = vmatpush.bf16.msra.mxu0 %v832
  %2979 = vmatpush.bf16.msra.mxu0 %v828
  %2980 = vmatpush.bf16.msra.mxu0 %v824
  %2981 = vmatpush.bf16.msra.mxu0 %v820
  %2982 = vmatpush.bf16.msra.mxu0 %v816
  %2983 = vmatpush.bf16.msra.mxu0 %v812
  %2984 = vmatpush.bf16.msra.mxu0 %v808
  %2985 = vmatmul.bf16.gmra.mxu0 %v2950
  %v2986 = vpop.f32.mrf.mxu0
  %v2987 = vadd.f32 %v328, %v2986
  %v2988 = vpop.f32.mrf.mxu0
  %2989 = vdwg.mxu0
  %2990 = vmatpush.bf16.msra.mxu0 %v868
  %2991 = vmatpush.bf16.msra.mxu0 %v864
  %2992 = vmatpush.bf16.msra.mxu0 %v860
  %2993 = vmatpush.bf16.msra.mxu0 %v856
  %2994 = vmatpush.bf16.msra.mxu0 %v852
  %2995 = vmatpush.bf16.msra.mxu0 %v848
  %2996 = vmatpush.bf16.msra.mxu0 %v844
  %2997 = vmatpush.bf16.msra.mxu0 %v840
  %2998 = vmatmul.bf16.gmra.mxu0 %v2830
  %v2999 = vpop.f32.mrf.mxu0
  %v3000 = vadd.f32 %v2987, %v2999
  %v3001 = vpop.f32.mrf.mxu0
  %3002 = vdwg.mxu0
  %3003 = vmatpush.bf16.msra.mxu0 %v837
  %3004 = vmatpush.bf16.msra.mxu0 %v833
  %3005 = vmatpush.bf16.msra.mxu0 %v829
  %3006 = vmatpush.bf16.msra.mxu0 %v825
  %3007 = vmatpush.bf16.msra.mxu0 %v821
  %3008 = vmatpush.bf16.msra.mxu0 %v817
  %3009 = vmatpush.bf16.msra.mxu0 %v813
  %3010 = vmatpush.bf16.msra.mxu0 %v809
  %3011 = vmatmul.bf16.gmra.mxu0 %v2950
  %v3012 = vpop.f32.mrf.mxu0
  %v3013 = vadd.f32 %v329, %v3012
  %v3014 = vpop.f32.mrf.mxu0
  %3015 = vdwg.mxu0
  %3016 = vmatpush.bf16.msra.mxu0 %v869
  %3017 = vmatpush.bf16.msra.mxu0 %v865
  %3018 = vmatpush.bf16.msra.mxu0 %v861
  %3019 = vmatpush.bf16.msra.mxu0 %v857
  %3020 = vmatpush.bf16.msra.mxu0 %v853
  %3021 = vmatpush.bf16.msra.mxu0 %v849
  %3022 = vmatpush.bf16.msra.mxu0 %v845
  %3023 = vmatpush.bf16.msra.mxu0 %v841
  %3024 = vmatmul.bf16.gmra.mxu0 %v2830
  %v3025 = vpop.f32.mrf.mxu0
  %v3026 = vadd.f32 %v3013, %v3025
  %v3027 = vpop.f32.mrf.mxu0
  %3028 = vdwg.mxu0
  %3029 = vmatpush.bf16.msra.mxu0 %v838
  %3030 = vmatpush.bf16.msra.mxu0 %v834
  %3031 = vmatpush.bf16.msra.mxu0 %v830
  %3032 = vmatpush.bf16.msra.mxu0 %v826
  %3033 = vmatpush.bf16.msra.mxu0 %v822
  %3034 = vmatpush.bf16.msra.mxu0 %v818
  %3035 = vmatpush.bf16.msra.mxu0 %v814
  %3036 = vmatpush.bf16.msra.mxu0 %v810
  %3037 = vmatmul.bf16.gmra.mxu0 %v2950
  %v3038 = vpop.f32.mrf.mxu0
  %v3039 = vadd.f32 %v330, %v3038
  %v3040 = vpop.f32.mrf.mxu0
  %3041 = vdwg.mxu0
  %3042 = vmatpush.bf16.msra.mxu0 %v870
  %3043 = vmatpush.bf16.msra.mxu0 %v866
  %3044 = vmatpush.bf16.msra.mxu0 %v862
  %3045 = vmatpush.bf16.msra.mxu0 %v858
  %3046 = vmatpush.bf16.msra.mxu0 %v854
  %3047 = vmatpush.bf16.msra.mxu0 %v850
  %3048 = vmatpush.bf16.msra.mxu0 %v846
  %3049 = vmatpush.bf16.msra.mxu0 %v842
  %3050 = vmatmul.bf16.gmra.mxu0 %v2830
  %v3051 = vpop.f32.mrf.mxu0
  %v3052 = vadd.f32 %v3039, %v3051
  %v3053 = vpop.f32.mrf.mxu0
  %3054 = vdwg.mxu0
  %v3055 = vxor.u32 %v2974, 2147483648
  %v3056 = vmul.f32 %v3055, 1.442695
  %v3057 = vpow.pop %v3056
  %v3058 = vadd.f32 %v3057, 1.0
  %v3059 = vrcp.pop %v3058
  %v3060 = vmul.f32 %v3058, %v3059
  %v3061 = vsub.f32 1.0, %v3060
  %v3062 = vmul.f32 %v3059, %v3061
  %v3063 = vadd.f32 %v3059, %v3062
  %vm3064 = vweird.f32 %v3058
  %vm3065 = vweird.f32 %v3059
  %vm3066 = vmor %vm3064, %vm3065
  %v3067 = vsel %vm3066, %v3059, %v3063
  %v3068 = vand.u32 2147483647, %v3058
  %vm3069 = vcmp.eq.f32.partialorder %v3068, 8.507059e+37
  %v3070 = vand.u32 %v3058, 2147483648
  %v3071 = vor.u32 1.1754944e-38, %v3070
  %v3072 = vsel %vm3069, %v3071, %v3067
  %v3073 = vmul.f32 1.0, %v3072
  %v3074 = vxor.u32 %v3000, 2147483648
  %v3075 = vmul.f32 %v3074, 1.442695
  %v3076 = vpow.pop %v3075
  %v3077 = vadd.f32 %v3076, 1.0
  %v3078 = vrcp.pop %v3077
  %v3079 = vmul.f32 %v3077, %v3078
  %v3080 = vsub.f32 1.0, %v3079
  %v3081 = vmul.f32 %v3078, %v3080
  %v3082 = vadd.f32 %v3078, %v3081
  %vm3083 = vweird.f32 %v3077
  %vm3084 = vweird.f32 %v3078
  %vm3085 = vmor %vm3083, %vm3084
  %v3086 = vsel %vm3085, %v3078, %v3082
  %v3087 = vand.u32 2147483647, %v3077
  %vm3088 = vcmp.eq.f32.partialorder %v3087, 8.507059e+37
  %v3089 = vand.u32 %v3077, 2147483648
  %v3090 = vor.u32 1.1754944e-38, %v3089
  %v3091 = vsel %vm3088, %v3090, %v3086
  %v3092 = vmul.f32 1.0, %v3091
  %v3093 = vtanh.pop %v3026
  %v3094 = vxor.u32 %v3052, 2147483648
  %v3095 = vmul.f32 %v3094, 1.442695
  %v3096 = vpow.pop %v3095
  %v3097 = vadd.f32 %v3096, 1.0
  %v3098 = vrcp.pop %v3097
  %v3099 = vmul.f32 %v3097, %v3098
  %v3100 = vsub.f32 1.0, %v3099
  %v3101 = vmul.f32 %v3098, %v3100
  %v3102 = vadd.f32 %v3098, %v3101
  %vm3103 = vweird.f32 %v3097
  %vm3104 = vweird.f32 %v3098
  %vm3105 = vmor %vm3103, %vm3104
  %v3106 = vsel %vm3105, %v3098, %v3102
  %v3107 = vand.u32 2147483647, %v3097
  %vm3108 = vcmp.eq.f32.partialorder %v3107, 8.507059e+37
  %v3109 = vand.u32 %v3097, 2147483648
  %v3110 = vor.u32 1.1754944e-38, %v3109
  %v3111 = vsel %vm3108, %v3110, %v3106
  %v3112 = vmul.f32 1.0, %v3111
  %v3113 = vmul.f32 %v3092, %v2827
  %v3114 = vmul.f32 %v3073, %v3093
  %v3115 = vadd.f32 %v3113, %v3114
  %v3116 = vtanh.pop %v3115
  %v3117 = vmul.f32 %v3112, %v3116
  %v3118 = vld [vmem:[%s6] sm:$0xf]
  %v3119 = vld [vmem:[%s6 + $0x4] sm:$0xf]
  %v3120 = vld [vmem:[%s6 + $0x8] sm:$0xf]
  %v3121 = vld [vmem:[%s6 + $0xc] sm:$0xf]
  %v3122 = vld [vmem:[%s6 + $0x10] sm:$0xf]
  %v3123 = vld [vmem:[%s6 + $0x14] sm:$0xf]
  %v3124 = vld [vmem:[%s6 + $0x18] sm:$0xf]
  %v3125 = vld [vmem:[%s6 + $0x1c] sm:$0xf]
  %v3126 = vld [vmem:[%s6 + $0x20] sm:$0xf]
  %v3127 = vld [vmem:[%s6 + $0x24] sm:$0xf]
  %v3128 = vld [vmem:[%s6 + $0x28] sm:$0xf]
  %v3129 = vld [vmem:[%s6 + $0x2c] sm:$0xf]
  %v3130 = vld [vmem:[%s6 + $0x30] sm:$0xf]
  %v3131 = vld [vmem:[%s6 + $0x34] sm:$0xf]
  %v3132 = vld [vmem:[%s6 + $0x38] sm:$0xf]
  %v3133 = vld [vmem:[%s6 + $0x3c] sm:$0xf]
  %v3134 = vpack.c.bf16 %v3117, %v3117
  %v3135 = vld [vmem:[%s7] sm:$0x1]
  %v3137 = vperm.slane %v3135, 0
  %v3155 = vunpack.c.l.b16 %v3118
  %v3156 = vunpack.c.l.b16 %v3119
  %v3157 = vunpack.c.l.b16 %v3120
  %v3158 = vunpack.c.l.b16 %v3121
  %v3159 = vunpack.c.l.b16 %v3122
  %v3160 = vunpack.c.l.b16 %v3123
  %v3161 = vunpack.c.l.b16 %v3124
  %v3162 = vunpack.c.l.b16 %v3125
  %v3163 = vunpack.c.l.b16 %v3126
  %v3164 = vunpack.c.l.b16 %v3127
  %v3165 = vunpack.c.l.b16 %v3128
  %v3166 = vunpack.c.l.b16 %v3129
  %v3167 = vunpack.c.l.b16 %v3130
  %v3168 = vunpack.c.l.b16 %v3131
  %v3169 = vunpack.c.l.b16 %v3132
  %v3170 = vunpack.c.l.b16 %v3133
  %v3171 = vpack.c.b16 %v3156, %v3155
  %v3172 = vpack.c.b16 %v3158, %v3157
  %v3173 = vpack.c.b16 %v3160, %v3159
  %v3174 = vpack.c.b16 %v3162, %v3161
  %v3175 = vpack.c.b16 %v3164, %v3163
  %v3176 = vpack.c.b16 %v3166, %v3165
  %v3177 = vpack.c.b16 %v3168, %v3167
  %v3178 = vpack.c.b16 %v3170, %v3169
  %3187 = vmatpush.bf16.msra.mxu0 %v3178
  %3188 = vmatpush.bf16.msra.mxu0 %v3177
  %3189 = vmatpush.bf16.msra.mxu0 %v3176
  %3190 = vmatpush.bf16.msra.mxu0 %v3175
  %3191 = vmatpush.bf16.msra.mxu0 %v3174
  %3192 = vmatpush.bf16.msra.mxu0 %v3173
  %3193 = vmatpush.bf16.msra.mxu0 %v3172
  %3194 = vmatpush.bf16.msra.mxu0 %v3171
  %3195 = vmatmul.bf16.gmra.mxu0 %v3134
  %v3196 = vpop.f32.mrf.mxu0
  %v3197 = vadd.f32 %v3137, %v3196
  %v3198 = vpop.f32.mrf.mxu0
  %3199 = vdwg.mxu0
  %vm3200 = vcmask 261120
  %v3201 = vsel %vm3200, %v3197, 0.0
  %3202 = vadd.xlane.f32.xlu0 %v3201
  %v3203 = vpop.xlane.xlu0 %3202
  %v3204 = vrcp.pop 32.0
  %v3205 = vmul.f32 32.0, %v3204
  %v3206 = vsub.f32 1.0, %v3205
  %v3207 = vmul.f32 %v3204, %v3206
  %v3208 = vadd.f32 %v3204, %v3207
  %vm3209 = vweird.f32 %v3204
  %v3210 = vsel %vm3209, %v3204, %v3208
  %v3211 = vmul.f32 %v3203, %v3210
  %v3212 = vsub.f32 %v3197, %v3211
  %v3213 = vmul.f32 %v3212, %v3212
  %v3214 = vsel %vm3200, %v3213, 0.0
  %3215 = vadd.xlane.f32.xlu0 %v3214
  %v3216 = vpop.xlane.xlu0 %3215
  %v3217 = vmul.f32 %v3216, %v3210
  %v3218 = vadd.f32 %v3217, 1e-05
  %v3219 = vrsqrt.pop %v3218
  %v3220 = vmul.f32 %v3219, %v3218
  %v3221 = vmul.f32 %v3220, %v3219
  %v3222 = vmul.f32 0.5, %v3221
  %v3223 = vsub.f32 1.5, %v3222
  %v3224 = vmul.f32 %v3219, %v3223
  %vm3225 = vweird.f32 %v3218
  %vm3226 = vweird.f32 %v3219
  %vm3227 = vmor %vm3225, %vm3226
  %v3228 = vsel %vm3227, %v3219, %v3224
  %v3229 = vmul.f32 %v3212, %v3228
  %v3230 = vld [vmem:[%s8] sm:$0x1]
  %v3232 = vperm.slane %v3230, 0
  %v3234 = vmul.f32 %v3229, %v3232
  %v3235 = vld [vmem:[%s9] sm:$0x1]
  %v3237 = vperm.slane %v3235, 0
  %v3239 = vadd.f32 %v3234, %v3237
  %vm3240 = vcmp.gt.f32.partialorder %v3239, 0.0
  %v3241 = vmul.f32 %v3239, 0.01
  %v3242 = vsel %vm3240, %v3239, %v3241
  %v3243 = vld [vmem:[%s10] sm:$0xf]
  %v3244 = vld [vmem:[%s10 + $0x4] sm:$0xf]
  %v3245 = vld [vmem:[%s10 + $0x8] sm:$0xf]
  %v3246 = vld [vmem:[%s10 + $0xc] sm:$0xf]
  %v3247 = vpack.c.bf16 %v3242, %v3242
  %v3248 = vld [vmem:[%s11] sm:$0x1]
  %v3250 = vperm.slane %v3248, 0
  %v3256 = vunpack.c.l.b16 %v3243
  %v3257 = vunpack.c.l.b16 %v3244
  %v3258 = vunpack.c.l.b16 %v3245
  %v3259 = vunpack.c.l.b16 %v3246
  %v3260 = vpack.c.b16 %v3257, %v3256
  %v3261 = vpack.c.b16 %v3259, %v3258
  %v3265 = vsel %vm3200, %v3247, 0
  %3267 = vmatpush.bf16.msra.mxu0 0
  %3268 = vmatpush.bf16.msra.mxu0 0
  %3269 = vmatpush.bf16.msra.mxu0 0
  %3270 = vmatpush.bf16.msra.mxu0 0
  %3271 = vmatpush.bf16.msra.mxu0 0
  %3272 = vmatpush.bf16.msra.mxu0 0
  %3273 = vmatpush.bf16.msra.mxu0 %v3261
  %3274 = vmatpush.bf16.msra.mxu0 %v3260
  %3275 = vmatmul.bf16.gmra.mxu0 %v3265
  %v3276 = vpop.f32.mrf.mxu0
  %v3277 = vadd.f32 %v3250, %v3276
  %v3278 = vpop.f32.mrf.mxu0
  %3279 = vdwg.mxu0
  %vm3280 = vcmp.gt.f32.partialorder %v3277, 0.0
  %v3281 = vmul.f32 %v3277, 0.01
  %v3282 = vsel %vm3280, %v3277, %v3281
  %v3283 = vld [vmem:[%s12] sm:$0xf]
  %v3284 = vld [vmem:[%s12 + $0x4] sm:$0xf]
  %v3285 = vpack.c.bf16 %v3282, %v3282
  %v3286 = vld [vmem:[#allocation2] sm:$0x1]
  %v3288 = vperm.slane %v3286, 0
  %v3292 = vunpack.c.l.b16 %v3283
  %v3293 = vunpack.c.l.b16 %v3284
  %v3294 = vpack.c.b16 %v3293, %v3292
  %vm3296 = vcmask 130048
  %v3298 = vsel %vm3296, %v3285, 0
  %3300 = vmatpush.bf16.msra.mxu0 0
  %3301 = vmatpush.bf16.msra.mxu0 0
  %3302 = vmatpush.bf16.msra.mxu0 0
  %3303 = vmatpush.bf16.msra.mxu0 0
  %3304 = vmatpush.bf16.msra.mxu0 0
  %3305 = vmatpush.bf16.msra.mxu0 0
  %3306 = vmatpush.bf16.msra.mxu0 0
  %3307 = vmatpush.bf16.msra.mxu0 %v3294
  %3308 = vmatmul.bf16.gmra.mxu0 %v3298
  %v3309 = vpop.f32.mrf.mxu0
  %v3310 = vadd.f32 %v3288, %v3309
  %v3311 = vpop.f32.mrf.mxu0
  %3312 = vdwg.mxu0
  %vm3313 = vcmask 7168
  %3314 = vst.msk [vmem:[%s14] sm:$0xff] %vm3313, %v3310
  // Predicated region
  $region58: #{weather_lstm_forward.1} parent=0 // pred_check
    _
  $region59: #{weather_lstm_forward.1} parent=0 // pred_check_branch
    %3316 = sbr.rel (0) target = $region61
  $region60: #{weather_lstm_forward.1} parent=0 // pred_region
    _
  $region61: #{weather_lstm_forward.1} parent=0 // pred_fallthru
    _
  // Predicated region
  $region62: #{weather_lstm_forward.1} parent=0 // pred_check
    _
  $region63: #{weather_lstm_forward.1} parent=0 // pred_check_branch
    %3318 = sbr.rel (0) target = $region65
  $region64: #{weather_lstm_forward.1} parent=0 // pred_region
    _
  $region65: #{weather_lstm_forward.1} parent=0 // pred_fallthru
    _

</llo_original>
